<compile_context>
chip_gen: v6e
topology: v6e:2x2x1
jax: 0.10.0
libtpu: 0.0.40
codegen_flags: <defaults>
</compile_context>

<pallas_src>
import jax
import jax.numpy as jnp
import numpy as np
from jax.experimental import pallas as pl
from jax.experimental.pallas import tpu as pltpu


# ----------------------------------------------------------------------------
# Fused ConvBlock Pallas kernel
# ----------------------------------------------------------------------------
def _make_convblock_kernel(*, s, n_main, K, C, L0, PH, BB):
    """Builds the fused ConvBlock kernel (BB batch elements per grid step)."""
    pad1 = (K - 1) // 2  # downConv padding; actConv padding is always 1
    f32 = jnp.float32
    bf16 = jnp.bfloat16

    def kernel(*refs):
        if s == 1:
            (x_ref, w1_ref, b1_ref, w2_ref, b2_ref,
             w1f_ref, b1f_ref, o_ref, buf) = refs
        else:
            x_ref, w1_ref, b1_ref, w2_ref, b2_ref, o_ref, buf = refs
            w1f_ref = b1f_ref = None

        # ---- helpers --------------------------------------------------------
        def seq_pos_like(t, l):
            """Within-sequence row index for rows packed as BB sequences of length l."""
            r = jax.lax.broadcasted_iota(jnp.int32, t.shape, 0)
            return r if BB == 1 else r % l

        def flatten_bb(read_b):
            """Concatenate per-batch-element (rows, C) pieces along sublanes."""
            rows = [read_b(b) for b in range(BB)]
            return rows[0] if BB == 1 else jnp.concatenate(rows, axis=0)

        def shift_tap(a, l, e):
            """t[r] = a[r + e] within the same packed sequence, else 0 (conv pad)."""
            if e == 0:
                return a
            M, Cc = a.shape
            d = abs(e)
            z = jnp.zeros((d, Cc), a.dtype)
            if e > 0:
                t = jnp.concatenate([a[d:, :], z], axis=0)
            else:
                t = jnp.concatenate([z, a[:M - d, :]], axis=0)
            if BB > 1:  # zero rows whose neighbour lies in another sequence
                pos = seq_pos_like(t, l)
                ok = (pos < l - e) if e > 0 else (pos >= d)
                t = jnp.where(ok, t, 0.0)
            return t

        def stride2_views(a, l, offsets):
            """Stage each sequence of `a` (BB*l, C) with zero halos and return the
            decimated tap views rows[2j + off], packed back to (BB*l//2, C)."""
            lout = l // 2
            per_off = {off: [] for off in offsets}
            for b in range(BB):
                buf[pl.ds(PH, l), :] = a[b * l:(b + 1) * l, :]
                if pad1 >= 2:  # only then does a conv tap read past the data
                    buf[pl.ds(PH + l, PH), :] = jnp.zeros((PH, C), f32)
                for off in offsets:
                    per_off[off].append(buf[pl.ds(PH + off, lout, 2), :])
            return {off: (v[0] if BB == 1 else jnp.concatenate(v, axis=0))
                    for off, v in per_off.items()}

        def conv_acc(taps, get_w, bias, cout):
            """sum_k taps[k] @ W[k] + bias -- per-tap MXU matmuls, f32 accumulate."""
            Mout = taps[0].shape[0]
            acc = jnp.zeros((Mout, cout), f32)
            for k, t in enumerate(taps):
                acc = acc + jnp.dot(t.astype(bf16), get_w(k),
                                    preferred_element_type=f32)
            return acc + bias

        def maxpool_from(pm1, p0, pp1, lout):
            """MaxPool1d(kernel=3, stride=2, padding=1) from decimated tap views."""
            pos = seq_pos_like(p0, lout)
            # Window 0's left tap is out of range -> replace by the window centre
            # (never changes the max; avoids -inf entirely).
            pm1 = jnp.where(pos == 0, p0, pm1)
            return jnp.maximum(jnp.maximum(pm1, p0), pp1)

        def conv_layer(a, l, stride, li):
            """ConvLayer: downConv -> tanh -> actConv -> tanh, + residual."""
            lout = l // stride
            if stride == 2:
                need = sorted(set(range(-pad1, pad1 + 1)) | {-1, 0, 1})
                views = stride2_views(a, l, need)
                taps = [views[k - pad1] for k in range(K)]
                y = maxpool_from(views[-1], views[0], views[1], lout)
            else:
                taps = [shift_tap(a, l, k - pad1) for k in range(K)]
                y = a
            h = jnp.tanh(conv_acc(taps, lambda k: w1_ref[li, k], b1_ref[li], C))
            # actConv: kernel 3, pad 1, stride 1 -- taps via in-register shifts.
            taps2 = [shift_tap(h, lout, k - 1) for k in range(3)]
            z = jnp.tanh(conv_acc(taps2, lambda k: w2_ref[li, k], b2_ref[li], C))
            return z + y, lout

        def fused_sub_first(a, l, li1, li2):
            """First (stride-2) ConvLayer of BOTH SubConv branches: the two
            downConvs are fused into one (M, C) x (C, 2C) matmul per tap and the
            MaxPool residual is computed once and shared."""
            lout = l // 2
            need = sorted(set(range(-pad1, pad1 + 1)) | {-1, 0, 1})
            views = stride2_views(a, l, need)
            taps = [views[k - pad1] for k in range(K)]
            y = maxpool_from(views[-1], views[0], views[1], lout)
            h = jnp.tanh(conv_acc(taps, lambda k: w1f_ref[k], b1f_ref[...], 2 * C))
            outs = []
            for hh, li in ((h[:, :C], li1), (h[:, C:], li2)):
                taps2 = [shift_tap(hh, lout, k - 1) for k in range(3)]
                z = jnp.tanh(conv_acc(taps2, lambda k: w2_ref[li, k],
                                      b2_ref[li], C))
                outs.append(z + y)
            return outs[0], outs[1], lout

        # ---- body ------------------------------------------------------------
        # Left halo rows are never overwritten by staging -> zero once per step.
        buf[pl.ds(0, PH), :] = jnp.zeros((PH, C), f32)

        a = flatten_bb(lambda b: x_ref[b]).astype(f32)   # (BB*L0, C)
        l, li = L0, 0

        # Main stack: `n_main` (stride-2, stride-1) ConvLayer pairs.
        for _ in range(n_main):
            a, l = conv_layer(a, l, 2, li); li += 1
            a, l = conv_layer(a, l, 1, li); li += 1

        if s == 1:
            # Two SubConv branches off the main output, concatenated along seq.
            o1, o2, lb = fused_sub_first(a, l, li, li + 2)
            o1, _ = conv_layer(o1, lb, 1, li + 1)
            for j in (3, 4, 5):
                o2, _ = conv_layer(o2, lb, 1, li + j)
            for b in range(BB):
                o_ref[b, pl.ds(0, lb), :] = o1[b * lb:(b + 1) * lb, :].astype(o_ref.dtype)
                o_ref[b, pl.ds(lb, lb), :] = o2[b * lb:(b + 1) * lb, :].astype(o_ref.dtype)
        else:
            for b in range(BB):
                o_ref[b, :, :] = a[b * l:(b + 1) * l, :].astype(o_ref.dtype)

    return kernel


def _pick_bb(B, L0, C, bb=None):
    """Batch elements per grid step: largest divisor of B that keeps >= 2 grid
    steps (v7x shards the 'parallel' batch grid over 2 TensorCores) and whose
    f32 staging footprint stays small relative to VMEM."""
    if bb is not None:
        assert B % bb == 0
        return bb
    cap = max(1, (2 << 20) // max(1, L0 * C * 4))
    best = 1
    for d in range(1, B + 1):
        if B % d == 0 and d <= cap and B // d >= 2:
            best = d
    return best


def conv_block_pallas(x, params, *, bb=None):
    """Fused ConvBlock forward: x (B, L, C) -> (B, Lout, C) in ONE pallas_call."""
    B, L0, C = x.shape
    s, layer, K = params["s"], params["layer"], params["kernel"]
    layers = params["layers"]
    n_main = layer if s == 2 else layer - 1
    N = len(layers)
    assert K % 2 == 1, "odd conv kernel expected"
    assert L0 % (1 << layer) == 0, "sequence length must stay even at every stride-2 stage"
    pad1 = (K - 1) // 2
    PH = max(pad1, 1)
    BB = _pick_bb(B, L0, C, bb)
    Ltot = (L0 >> layer) if s == 2 else (L0 >> (layer - 1))

    # Per-tap weight stacks: W[li, k] is the (C_in, C_out) matrix of tap k.
    # bf16 weights feed the MXU natively and halve DMA; biases stay f32.
    W1 = jnp.stack([p["w1"] for p in layers]).astype(jnp.bfloat16)            # (N, K, C, C)
    B1 = jnp.stack([p["b1"].reshape(1, C) for p in layers]).astype(jnp.float32)
    W2 = jnp.stack([p["w2"] for p in layers]).astype(jnp.bfloat16)            # (N, 3, C, C)
    B2 = jnp.stack([p["b2"].reshape(1, C) for p in layers]).astype(jnp.float32)

    in_specs = [
        pl.BlockSpec((BB, L0, C), lambda g: (g, 0, 0)),
        pl.BlockSpec((N, K, C, C), lambda g: (0, 0, 0, 0)),
        pl.BlockSpec((N, 1, C), lambda g: (0, 0, 0)),
        pl.BlockSpec((N, 3, C, C), lambda g: (0, 0, 0, 0)),
        pl.BlockSpec((N, 1, C), lambda g: (0, 0, 0)),
    ]
    operands = [x, W1, B1, W2, B2]
    wf_bytes = 0
    if s == 1:
        # Fused weights for the two SubConv branches' shared-input first downConv.
        i1, i2 = 2 * n_main, 2 * n_main + 2
        W1f = jnp.concatenate([layers[i1]["w1"], layers[i2]["w1"]],
                              axis=-1).astype(jnp.bfloat16)                    # (K, C, 2C)
        B1f = jnp.concatenate([layers[i1]["b1"].reshape(1, C),
                               layers[i2]["b1"].reshape(1, C)],
                              axis=-1).astype(jnp.float32)                     # (1, 2C)
        in_specs += [pl.BlockSpec((K, C, 2 * C), lambda g: (0, 0, 0)),
                     pl.BlockSpec((1, 2 * C), lambda g: (0, 0))]
        operands += [W1f, B1f]
        wf_bytes = W1f.size * 2 + B1f.size * 4

    # Explicit VMEM budget (review #5): scratch + double-buffered I/O blocks +
    # weights + headroom for in-flight f32 taps/activations.
    itemsize = jnp.dtype(x.dtype).itemsize
    est = ((L0 + 2 * PH) * C * 4
           + 2 * BB * L0 * C * itemsize
           + 2 * BB * Ltot * C * itemsize
           + 2 * ((W1.size + W2.size) * 2 + (B1.size + B2.size) * 4 + wf_bytes)
           + 12 * BB * L0 * C * 4)
    vmem_limit = int(min(max(2 * est, 16 * 2**20), 64 * 2**20))

    kernel = _make_convblock_kernel(s=s, n_main=n_main, K=K, C=C, L0=L0,
                                    PH=PH, BB=BB)
    return pl.pallas_call(
        kernel,
        out_shape=jax.ShapeDtypeStruct((B, Ltot, C), x.dtype),
        grid=(B // BB,),
        in_specs=in_specs,
        out_specs=pl.BlockSpec((BB, Ltot, C), lambda g: (g, 0, 0)),
        scratch_shapes=[pltpu.VMEM((L0 + 2 * PH, C), jnp.float32)],
        compiler_params=pltpu.CompilerParams(
            dimension_semantics=("parallel",),
            vmem_limit_bytes=vmem_limit),
    )(*operands)


# ----------------------------------------------------------------------------
# Pure-JAX reference (mirrors bf16-at-MXU behaviour of the kernel)
# ----------------------------------------------------------------------------
def _ref_conv1d(x, w, b, stride, pad):
    K = w.shape[0]
    Bn, L, C = x.shape
    Lout = L // stride
    xp = jnp.pad(x, ((0, 0), (pad, pad), (0, 0)))
    out = jnp.zeros((Bn, Lout, C), jnp.float32) + b
    for k in range(K):
        xs = xp[:, k:k + stride * (Lout - 1) + 1:stride]
        out = out + jnp.einsum("blc,cd->bld",
                               xs.astype(jnp.bfloat16), w[k].astype(jnp.bfloat16),
                               preferred_element_type=jnp.float32)
    return out


def _ref_maxpool_s2(x):
    Bn, L, C = x.shape
    neg = jnp.full((Bn, 1, C), -jnp.inf, x.dtype)
    xp = jnp.concatenate([neg, x, neg], axis=1)
    return jnp.maximum(jnp.maximum(xp[:, 0:L:2], xp[:, 1:L + 1:2]), xp[:, 2:L + 2:2])


def _ref_conv_layer(x, p, stride, K):
    h = jnp.tanh(_ref_conv1d(x, p["w1"], p["b1"], stride, (K - 1) // 2))
    z = jnp.tanh(_ref_conv1d(h, p["w2"], p["b2"], 1, 1))
    y = _ref_maxpool_s2(x) if stride == 2 else x
    return z + y


def conv_block_ref(x, params):
    s, layer, K = params["s"], params["layer"], params["kernel"]
    layers = params["layers"]
    n_main = layer if s == 2 else layer - 1
    a, li = x, 0
    for _ in range(n_main):
        a = _ref_conv_layer(a, layers[li], 2, K); li += 1
        a = _ref_conv_layer(a, layers[li], 1, K); li += 1
    if s == 1:
        o1 = a
        for st in (2, 1):
            o1 = _ref_conv_layer(o1, layers[li], st, K); li += 1
        o2 = a
        for st in (2, 1, 1, 1):
            o2 = _ref_conv_layer(o2, layers[li], st, K); li += 1
        return jnp.concatenate([o1, o2], axis=1)
    return a


# ----------------------------------------------------------------------------
# Parameter construction (synthetic effective weights; weight_norm folded in)
# ----------------------------------------------------------------------------
def init_conv_layer(key, c, kernel):
    k1, k2, k3, k4 = jax.random.split(key, 4)
    return {
        "w1": 0.2 * jax.random.normal(k1, (kernel, c, c), jnp.float32),
        "b1": 0.05 * jax.random.normal(k2, (1, c), jnp.float32),
        "w2": 0.2 * jax.random.normal(k3, (3, c, c), jnp.float32),
        "b2": 0.05 * jax.random.normal(k4, (1, c), jnp.float32),
    }


def init_conv_block(key, c, kernel, layer, s):
    n_main = layer if s == 2 else layer - 1
    # layer order: main pairs (s=2,s=1)*n_main, then SubConv1 (2,1), SubConv2 (2,1,1,1)
    n_layers = 2 * n_main + (6 if s == 1 else 0)
    keys = jax.random.split(key, max(n_layers, 1))
    return {"s": s, "layer": layer, "kernel": kernel,
            "layers": [init_conv_layer(keys[i], c, kernel) for i in range(n_layers)]}


# ----------------------------------------------------------------------------
if __name__ == "__main__":
    B, L, C, K = 4, 32, 16, 3
    key = jax.random.PRNGKey(0)
    kx, kp1, kp2 = jax.random.split(key, 3)
    x = jax.random.normal(kx, (B, L, C), jnp.float32)

    # ConvBlock(s=1, layer=2): main (s2,s1) pair + SubConv1 + SubConv2 + seq concat.
    params_s1 = init_conv_block(kp1, C, K, layer=2, s=1)
    out1 = jax.block_until_ready(conv_block_pallas(x, params_s1))
    ref1 = conv_block_ref(x, params_s1)
    assert out1.shape == (B, L // 2, C), out1.shape
    np.testing.assert_allclose(np.asarray(out1), np.asarray(ref1), atol=2e-2, rtol=2e-2)

    # ConvBlock(s=2, layer=1): plain (s2,s1) downsampling pair.
    params_s2 = init_conv_block(kp2, C, K, layer=1, s=2)
    out2 = jax.block_until_ready(conv_block_pallas(x, params_s2))
    ref2 = conv_block_ref(x, params_s2)
    assert out2.shape == (B, L // 2, C), out2.shape
    np.testing.assert_allclose(np.asarray(out2), np.asarray(ref2), atol=2e-2, rtol=2e-2)

    print("KERNEL_OK")
</pallas_src>

<mosaic_0001>
module attributes {stable_mosaic.version = 11 : i64} {
  func.func @kernel(%arg0: i32, %arg1: memref<2x32x16xf32, #tpu.memory_space<vmem>>, %arg2: memref<8x3x16x16xbf16, #tpu.memory_space<vmem>>, %arg3: memref<8x1x16xf32, #tpu.memory_space<vmem>>, %arg4: memref<8x3x16x16xbf16, #tpu.memory_space<vmem>>, %arg5: memref<8x1x16xf32, #tpu.memory_space<vmem>>, %arg6: memref<3x16x32xbf16, #tpu.memory_space<vmem>>, %arg7: memref<1x32xf32, #tpu.memory_space<vmem>>, %arg8: memref<2x16x16xf32, #tpu.memory_space<vmem>>, %arg9: memref<34x16xf32, #tpu.memory_space<vmem>>) attributes {dimension_semantics = [#tpu.dimension_semantics<parallel>], iteration_bounds = array<i64: 2>, scalar_prefetch = 0 : i64, scratch_operands = 1 : i64, tpu.core_type = #tpu.core_type<tc>, window_params = [{transform_indices = @transform_0, window_bounds = array<i64: 2, 32, 16>}, {pipeline_mode = #tpu.pipeline_mode<synchronous>, transform_indices = @transform_1, window_bounds = array<i64: 8, 3, 16, 16>}, {pipeline_mode = #tpu.pipeline_mode<synchronous>, transform_indices = @transform_2, window_bounds = array<i64: 8, 1, 16>}, {pipeline_mode = #tpu.pipeline_mode<synchronous>, transform_indices = @transform_3, window_bounds = array<i64: 8, 3, 16, 16>}, {pipeline_mode = #tpu.pipeline_mode<synchronous>, transform_indices = @transform_4, window_bounds = array<i64: 8, 1, 16>}, {pipeline_mode = #tpu.pipeline_mode<synchronous>, transform_indices = @transform_5, window_bounds = array<i64: 3, 16, 32>}, {pipeline_mode = #tpu.pipeline_mode<synchronous>, transform_indices = @transform_6, window_bounds = array<i64: 1, 32>}, {transform_indices = @transform_7, window_bounds = array<i64: 2, 16, 16>}]} {
    %cst = arith.constant 0.000000e+00 : f32
    %0 = vector.broadcast %cst : f32 to vector<1x16xf32>
    %c0 = arith.constant 0 : index
    %c0_0 = arith.constant 0 : index
    %1 = vector.load %arg9[%c0, %c0_0] : memref<34x16xf32, #tpu.memory_space<vmem>>, vector<1x16xf32>
    tpu.vector_store %arg9[%c0, %c0_0], %0 {strides = array<i32>} : memref<34x16xf32, #tpu.memory_space<vmem>>, vector<1x16xf32>,
    %c0_1 = arith.constant 0 : index
    %c0_2 = arith.constant 0 : index
    %c0_3 = arith.constant 0 : index
    %2 = vector.load %arg1[%c0_1, %c0_2, %c0_3] : memref<2x32x16xf32, #tpu.memory_space<vmem>>, vector<1x32x16xf32>
    %3 = vector.shape_cast %2 : vector<1x32x16xf32> to vector<32x16xf32>
    %c1 = arith.constant 1 : index
    %c0_4 = arith.constant 0 : index
    %c0_5 = arith.constant 0 : index
    %4 = vector.load %arg1[%c1, %c0_4, %c0_5] : memref<2x32x16xf32, #tpu.memory_space<vmem>>, vector<1x32x16xf32>
    %5 = vector.shape_cast %4 : vector<1x32x16xf32> to vector<32x16xf32>
    %6 = tpu.concatenate %3, %5 in 0 : vector<32x16xf32>, vector<32x16xf32> -> vector<64x16xf32>
    %7 = vector.extract_strided_slice %6 {offsets = [0, 0], sizes = [32, 16], strides = [1, 1]} : vector<64x16xf32> to vector<32x16xf32>
    %c1_6 = arith.constant 1 : index
    %c0_7 = arith.constant 0 : index
    %8 = vector.load %arg9[%c1_6, %c0_7] : memref<34x16xf32, #tpu.memory_space<vmem>>, vector<32x16xf32>
    tpu.vector_store %arg9[%c1_6, %c0_7], %7 {strides = array<i32>} : memref<34x16xf32, #tpu.memory_space<vmem>>, vector<32x16xf32>,
    %c0_8 = arith.constant 0 : index
    %c0_9 = arith.constant 0 : index
    %9 = tpu.strided_load %arg9[%c0_8, %c0_9] {strides = array<i32: 2, 1>} : memref<34x16xf32, #tpu.memory_space<vmem>>, vector<16x16xf32>
    %c1_10 = arith.constant 1 : index
    %c0_11 = arith.constant 0 : index
    %10 = tpu.strided_load %arg9[%c1_10, %c0_11] {strides = array<i32: 2, 1>} : memref<34x16xf32, #tpu.memory_space<vmem>>, vector<16x16xf32>
    %c2 = arith.constant 2 : index
    %c0_12 = arith.constant 0 : index
    %11 = tpu.strided_load %arg9[%c2, %c0_12] {strides = array<i32: 2, 1>} : memref<34x16xf32, #tpu.memory_space<vmem>>, vector<16x16xf32>
    %12 = vector.extract_strided_slice %6 {offsets = [32, 0], sizes = [32, 16], strides = [1, 1]} : vector<64x16xf32> to vector<32x16xf32>
    %c1_13 = arith.constant 1 : index
    %c0_14 = arith.constant 0 : index
    %13 = vector.load %arg9[%c1_13, %c0_14] : memref<34x16xf32, #tpu.memory_space<vmem>>, vector<32x16xf32>
    tpu.vector_store %arg9[%c1_13, %c0_14], %12 {strides = array<i32>} : memref<34x16xf32, #tpu.memory_space<vmem>>, vector<32x16xf32>,
    %c0_15 = arith.constant 0 : index
    %c0_16 = arith.constant 0 : index
    %14 = tpu.strided_load %arg9[%c0_15, %c0_16] {strides = array<i32: 2, 1>} : memref<34x16xf32, #tpu.memory_space<vmem>>, vector<16x16xf32>
    %c1_17 = arith.constant 1 : index
    %c0_18 = arith.constant 0 : index
    %15 = tpu.strided_load %arg9[%c1_17, %c0_18] {strides = array<i32: 2, 1>} : memref<34x16xf32, #tpu.memory_space<vmem>>, vector<16x16xf32>
    %c2_19 = arith.constant 2 : index
    %c0_20 = arith.constant 0 : index
    %16 = tpu.strided_load %arg9[%c2_19, %c0_20] {strides = array<i32: 2, 1>} : memref<34x16xf32, #tpu.memory_space<vmem>>, vector<16x16xf32>
    %17 = tpu.concatenate %9, %14 in 0 : vector<16x16xf32>, vector<16x16xf32> -> vector<32x16xf32>
    %18 = tpu.concatenate %10, %15 in 0 : vector<16x16xf32>, vector<16x16xf32> -> vector<32x16xf32>
    %19 = tpu.concatenate %11, %16 in 0 : vector<16x16xf32>, vector<16x16xf32> -> vector<32x16xf32>
    %20 = tpu.iota {dimensions = array<i32: 0>} : vector<32x16xi32>
    %c16_i32 = arith.constant 16 : i32
    %c0_i32 = arith.constant 0 : i32
    %21 = arith.cmpi eq, %c16_i32, %c0_i32 : i32
    %c1_i32 = arith.constant 1 : i32
    %22 = arith.select %21, %c1_i32, %c16_i32 : i32
    %23 = vector.broadcast %22 : i32 to vector<32x16xi32>
    %24 = arith.remsi %20, %23 : vector<32x16xi32>
    %c0_i32_21 = arith.constant 0 : i32
    %25 = vector.broadcast %c0_i32_21 : i32 to vector<32x16xi32>
    %26 = arith.cmpi ne, %24, %25 : vector<32x16xi32>
    %c0_i32_22 = arith.constant 0 : i32
    %27 = vector.broadcast %c0_i32_22 : i32 to vector<32x16xi32>
    %28 = arith.cmpi slt, %24, %27 : vector<32x16xi32>
    %c0_i32_23 = arith.constant 0 : i32
    %29 = arith.cmpi slt, %22, %c0_i32_23 : i32
    %30 = vector.broadcast %29 : i1 to vector<32x16xi1>
    %31 = vector.broadcast %30 : vector<32x16xi1> to vector<32x16xi1>
    %32 = arith.xori %28, %31 : vector<32x16xi1>
    %33 = arith.andi %32, %26 : vector<32x16xi1>
    %34 = vector.broadcast %22 : i32 to vector<32x16xi32>
    %35 = arith.addi %24, %34 : vector<32x16xi32>
    %36 = arith.select %33, %35, %24 : vector<32x16xi1>, vector<32x16xi32>
    %c0_i32_24 = arith.constant 0 : i32
    %37 = vector.broadcast %c0_i32_24 : i32 to vector<32x16xi32>
    %38 = arith.cmpi eq, %36, %37 : vector<32x16xi32>
    %39 = arith.select %38, %18, %17 : vector<32x16xi1>, vector<32x16xf32>
    %40 = arith.maximumf %39, %18 : vector<32x16xf32>
    %41 = arith.maximumf %40, %19 : vector<32x16xf32>
    %c0_25 = arith.constant 0 : index
    %c0_26 = arith.constant 0 : index
    %c0_27 = arith.constant 0 : index
    %42 = vector.load %arg3[%c0_25, %c0_26, %c0_27] : memref<8x1x16xf32, #tpu.memory_space<vmem>>, vector<1x1x16xf32>
    %43 = vector.shape_cast %42 : vector<1x1x16xf32> to vector<1x16xf32>
    %cst_28 = arith.constant 0.000000e+00 : f32
    %44 = vector.broadcast %cst_28 : f32 to vector<32x16xf32>
    %45 = arith.truncf %17 : vector<32x16xf32> to vector<32x16xbf16>
    %c0_29 = arith.constant 0 : index
    %c0_30 = arith.constant 0 : index
    %c0_31 = arith.constant 0 : index
    %c0_32 = arith.constant 0 : index
    %46 = vector.load %arg2[%c0_29, %c0_30, %c0_31, %c0_32] : memref<8x3x16x16xbf16, #tpu.memory_space<vmem>>, vector<1x1x16x16xbf16>
    %47 = vector.shape_cast %46 : vector<1x1x16x16xbf16> to vector<16x16xbf16>
    %cst_33 = arith.constant dense<0.000000e+00> : vector<32x16xf32>
    %48 = tpu.matmul %45, %47, %cst_33 {dimension_numbers = #tpu.dot_dimension_numbers<[1], [0], [0], [1], [0, 0, 1, 1], [], []>} : vector<32x16xbf16>, vector<16x16xbf16>, vector<32x16xf32> -> vector<32x16xf32>
    %49 = arith.addf %44, %48 : vector<32x16xf32>
    %50 = arith.truncf %18 : vector<32x16xf32> to vector<32x16xbf16>
    %c0_34 = arith.constant 0 : index
    %c1_35 = arith.constant 1 : index
    %c0_36 = arith.constant 0 : index
    %c0_37 = arith.constant 0 : index
    %51 = vector.load %arg2[%c0_34, %c1_35, %c0_36, %c0_37] : memref<8x3x16x16xbf16, #tpu.memory_space<vmem>>, vector<1x1x16x16xbf16>
    %52 = vector.shape_cast %51 : vector<1x1x16x16xbf16> to vector<16x16xbf16>
    %cst_38 = arith.constant dense<0.000000e+00> : vector<32x16xf32>
    %53 = tpu.matmul %50, %52, %cst_38 {dimension_numbers = #tpu.dot_dimension_numbers<[1], [0], [0], [1], [0, 0, 1, 1], [], []>} : vector<32x16xbf16>, vector<16x16xbf16>, vector<32x16xf32> -> vector<32x16xf32>
    %54 = arith.addf %49, %53 : vector<32x16xf32>
    %55 = arith.truncf %19 : vector<32x16xf32> to vector<32x16xbf16>
    %c0_39 = arith.constant 0 : index
    %c2_40 = arith.constant 2 : index
    %c0_41 = arith.constant 0 : index
    %c0_42 = arith.constant 0 : index
    %56 = vector.load %arg2[%c0_39, %c2_40, %c0_41, %c0_42] : memref<8x3x16x16xbf16, #tpu.memory_space<vmem>>, vector<1x1x16x16xbf16>
    %57 = vector.shape_cast %56 : vector<1x1x16x16xbf16> to vector<16x16xbf16>
    %cst_43 = arith.constant dense<0.000000e+00> : vector<32x16xf32>
    %58 = tpu.matmul %55, %57, %cst_43 {dimension_numbers = #tpu.dot_dimension_numbers<[1], [0], [0], [1], [0, 0, 1, 1], [], []>} : vector<32x16xbf16>, vector<16x16xbf16>, vector<32x16xf32> -> vector<32x16xf32>
    %59 = arith.addf %54, %58 : vector<32x16xf32>
    %60 = vector.broadcast %43 : vector<1x16xf32> to vector<32x16xf32>
    %61 = arith.addf %59, %60 : vector<32x16xf32>
    %62 = math.tanh %61 : vector<32x16xf32>
    %cst_44 = arith.constant 0.000000e+00 : f32
    %63 = vector.broadcast %cst_44 : f32 to vector<1x16xf32>
    %64 = vector.extract_strided_slice %62 {offsets = [0, 0], sizes = [31, 16], strides = [1, 1]} : vector<32x16xf32> to vector<31x16xf32>
    %65 = tpu.concatenate %63, %64 in 0 : vector<1x16xf32>, vector<31x16xf32> -> vector<32x16xf32>
    %66 = tpu.iota {dimensions = array<i32: 0>} : vector<32x16xi32>
    %c16_i32_45 = arith.constant 16 : i32
    %c0_i32_46 = arith.constant 0 : i32
    %67 = arith.cmpi eq, %c16_i32_45, %c0_i32_46 : i32
    %c1_i32_47 = arith.constant 1 : i32
    %68 = arith.select %67, %c1_i32_47, %c16_i32_45 : i32
    %69 = vector.broadcast %68 : i32 to vector<32x16xi32>
    %70 = arith.remsi %66, %69 : vector<32x16xi32>
    %c0_i32_48 = arith.constant 0 : i32
    %71 = vector.broadcast %c0_i32_48 : i32 to vector<32x16xi32>
    %72 = arith.cmpi ne, %70, %71 : vector<32x16xi32>
    %c0_i32_49 = arith.constant 0 : i32
    %73 = vector.broadcast %c0_i32_49 : i32 to vector<32x16xi32>
    %74 = arith.cmpi slt, %70, %73 : vector<32x16xi32>
    %c0_i32_50 = arith.constant 0 : i32
    %75 = arith.cmpi slt, %68, %c0_i32_50 : i32
    %76 = vector.broadcast %75 : i1 to vector<32x16xi1>
    %77 = vector.broadcast %76 : vector<32x16xi1> to vector<32x16xi1>
    %78 = arith.xori %74, %77 : vector<32x16xi1>
    %79 = arith.andi %78, %72 : vector<32x16xi1>
    %80 = vector.broadcast %68 : i32 to vector<32x16xi32>
    %81 = arith.addi %70, %80 : vector<32x16xi32>
    %82 = arith.select %79, %81, %70 : vector<32x16xi1>, vector<32x16xi32>
    %c1_i32_51 = arith.constant 1 : i32
    %83 = vector.broadcast %c1_i32_51 : i32 to vector<32x16xi32>
    %84 = arith.cmpi sge, %82, %83 : vector<32x16xi32>
    %cst_52 = arith.constant 0.000000e+00 : f32
    %85 = vector.broadcast %cst_52 : f32 to vector<32x16xf32>
    %86 = arith.select %84, %65, %85 : vector<32x16xi1>, vector<32x16xf32>
    %cst_53 = arith.constant 0.000000e+00 : f32
    %87 = vector.broadcast %cst_53 : f32 to vector<1x16xf32>
    %88 = vector.extract_strided_slice %62 {offsets = [1, 0], sizes = [31, 16], strides = [1, 1]} : vector<32x16xf32> to vector<31x16xf32>
    %89 = tpu.concatenate %88, %87 in 0 : vector<31x16xf32>, vector<1x16xf32> -> vector<32x16xf32>
    %90 = tpu.iota {dimensions = array<i32: 0>} : vector<32x16xi32>
    %c16_i32_54 = arith.constant 16 : i32
    %c0_i32_55 = arith.constant 0 : i32
    %91 = arith.cmpi eq, %c16_i32_54, %c0_i32_55 : i32
    %c1_i32_56 = arith.constant 1 : i32
    %92 = arith.select %91, %c1_i32_56, %c16_i32_54 : i32
    %93 = vector.broadcast %92 : i32 to vector<32x16xi32>
    %94 = arith.remsi %90, %93 : vector<32x16xi32>
    %c0_i32_57 = arith.constant 0 : i32
    %95 = vector.broadcast %c0_i32_57 : i32 to vector<32x16xi32>
    %96 = arith.cmpi ne, %94, %95 : vector<32x16xi32>
    %c0_i32_58 = arith.constant 0 : i32
    %97 = vector.broadcast %c0_i32_58 : i32 to vector<32x16xi32>
    %98 = arith.cmpi slt, %94, %97 : vector<32x16xi32>
    %c0_i32_59 = arith.constant 0 : i32
    %99 = arith.cmpi slt, %92, %c0_i32_59 : i32
    %100 = vector.broadcast %99 : i1 to vector<32x16xi1>
    %101 = vector.broadcast %100 : vector<32x16xi1> to vector<32x16xi1>
    %102 = arith.xori %98, %101 : vector<32x16xi1>
    %103 = arith.andi %102, %96 : vector<32x16xi1>
    %104 = vector.broadcast %92 : i32 to vector<32x16xi32>
    %105 = arith.addi %94, %104 : vector<32x16xi32>
    %106 = arith.select %103, %105, %94 : vector<32x16xi1>, vector<32x16xi32>
    %c15_i32 = arith.constant 15 : i32
    %107 = vector.broadcast %c15_i32 : i32 to vector<32x16xi32>
    %108 = arith.cmpi slt, %106, %107 : vector<32x16xi32>
    %cst_60 = arith.constant 0.000000e+00 : f32
    %109 = vector.broadcast %cst_60 : f32 to vector<32x16xf32>
    %110 = arith.select %108, %89, %109 : vector<32x16xi1>, vector<32x16xf32>
    %c0_61 = arith.constant 0 : index
    %c0_62 = arith.constant 0 : index
    %c0_63 = arith.constant 0 : index
    %111 = vector.load %arg5[%c0_61, %c0_62, %c0_63] : memref<8x1x16xf32, #tpu.memory_space<vmem>>, vector<1x1x16xf32>
    %112 = vector.shape_cast %111 : vector<1x1x16xf32> to vector<1x16xf32>
    %cst_64 = arith.constant 0.000000e+00 : f32
    %113 = vector.broadcast %cst_64 : f32 to vector<32x16xf32>
    %114 = arith.truncf %86 : vector<32x16xf32> to vector<32x16xbf16>
    %c0_65 = arith.constant 0 : index
    %c0_66 = arith.constant 0 : index
    %c0_67 = arith.constant 0 : index
    %c0_68 = arith.constant 0 : index
    %115 = vector.load %arg4[%c0_65, %c0_66, %c0_67, %c0_68] : memref<8x3x16x16xbf16, #tpu.memory_space<vmem>>, vector<1x1x16x16xbf16>
    %116 = vector.shape_cast %115 : vector<1x1x16x16xbf16> to vector<16x16xbf16>
    %cst_69 = arith.constant dense<0.000000e+00> : vector<32x16xf32>
    %117 = tpu.matmul %114, %116, %cst_69 {dimension_numbers = #tpu.dot_dimension_numbers<[1], [0], [0], [1], [0, 0, 1, 1], [], []>} : vector<32x16xbf16>, vector<16x16xbf16>, vector<32x16xf32> -> vector<32x16xf32>
    %118 = arith.addf %113, %117 : vector<32x16xf32>
    %119 = arith.truncf %62 : vector<32x16xf32> to vector<32x16xbf16>
    %c0_70 = arith.constant 0 : index
    %c1_71 = arith.constant 1 : index
    %c0_72 = arith.constant 0 : index
    %c0_73 = arith.constant 0 : index
    %120 = vector.load %arg4[%c0_70, %c1_71, %c0_72, %c0_73] : memref<8x3x16x16xbf16, #tpu.memory_space<vmem>>, vector<1x1x16x16xbf16>
    %121 = vector.shape_cast %120 : vector<1x1x16x16xbf16> to vector<16x16xbf16>
    %cst_74 = arith.constant dense<0.000000e+00> : vector<32x16xf32>
    %122 = tpu.matmul %119, %121, %cst_74 {dimension_numbers = #tpu.dot_dimension_numbers<[1], [0], [0], [1], [0, 0, 1, 1], [], []>} : vector<32x16xbf16>, vector<16x16xbf16>, vector<32x16xf32> -> vector<32x16xf32>
    %123 = arith.addf %118, %122 : vector<32x16xf32>
    %124 = arith.truncf %110 : vector<32x16xf32> to vector<32x16xbf16>
    %c0_75 = arith.constant 0 : index
    %c2_76 = arith.constant 2 : index
    %c0_77 = arith.constant 0 : index
    %c0_78 = arith.constant 0 : index
    %125 = vector.load %arg4[%c0_75, %c2_76, %c0_77, %c0_78] : memref<8x3x16x16xbf16, #tpu.memory_space<vmem>>, vector<1x1x16x16xbf16>
    %126 = vector.shape_cast %125 : vector<1x1x16x16xbf16> to vector<16x16xbf16>
    %cst_79 = arith.constant dense<0.000000e+00> : vector<32x16xf32>
    %127 = tpu.matmul %124, %126, %cst_79 {dimension_numbers = #tpu.dot_dimension_numbers<[1], [0], [0], [1], [0, 0, 1, 1], [], []>} : vector<32x16xbf16>, vector<16x16xbf16>, vector<32x16xf32> -> vector<32x16xf32>
    %128 = arith.addf %123, %127 : vector<32x16xf32>
    %129 = vector.broadcast %112 : vector<1x16xf32> to vector<32x16xf32>
    %130 = arith.addf %128, %129 : vector<32x16xf32>
    %131 = math.tanh %130 : vector<32x16xf32>
    %132 = arith.addf %131, %41 : vector<32x16xf32>
    %cst_80 = arith.constant 0.000000e+00 : f32
    %133 = vector.broadcast %cst_80 : f32 to vector<1x16xf32>
    %134 = vector.extract_strided_slice %132 {offsets = [0, 0], sizes = [31, 16], strides = [1, 1]} : vector<32x16xf32> to vector<31x16xf32>
    %135 = tpu.concatenate %133, %134 in 0 : vector<1x16xf32>, vector<31x16xf32> -> vector<32x16xf32>
    %136 = tpu.iota {dimensions = array<i32: 0>} : vector<32x16xi32>
    %c16_i32_81 = arith.constant 16 : i32
    %c0_i32_82 = arith.constant 0 : i32
    %137 = arith.cmpi eq, %c16_i32_81, %c0_i32_82 : i32
    %c1_i32_83 = arith.constant 1 : i32
    %138 = arith.select %137, %c1_i32_83, %c16_i32_81 : i32
    %139 = vector.broadcast %138 : i32 to vector<32x16xi32>
    %140 = arith.remsi %136, %139 : vector<32x16xi32>
    %c0_i32_84 = arith.constant 0 : i32
    %141 = vector.broadcast %c0_i32_84 : i32 to vector<32x16xi32>
    %142 = arith.cmpi ne, %140, %141 : vector<32x16xi32>
    %c0_i32_85 = arith.constant 0 : i32
    %143 = vector.broadcast %c0_i32_85 : i32 to vector<32x16xi32>
    %144 = arith.cmpi slt, %140, %143 : vector<32x16xi32>
    %c0_i32_86 = arith.constant 0 : i32
    %145 = arith.cmpi slt, %138, %c0_i32_86 : i32
    %146 = vector.broadcast %145 : i1 to vector<32x16xi1>
    %147 = vector.broadcast %146 : vector<32x16xi1> to vector<32x16xi1>
    %148 = arith.xori %144, %147 : vector<32x16xi1>
    %149 = arith.andi %148, %142 : vector<32x16xi1>
    %150 = vector.broadcast %138 : i32 to vector<32x16xi32>
    %151 = arith.addi %140, %150 : vector<32x16xi32>
    %152 = arith.select %149, %151, %140 : vector<32x16xi1>, vector<32x16xi32>
    %c1_i32_87 = arith.constant 1 : i32
    %153 = vector.broadcast %c1_i32_87 : i32 to vector<32x16xi32>
    %154 = arith.cmpi sge, %152, %153 : vector<32x16xi32>
    %cst_88 = arith.constant 0.000000e+00 : f32
    %155 = vector.broadcast %cst_88 : f32 to vector<32x16xf32>
    %156 = arith.select %154, %135, %155 : vector<32x16xi1>, vector<32x16xf32>
    %cst_89 = arith.constant 0.000000e+00 : f32
    %157 = vector.broadcast %cst_89 : f32 to vector<1x16xf32>
    %158 = vector.extract_strided_slice %132 {offsets = [1, 0], sizes = [31, 16], strides = [1, 1]} : vector<32x16xf32> to vector<31x16xf32>
    %159 = tpu.concatenate %158, %157 in 0 : vector<31x16xf32>, vector<1x16xf32> -> vector<32x16xf32>
    %160 = tpu.iota {dimensions = array<i32: 0>} : vector<32x16xi32>
    %c16_i32_90 = arith.constant 16 : i32
    %c0_i32_91 = arith.constant 0 : i32
    %161 = arith.cmpi eq, %c16_i32_90, %c0_i32_91 : i32
    %c1_i32_92 = arith.constant 1 : i32
    %162 = arith.select %161, %c1_i32_92, %c16_i32_90 : i32
    %163 = vector.broadcast %162 : i32 to vector<32x16xi32>
    %164 = arith.remsi %160, %163 : vector<32x16xi32>
    %c0_i32_93 = arith.constant 0 : i32
    %165 = vector.broadcast %c0_i32_93 : i32 to vector<32x16xi32>
    %166 = arith.cmpi ne, %164, %165 : vector<32x16xi32>
    %c0_i32_94 = arith.constant 0 : i32
    %167 = vector.broadcast %c0_i32_94 : i32 to vector<32x16xi32>
    %168 = arith.cmpi slt, %164, %167 : vector<32x16xi32>
    %c0_i32_95 = arith.constant 0 : i32
    %169 = arith.cmpi slt, %162, %c0_i32_95 : i32
    %170 = vector.broadcast %169 : i1 to vector<32x16xi1>
    %171 = vector.broadcast %170 : vector<32x16xi1> to vector<32x16xi1>
    %172 = arith.xori %168, %171 : vector<32x16xi1>
    %173 = arith.andi %172, %166 : vector<32x16xi1>
    %174 = vector.broadcast %162 : i32 to vector<32x16xi32>
    %175 = arith.addi %164, %174 : vector<32x16xi32>
    %176 = arith.select %173, %175, %164 : vector<32x16xi1>, vector<32x16xi32>
    %c15_i32_96 = arith.constant 15 : i32
    %177 = vector.broadcast %c15_i32_96 : i32 to vector<32x16xi32>
    %178 = arith.cmpi slt, %176, %177 : vector<32x16xi32>
    %cst_97 = arith.constant 0.000000e+00 : f32
    %179 = vector.broadcast %cst_97 : f32 to vector<32x16xf32>
    %180 = arith.select %178, %159, %179 : vector<32x16xi1>, vector<32x16xf32>
    %c1_98 = arith.constant 1 : index
    %c0_99 = arith.constant 0 : index
    %c0_100 = arith.constant 0 : index
    %181 = vector.load %arg3[%c1_98, %c0_99, %c0_100] : memref<8x1x16xf32, #tpu.memory_space<vmem>>, vector<1x1x16xf32>
    %182 = vector.shape_cast %181 : vector<1x1x16xf32> to vector<1x16xf32>
    %cst_101 = arith.constant 0.000000e+00 : f32
    %183 = vector.broadcast %cst_101 : f32 to vector<32x16xf32>
    %184 = arith.truncf %156 : vector<32x16xf32> to vector<32x16xbf16>
    %c1_102 = arith.constant 1 : index
    %c0_103 = arith.constant 0 : index
    %c0_104 = arith.constant 0 : index
    %c0_105 = arith.constant 0 : index
    %185 = vector.load %arg2[%c1_102, %c0_103, %c0_104, %c0_105] : memref<8x3x16x16xbf16, #tpu.memory_space<vmem>>, vector<1x1x16x16xbf16>
    %186 = vector.shape_cast %185 : vector<1x1x16x16xbf16> to vector<16x16xbf16>
    %cst_106 = arith.constant dense<0.000000e+00> : vector<32x16xf32>
    %187 = tpu.matmul %184, %186, %cst_106 {dimension_numbers = #tpu.dot_dimension_numbers<[1], [0], [0], [1], [0, 0, 1, 1], [], []>} : vector<32x16xbf16>, vector<16x16xbf16>, vector<32x16xf32> -> vector<32x16xf32>
    %188 = arith.addf %183, %187 : vector<32x16xf32>
    %189 = arith.truncf %132 : vector<32x16xf32> to vector<32x16xbf16>
    %c1_107 = arith.constant 1 : index
    %c1_108 = arith.constant 1 : index
    %c0_109 = arith.constant 0 : index
    %c0_110 = arith.constant 0 : index
    %190 = vector.load %arg2[%c1_107, %c1_108, %c0_109, %c0_110] : memref<8x3x16x16xbf16, #tpu.memory_space<vmem>>, vector<1x1x16x16xbf16>
    %191 = vector.shape_cast %190 : vector<1x1x16x16xbf16> to vector<16x16xbf16>
    %cst_111 = arith.constant dense<0.000000e+00> : vector<32x16xf32>
    %192 = tpu.matmul %189, %191, %cst_111 {dimension_numbers = #tpu.dot_dimension_numbers<[1], [0], [0], [1], [0, 0, 1, 1], [], []>} : vector<32x16xbf16>, vector<16x16xbf16>, vector<32x16xf32> -> vector<32x16xf32>
    %193 = arith.addf %188, %192 : vector<32x16xf32>
    %194 = arith.truncf %180 : vector<32x16xf32> to vector<32x16xbf16>
    %c1_112 = arith.constant 1 : index
    %c2_113 = arith.constant 2 : index
    %c0_114 = arith.constant 0 : index
    %c0_115 = arith.constant 0 : index
    %195 = vector.load %arg2[%c1_112, %c2_113, %c0_114, %c0_115] : memref<8x3x16x16xbf16, #tpu.memory_space<vmem>>, vector<1x1x16x16xbf16>
    %196 = vector.shape_cast %195 : vector<1x1x16x16xbf16> to vector<16x16xbf16>
    %cst_116 = arith.constant dense<0.000000e+00> : vector<32x16xf32>
    %197 = tpu.matmul %194, %196, %cst_116 {dimension_numbers = #tpu.dot_dimension_numbers<[1], [0], [0], [1], [0, 0, 1, 1], [], []>} : vector<32x16xbf16>, vector<16x16xbf16>, vector<32x16xf32> -> vector<32x16xf32>
    %198 = arith.addf %193, %197 : vector<32x16xf32>
    %199 = vector.broadcast %182 : vector<1x16xf32> to vector<32x16xf32>
    %200 = arith.addf %198, %199 : vector<32x16xf32>
    %201 = math.tanh %200 : vector<32x16xf32>
    %cst_117 = arith.constant 0.000000e+00 : f32
    %202 = vector.broadcast %cst_117 : f32 to vector<1x16xf32>
    %203 = vector.extract_strided_slice %201 {offsets = [0, 0], sizes = [31, 16], strides = [1, 1]} : vector<32x16xf32> to vector<31x16xf32>
    %204 = tpu.concatenate %202, %203 in 0 : vector<1x16xf32>, vector<31x16xf32> -> vector<32x16xf32>
    %205 = tpu.iota {dimensions = array<i32: 0>} : vector<32x16xi32>
    %c16_i32_118 = arith.constant 16 : i32
    %c0_i32_119 = arith.constant 0 : i32
    %206 = arith.cmpi eq, %c16_i32_118, %c0_i32_119 : i32
    %c1_i32_120 = arith.constant 1 : i32
    %207 = arith.select %206, %c1_i32_120, %c16_i32_118 : i32
    %208 = vector.broadcast %207 : i32 to vector<32x16xi32>
    %209 = arith.remsi %205, %208 : vector<32x16xi32>
    %c0_i32_121 = arith.constant 0 : i32
    %210 = vector.broadcast %c0_i32_121 : i32 to vector<32x16xi32>
    %211 = arith.cmpi ne, %209, %210 : vector<32x16xi32>
    %c0_i32_122 = arith.constant 0 : i32
    %212 = vector.broadcast %c0_i32_122 : i32 to vector<32x16xi32>
    %213 = arith.cmpi slt, %209, %212 : vector<32x16xi32>
    %c0_i32_123 = arith.constant 0 : i32
    %214 = arith.cmpi slt, %207, %c0_i32_123 : i32
    %215 = vector.broadcast %214 : i1 to vector<32x16xi1>
    %216 = vector.broadcast %215 : vector<32x16xi1> to vector<32x16xi1>
    %217 = arith.xori %213, %216 : vector<32x16xi1>
    %218 = arith.andi %217, %211 : vector<32x16xi1>
    %219 = vector.broadcast %207 : i32 to vector<32x16xi32>
    %220 = arith.addi %209, %219 : vector<32x16xi32>
    %221 = arith.select %218, %220, %209 : vector<32x16xi1>, vector<32x16xi32>
    %c1_i32_124 = arith.constant 1 : i32
    %222 = vector.broadcast %c1_i32_124 : i32 to vector<32x16xi32>
    %223 = arith.cmpi sge, %221, %222 : vector<32x16xi32>
    %cst_125 = arith.constant 0.000000e+00 : f32
    %224 = vector.broadcast %cst_125 : f32 to vector<32x16xf32>
    %225 = arith.select %223, %204, %224 : vector<32x16xi1>, vector<32x16xf32>
    %cst_126 = arith.constant 0.000000e+00 : f32
    %226 = vector.broadcast %cst_126 : f32 to vector<1x16xf32>
    %227 = vector.extract_strided_slice %201 {offsets = [1, 0], sizes = [31, 16], strides = [1, 1]} : vector<32x16xf32> to vector<31x16xf32>
    %228 = tpu.concatenate %227, %226 in 0 : vector<31x16xf32>, vector<1x16xf32> -> vector<32x16xf32>
    %229 = tpu.iota {dimensions = array<i32: 0>} : vector<32x16xi32>
    %c16_i32_127 = arith.constant 16 : i32
    %c0_i32_128 = arith.constant 0 : i32
    %230 = arith.cmpi eq, %c16_i32_127, %c0_i32_128 : i32
    %c1_i32_129 = arith.constant 1 : i32
    %231 = arith.select %230, %c1_i32_129, %c16_i32_127 : i32
    %232 = vector.broadcast %231 : i32 to vector<32x16xi32>
    %233 = arith.remsi %229, %232 : vector<32x16xi32>
    %c0_i32_130 = arith.constant 0 : i32
    %234 = vector.broadcast %c0_i32_130 : i32 to vector<32x16xi32>
    %235 = arith.cmpi ne, %233, %234 : vector<32x16xi32>
    %c0_i32_131 = arith.constant 0 : i32
    %236 = vector.broadcast %c0_i32_131 : i32 to vector<32x16xi32>
    %237 = arith.cmpi slt, %233, %236 : vector<32x16xi32>
    %c0_i32_132 = arith.constant 0 : i32
    %238 = arith.cmpi slt, %231, %c0_i32_132 : i32
    %239 = vector.broadcast %238 : i1 to vector<32x16xi1>
    %240 = vector.broadcast %239 : vector<32x16xi1> to vector<32x16xi1>
    %241 = arith.xori %237, %240 : vector<32x16xi1>
    %242 = arith.andi %241, %235 : vector<32x16xi1>
    %243 = vector.broadcast %231 : i32 to vector<32x16xi32>
    %244 = arith.addi %233, %243 : vector<32x16xi32>
    %245 = arith.select %242, %244, %233 : vector<32x16xi1>, vector<32x16xi32>
    %c15_i32_133 = arith.constant 15 : i32
    %246 = vector.broadcast %c15_i32_133 : i32 to vector<32x16xi32>
    %247 = arith.cmpi slt, %245, %246 : vector<32x16xi32>
    %cst_134 = arith.constant 0.000000e+00 : f32
    %248 = vector.broadcast %cst_134 : f32 to vector<32x16xf32>
    %249 = arith.select %247, %228, %248 : vector<32x16xi1>, vector<32x16xf32>
    %c1_135 = arith.constant 1 : index
    %c0_136 = arith.constant 0 : index
    %c0_137 = arith.constant 0 : index
    %250 = vector.load %arg5[%c1_135, %c0_136, %c0_137] : memref<8x1x16xf32, #tpu.memory_space<vmem>>, vector<1x1x16xf32>
    %251 = vector.shape_cast %250 : vector<1x1x16xf32> to vector<1x16xf32>
    %cst_138 = arith.constant 0.000000e+00 : f32
    %252 = vector.broadcast %cst_138 : f32 to vector<32x16xf32>
    %253 = arith.truncf %225 : vector<32x16xf32> to vector<32x16xbf16>
    %c1_139 = arith.constant 1 : index
    %c0_140 = arith.constant 0 : index
    %c0_141 = arith.constant 0 : index
    %c0_142 = arith.constant 0 : index
    %254 = vector.load %arg4[%c1_139, %c0_140, %c0_141, %c0_142] : memref<8x3x16x16xbf16, #tpu.memory_space<vmem>>, vector<1x1x16x16xbf16>
    %255 = vector.shape_cast %254 : vector<1x1x16x16xbf16> to vector<16x16xbf16>
    %cst_143 = arith.constant dense<0.000000e+00> : vector<32x16xf32>
    %256 = tpu.matmul %253, %255, %cst_143 {dimension_numbers = #tpu.dot_dimension_numbers<[1], [0], [0], [1], [0, 0, 1, 1], [], []>} : vector<32x16xbf16>, vector<16x16xbf16>, vector<32x16xf32> -> vector<32x16xf32>
    %257 = arith.addf %252, %256 : vector<32x16xf32>
    %258 = arith.truncf %201 : vector<32x16xf32> to vector<32x16xbf16>
    %c1_144 = arith.constant 1 : index
    %c1_145 = arith.constant 1 : index
    %c0_146 = arith.constant 0 : index
    %c0_147 = arith.constant 0 : index
    %259 = vector.load %arg4[%c1_144, %c1_145, %c0_146, %c0_147] : memref<8x3x16x16xbf16, #tpu.memory_space<vmem>>, vector<1x1x16x16xbf16>
    %260 = vector.shape_cast %259 : vector<1x1x16x16xbf16> to vector<16x16xbf16>
    %cst_148 = arith.constant dense<0.000000e+00> : vector<32x16xf32>
    %261 = tpu.matmul %258, %260, %cst_148 {dimension_numbers = #tpu.dot_dimension_numbers<[1], [0], [0], [1], [0, 0, 1, 1], [], []>} : vector<32x16xbf16>, vector<16x16xbf16>, vector<32x16xf32> -> vector<32x16xf32>
    %262 = arith.addf %257, %261 : vector<32x16xf32>
    %263 = arith.truncf %249 : vector<32x16xf32> to vector<32x16xbf16>
    %c1_149 = arith.constant 1 : index
    %c2_150 = arith.constant 2 : index
    %c0_151 = arith.constant 0 : index
    %c0_152 = arith.constant 0 : index
    %264 = vector.load %arg4[%c1_149, %c2_150, %c0_151, %c0_152] : memref<8x3x16x16xbf16, #tpu.memory_space<vmem>>, vector<1x1x16x16xbf16>
    %265 = vector.shape_cast %264 : vector<1x1x16x16xbf16> to vector<16x16xbf16>
    %cst_153 = arith.constant dense<0.000000e+00> : vector<32x16xf32>
    %266 = tpu.matmul %263, %265, %cst_153 {dimension_numbers = #tpu.dot_dimension_numbers<[1], [0], [0], [1], [0, 0, 1, 1], [], []>} : vector<32x16xbf16>, vector<16x16xbf16>, vector<32x16xf32> -> vector<32x16xf32>
    %267 = arith.addf %262, %266 : vector<32x16xf32>
    %268 = vector.broadcast %251 : vector<1x16xf32> to vector<32x16xf32>
    %269 = arith.addf %267, %268 : vector<32x16xf32>
    %270 = math.tanh %269 : vector<32x16xf32>
    %271 = arith.addf %270, %132 : vector<32x16xf32>
    %272 = vector.extract_strided_slice %271 {offsets = [0, 0], sizes = [16, 16], strides = [1, 1]} : vector<32x16xf32> to vector<16x16xf32>
    %c1_154 = arith.constant 1 : index
    %c0_155 = arith.constant 0 : index
    %273 = vector.load %arg9[%c1_154, %c0_155] : memref<34x16xf32, #tpu.memory_space<vmem>>, vector<16x16xf32>
    tpu.vector_store %arg9[%c1_154, %c0_155], %272 {strides = array<i32>} : memref<34x16xf32, #tpu.memory_space<vmem>>, vector<16x16xf32>,
    %c0_156 = arith.constant 0 : index
    %c0_157 = arith.constant 0 : index
    %274 = tpu.strided_load %arg9[%c0_156, %c0_157] {strides = array<i32: 2, 1>} : memref<34x16xf32, #tpu.memory_space<vmem>>, vector<8x16xf32>
    %c1_158 = arith.constant 1 : index
    %c0_159 = arith.constant 0 : index
    %275 = tpu.strided_load %arg9[%c1_158, %c0_159] {strides = array<i32: 2, 1>} : memref<34x16xf32, #tpu.memory_space<vmem>>, vector<8x16xf32>
    %c2_160 = arith.constant 2 : index
    %c0_161 = arith.constant 0 : index
    %276 = tpu.strided_load %arg9[%c2_160, %c0_161] {strides = array<i32: 2, 1>} : memref<34x16xf32, #tpu.memory_space<vmem>>, vector<8x16xf32>
    %277 = vector.extract_strided_slice %271 {offsets = [16, 0], sizes = [16, 16], strides = [1, 1]} : vector<32x16xf32> to vector<16x16xf32>
    %c1_162 = arith.constant 1 : index
    %c0_163 = arith.constant 0 : index
    %278 = vector.load %arg9[%c1_162, %c0_163] : memref<34x16xf32, #tpu.memory_space<vmem>>, vector<16x16xf32>
    tpu.vector_store %arg9[%c1_162, %c0_163], %277 {strides = array<i32>} : memref<34x16xf32, #tpu.memory_space<vmem>>, vector<16x16xf32>,
    %c0_164 = arith.constant 0 : index
    %c0_165 = arith.constant 0 : index
    %279 = tpu.strided_load %arg9[%c0_164, %c0_165] {strides = array<i32: 2, 1>} : memref<34x16xf32, #tpu.memory_space<vmem>>, vector<8x16xf32>
    %c1_166 = arith.constant 1 : index
    %c0_167 = arith.constant 0 : index
    %280 = tpu.strided_load %arg9[%c1_166, %c0_167] {strides = array<i32: 2, 1>} : memref<34x16xf32, #tpu.memory_space<vmem>>, vector<8x16xf32>
    %c2_168 = arith.constant 2 : index
    %c0_169 = arith.constant 0 : index
    %281 = tpu.strided_load %arg9[%c2_168, %c0_169] {strides = array<i32: 2, 1>} : memref<34x16xf32, #tpu.memory_space<vmem>>, vector<8x16xf32>
    %282 = tpu.concatenate %274, %279 in 0 : vector<8x16xf32>, vector<8x16xf32> -> vector<16x16xf32>
    %283 = tpu.concatenate %275, %280 in 0 : vector<8x16xf32>, vector<8x16xf32> -> vector<16x16xf32>
    %284 = tpu.concatenate %276, %281 in 0 : vector<8x16xf32>, vector<8x16xf32> -> vector<16x16xf32>
    %285 = tpu.iota {dimensions = array<i32: 0>} : vector<16x16xi32>
    %c8_i32 = arith.constant 8 : i32
    %c0_i32_170 = arith.constant 0 : i32
    %286 = arith.cmpi eq, %c8_i32, %c0_i32_170 : i32
    %c1_i32_171 = arith.constant 1 : i32
    %287 = arith.select %286, %c1_i32_171, %c8_i32 : i32
    %288 = vector.broadcast %287 : i32 to vector<16x16xi32>
    %289 = arith.remsi %285, %288 : vector<16x16xi32>
    %c0_i32_172 = arith.constant 0 : i32
    %290 = vector.broadcast %c0_i32_172 : i32 to vector<16x16xi32>
    %291 = arith.cmpi ne, %289, %290 : vector<16x16xi32>
    %c0_i32_173 = arith.constant 0 : i32
    %292 = vector.broadcast %c0_i32_173 : i32 to vector<16x16xi32>
    %293 = arith.cmpi slt, %289, %292 : vector<16x16xi32>
    %c0_i32_174 = arith.constant 0 : i32
    %294 = arith.cmpi slt, %287, %c0_i32_174 : i32
    %295 = vector.broadcast %294 : i1 to vector<16x16xi1>
    %296 = vector.broadcast %295 : vector<16x16xi1> to vector<16x16xi1>
    %297 = arith.xori %293, %296 : vector<16x16xi1>
    %298 = arith.andi %297, %291 : vector<16x16xi1>
    %299 = vector.broadcast %287 : i32 to vector<16x16xi32>
    %300 = arith.addi %289, %299 : vector<16x16xi32>
    %301 = arith.select %298, %300, %289 : vector<16x16xi1>, vector<16x16xi32>
    %c0_i32_175 = arith.constant 0 : i32
    %302 = vector.broadcast %c0_i32_175 : i32 to vector<16x16xi32>
    %303 = arith.cmpi eq, %301, %302 : vector<16x16xi32>
    %304 = arith.select %303, %283, %282 : vector<16x16xi1>, vector<16x16xf32>
    %305 = arith.maximumf %304, %283 : vector<16x16xf32>
    %306 = arith.maximumf %305, %284 : vector<16x16xf32>
    %c0_176 = arith.constant 0 : index
    %c0_177 = arith.constant 0 : index
    %307 = vector.load %arg7[%c0_176, %c0_177] : memref<1x32xf32, #tpu.memory_space<vmem>>, vector<1x32xf32>
    %cst_178 = arith.constant 0.000000e+00 : f32
    %308 = vector.broadcast %cst_178 : f32 to vector<16x32xf32>
    %309 = arith.truncf %282 : vector<16x16xf32> to vector<16x16xbf16>
    %c0_179 = arith.constant 0 : index
    %c0_180 = arith.constant 0 : index
    %c0_181 = arith.constant 0 : index
    %310 = vector.load %arg6[%c0_179, %c0_180, %c0_181] : memref<3x16x32xbf16, #tpu.memory_space<vmem>>, vector<1x16x32xbf16>
    %311 = vector.shape_cast %310 : vector<1x16x32xbf16> to vector<16x32xbf16>
    %cst_182 = arith.constant dense<0.000000e+00> : vector<16x32xf32>
    %312 = tpu.matmul %309, %311, %cst_182 {dimension_numbers = #tpu.dot_dimension_numbers<[1], [0], [0], [1], [0, 0, 1, 1], [], []>} : vector<16x16xbf16>, vector<16x32xbf16>, vector<16x32xf32> -> vector<16x32xf32>
    %313 = arith.addf %308, %312 : vector<16x32xf32>
    %314 = arith.truncf %283 : vector<16x16xf32> to vector<16x16xbf16>
    %c1_183 = arith.constant 1 : index
    %c0_184 = arith.constant 0 : index
    %c0_185 = arith.constant 0 : index
    %315 = vector.load %arg6[%c1_183, %c0_184, %c0_185] : memref<3x16x32xbf16, #tpu.memory_space<vmem>>, vector<1x16x32xbf16>
    %316 = vector.shape_cast %315 : vector<1x16x32xbf16> to vector<16x32xbf16>
    %cst_186 = arith.constant dense<0.000000e+00> : vector<16x32xf32>
    %317 = tpu.matmul %314, %316, %cst_186 {dimension_numbers = #tpu.dot_dimension_numbers<[1], [0], [0], [1], [0, 0, 1, 1], [], []>} : vector<16x16xbf16>, vector<16x32xbf16>, vector<16x32xf32> -> vector<16x32xf32>
    %318 = arith.addf %313, %317 : vector<16x32xf32>
    %319 = arith.truncf %284 : vector<16x16xf32> to vector<16x16xbf16>
    %c2_187 = arith.constant 2 : index
    %c0_188 = arith.constant 0 : index
    %c0_189 = arith.constant 0 : index
    %320 = vector.load %arg6[%c2_187, %c0_188, %c0_189] : memref<3x16x32xbf16, #tpu.memory_space<vmem>>, vector<1x16x32xbf16>
    %321 = vector.shape_cast %320 : vector<1x16x32xbf16> to vector<16x32xbf16>
    %cst_190 = arith.constant dense<0.000000e+00> : vector<16x32xf32>
    %322 = tpu.matmul %319, %321, %cst_190 {dimension_numbers = #tpu.dot_dimension_numbers<[1], [0], [0], [1], [0, 0, 1, 1], [], []>} : vector<16x16xbf16>, vector<16x32xbf16>, vector<16x32xf32> -> vector<16x32xf32>
    %323 = arith.addf %318, %322 : vector<16x32xf32>
    %324 = vector.broadcast %307 : vector<1x32xf32> to vector<16x32xf32>
    %325 = arith.addf %323, %324 : vector<16x32xf32>
    %326 = math.tanh %325 : vector<16x32xf32>
    %327 = vector.extract_strided_slice %326 {offsets = [0, 0], sizes = [16, 16], strides = [1, 1]} : vector<16x32xf32> to vector<16x16xf32>
    %328 = vector.extract_strided_slice %326 {offsets = [0, 16], sizes = [16, 16], strides = [1, 1]} : vector<16x32xf32> to vector<16x16xf32>
    %cst_191 = arith.constant 0.000000e+00 : f32
    %329 = vector.broadcast %cst_191 : f32 to vector<1x16xf32>
    %330 = vector.extract_strided_slice %327 {offsets = [0, 0], sizes = [15, 16], strides = [1, 1]} : vector<16x16xf32> to vector<15x16xf32>
    %331 = tpu.concatenate %329, %330 in 0 : vector<1x16xf32>, vector<15x16xf32> -> vector<16x16xf32>
    %332 = tpu.iota {dimensions = array<i32: 0>} : vector<16x16xi32>
    %c8_i32_192 = arith.constant 8 : i32
    %c0_i32_193 = arith.constant 0 : i32
    %333 = arith.cmpi eq, %c8_i32_192, %c0_i32_193 : i32
    %c1_i32_194 = arith.constant 1 : i32
    %334 = arith.select %333, %c1_i32_194, %c8_i32_192 : i32
    %335 = vector.broadcast %334 : i32 to vector<16x16xi32>
    %336 = arith.remsi %332, %335 : vector<16x16xi32>
    %c0_i32_195 = arith.constant 0 : i32
    %337 = vector.broadcast %c0_i32_195 : i32 to vector<16x16xi32>
    %338 = arith.cmpi ne, %336, %337 : vector<16x16xi32>
    %c0_i32_196 = arith.constant 0 : i32
    %339 = vector.broadcast %c0_i32_196 : i32 to vector<16x16xi32>
    %340 = arith.cmpi slt, %336, %339 : vector<16x16xi32>
    %c0_i32_197 = arith.constant 0 : i32
    %341 = arith.cmpi slt, %334, %c0_i32_197 : i32
    %342 = vector.broadcast %341 : i1 to vector<16x16xi1>
    %343 = vector.broadcast %342 : vector<16x16xi1> to vector<16x16xi1>
    %344 = arith.xori %340, %343 : vector<16x16xi1>
    %345 = arith.andi %344, %338 : vector<16x16xi1>
    %346 = vector.broadcast %334 : i32 to vector<16x16xi32>
    %347 = arith.addi %336, %346 : vector<16x16xi32>
    %348 = arith.select %345, %347, %336 : vector<16x16xi1>, vector<16x16xi32>
    %c1_i32_198 = arith.constant 1 : i32
    %349 = vector.broadcast %c1_i32_198 : i32 to vector<16x16xi32>
    %350 = arith.cmpi sge, %348, %349 : vector<16x16xi32>
    %cst_199 = arith.constant 0.000000e+00 : f32
    %351 = vector.broadcast %cst_199 : f32 to vector<16x16xf32>
    %352 = arith.select %350, %331, %351 : vector<16x16xi1>, vector<16x16xf32>
    %cst_200 = arith.constant 0.000000e+00 : f32
    %353 = vector.broadcast %cst_200 : f32 to vector<1x16xf32>
    %354 = vector.extract_strided_slice %327 {offsets = [1, 0], sizes = [15, 16], strides = [1, 1]} : vector<16x16xf32> to vector<15x16xf32>
    %355 = tpu.concatenate %354, %353 in 0 : vector<15x16xf32>, vector<1x16xf32> -> vector<16x16xf32>
    %356 = tpu.iota {dimensions = array<i32: 0>} : vector<16x16xi32>
    %c8_i32_201 = arith.constant 8 : i32
    %c0_i32_202 = arith.constant 0 : i32
    %357 = arith.cmpi eq, %c8_i32_201, %c0_i32_202 : i32
    %c1_i32_203 = arith.constant 1 : i32
    %358 = arith.select %357, %c1_i32_203, %c8_i32_201 : i32
    %359 = vector.broadcast %358 : i32 to vector<16x16xi32>
    %360 = arith.remsi %356, %359 : vector<16x16xi32>
    %c0_i32_204 = arith.constant 0 : i32
    %361 = vector.broadcast %c0_i32_204 : i32 to vector<16x16xi32>
    %362 = arith.cmpi ne, %360, %361 : vector<16x16xi32>
    %c0_i32_205 = arith.constant 0 : i32
    %363 = vector.broadcast %c0_i32_205 : i32 to vector<16x16xi32>
    %364 = arith.cmpi slt, %360, %363 : vector<16x16xi32>
    %c0_i32_206 = arith.constant 0 : i32
    %365 = arith.cmpi slt, %358, %c0_i32_206 : i32
    %366 = vector.broadcast %365 : i1 to vector<16x16xi1>
    %367 = vector.broadcast %366 : vector<16x16xi1> to vector<16x16xi1>
    %368 = arith.xori %364, %367 : vector<16x16xi1>
    %369 = arith.andi %368, %362 : vector<16x16xi1>
    %370 = vector.broadcast %358 : i32 to vector<16x16xi32>
    %371 = arith.addi %360, %370 : vector<16x16xi32>
    %372 = arith.select %369, %371, %360 : vector<16x16xi1>, vector<16x16xi32>
    %c7_i32 = arith.constant 7 : i32
    %373 = vector.broadcast %c7_i32 : i32 to vector<16x16xi32>
    %374 = arith.cmpi slt, %372, %373 : vector<16x16xi32>
    %cst_207 = arith.constant 0.000000e+00 : f32
    %375 = vector.broadcast %cst_207 : f32 to vector<16x16xf32>
    %376 = arith.select %374, %355, %375 : vector<16x16xi1>, vector<16x16xf32>
    %c2_208 = arith.constant 2 : index
    %c0_209 = arith.constant 0 : index
    %c0_210 = arith.constant 0 : index
    %377 = vector.load %arg5[%c2_208, %c0_209, %c0_210] : memref<8x1x16xf32, #tpu.memory_space<vmem>>, vector<1x1x16xf32>
    %378 = vector.shape_cast %377 : vector<1x1x16xf32> to vector<1x16xf32>
    %cst_211 = arith.constant 0.000000e+00 : f32
    %379 = vector.broadcast %cst_211 : f32 to vector<16x16xf32>
    %380 = arith.truncf %352 : vector<16x16xf32> to vector<16x16xbf16>
    %c2_212 = arith.constant 2 : index
    %c0_213 = arith.constant 0 : index
    %c0_214 = arith.constant 0 : index
    %c0_215 = arith.constant 0 : index
    %381 = vector.load %arg4[%c2_212, %c0_213, %c0_214, %c0_215] : memref<8x3x16x16xbf16, #tpu.memory_space<vmem>>, vector<1x1x16x16xbf16>
    %382 = vector.shape_cast %381 : vector<1x1x16x16xbf16> to vector<16x16xbf16>
    %cst_216 = arith.constant dense<0.000000e+00> : vector<16x16xf32>
    %383 = tpu.matmul %380, %382, %cst_216 {dimension_numbers = #tpu.dot_dimension_numbers<[1], [0], [0], [1], [0, 0, 1, 1], [], []>} : vector<16x16xbf16>, vector<16x16xbf16>, vector<16x16xf32> -> vector<16x16xf32>
    %384 = arith.addf %379, %383 : vector<16x16xf32>
    %385 = arith.truncf %327 : vector<16x16xf32> to vector<16x16xbf16>
    %c2_217 = arith.constant 2 : index
    %c1_218 = arith.constant 1 : index
    %c0_219 = arith.constant 0 : index
    %c0_220 = arith.constant 0 : index
    %386 = vector.load %arg4[%c2_217, %c1_218, %c0_219, %c0_220] : memref<8x3x16x16xbf16, #tpu.memory_space<vmem>>, vector<1x1x16x16xbf16>
    %387 = vector.shape_cast %386 : vector<1x1x16x16xbf16> to vector<16x16xbf16>
    %cst_221 = arith.constant dense<0.000000e+00> : vector<16x16xf32>
    %388 = tpu.matmul %385, %387, %cst_221 {dimension_numbers = #tpu.dot_dimension_numbers<[1], [0], [0], [1], [0, 0, 1, 1], [], []>} : vector<16x16xbf16>, vector<16x16xbf16>, vector<16x16xf32> -> vector<16x16xf32>
    %389 = arith.addf %384, %388 : vector<16x16xf32>
    %390 = arith.truncf %376 : vector<16x16xf32> to vector<16x16xbf16>
    %c2_222 = arith.constant 2 : index
    %c2_223 = arith.constant 2 : index
    %c0_224 = arith.constant 0 : index
    %c0_225 = arith.constant 0 : index
    %391 = vector.load %arg4[%c2_222, %c2_223, %c0_224, %c0_225] : memref<8x3x16x16xbf16, #tpu.memory_space<vmem>>, vector<1x1x16x16xbf16>
    %392 = vector.shape_cast %391 : vector<1x1x16x16xbf16> to vector<16x16xbf16>
    %cst_226 = arith.constant dense<0.000000e+00> : vector<16x16xf32>
    %393 = tpu.matmul %390, %392, %cst_226 {dimension_numbers = #tpu.dot_dimension_numbers<[1], [0], [0], [1], [0, 0, 1, 1], [], []>} : vector<16x16xbf16>, vector<16x16xbf16>, vector<16x16xf32> -> vector<16x16xf32>
    %394 = arith.addf %389, %393 : vector<16x16xf32>
    %395 = vector.broadcast %378 : vector<1x16xf32> to vector<16x16xf32>
    %396 = arith.addf %394, %395 : vector<16x16xf32>
    %397 = math.tanh %396 : vector<16x16xf32>
    %398 = arith.addf %397, %306 : vector<16x16xf32>
    %cst_227 = arith.constant 0.000000e+00 : f32
    %399 = vector.broadcast %cst_227 : f32 to vector<1x16xf32>
    %400 = vector.extract_strided_slice %328 {offsets = [0, 0], sizes = [15, 16], strides = [1, 1]} : vector<16x16xf32> to vector<15x16xf32>
    %401 = tpu.concatenate %399, %400 in 0 : vector<1x16xf32>, vector<15x16xf32> -> vector<16x16xf32>
    %402 = tpu.iota {dimensions = array<i32: 0>} : vector<16x16xi32>
    %c8_i32_228 = arith.constant 8 : i32
    %c0_i32_229 = arith.constant 0 : i32
    %403 = arith.cmpi eq, %c8_i32_228, %c0_i32_229 : i32
    %c1_i32_230 = arith.constant 1 : i32
    %404 = arith.select %403, %c1_i32_230, %c8_i32_228 : i32
    %405 = vector.broadcast %404 : i32 to vector<16x16xi32>
    %406 = arith.remsi %402, %405 : vector<16x16xi32>
    %c0_i32_231 = arith.constant 0 : i32
    %407 = vector.broadcast %c0_i32_231 : i32 to vector<16x16xi32>
    %408 = arith.cmpi ne, %406, %407 : vector<16x16xi32>
    %c0_i32_232 = arith.constant 0 : i32
    %409 = vector.broadcast %c0_i32_232 : i32 to vector<16x16xi32>
    %410 = arith.cmpi slt, %406, %409 : vector<16x16xi32>
    %c0_i32_233 = arith.constant 0 : i32
    %411 = arith.cmpi slt, %404, %c0_i32_233 : i32
    %412 = vector.broadcast %411 : i1 to vector<16x16xi1>
    %413 = vector.broadcast %412 : vector<16x16xi1> to vector<16x16xi1>
    %414 = arith.xori %410, %413 : vector<16x16xi1>
    %415 = arith.andi %414, %408 : vector<16x16xi1>
    %416 = vector.broadcast %404 : i32 to vector<16x16xi32>
    %417 = arith.addi %406, %416 : vector<16x16xi32>
    %418 = arith.select %415, %417, %406 : vector<16x16xi1>, vector<16x16xi32>
    %c1_i32_234 = arith.constant 1 : i32
    %419 = vector.broadcast %c1_i32_234 : i32 to vector<16x16xi32>
    %420 = arith.cmpi sge, %418, %419 : vector<16x16xi32>
    %cst_235 = arith.constant 0.000000e+00 : f32
    %421 = vector.broadcast %cst_235 : f32 to vector<16x16xf32>
    %422 = arith.select %420, %401, %421 : vector<16x16xi1>, vector<16x16xf32>
    %cst_236 = arith.constant 0.000000e+00 : f32
    %423 = vector.broadcast %cst_236 : f32 to vector<1x16xf32>
    %424 = vector.extract_strided_slice %328 {offsets = [1, 0], sizes = [15, 16], strides = [1, 1]} : vector<16x16xf32> to vector<15x16xf32>
    %425 = tpu.concatenate %424, %423 in 0 : vector<15x16xf32>, vector<1x16xf32> -> vector<16x16xf32>
    %426 = tpu.iota {dimensions = array<i32: 0>} : vector<16x16xi32>
    %c8_i32_237 = arith.constant 8 : i32
    %c0_i32_238 = arith.constant 0 : i32
    %427 = arith.cmpi eq, %c8_i32_237, %c0_i32_238 : i32
    %c1_i32_239 = arith.constant 1 : i32
    %428 = arith.select %427, %c1_i32_239, %c8_i32_237 : i32
    %429 = vector.broadcast %428 : i32 to vector<16x16xi32>
    %430 = arith.remsi %426, %429 : vector<16x16xi32>
    %c0_i32_240 = arith.constant 0 : i32
    %431 = vector.broadcast %c0_i32_240 : i32 to vector<16x16xi32>
    %432 = arith.cmpi ne, %430, %431 : vector<16x16xi32>
    %c0_i32_241 = arith.constant 0 : i32
    %433 = vector.broadcast %c0_i32_241 : i32 to vector<16x16xi32>
    %434 = arith.cmpi slt, %430, %433 : vector<16x16xi32>
    %c0_i32_242 = arith.constant 0 : i32
    %435 = arith.cmpi slt, %428, %c0_i32_242 : i32
    %436 = vector.broadcast %435 : i1 to vector<16x16xi1>
    %437 = vector.broadcast %436 : vector<16x16xi1> to vector<16x16xi1>
    %438 = arith.xori %434, %437 : vector<16x16xi1>
    %439 = arith.andi %438, %432 : vector<16x16xi1>
    %440 = vector.broadcast %428 : i32 to vector<16x16xi32>
    %441 = arith.addi %430, %440 : vector<16x16xi32>
    %442 = arith.select %439, %441, %430 : vector<16x16xi1>, vector<16x16xi32>
    %c7_i32_243 = arith.constant 7 : i32
    %443 = vector.broadcast %c7_i32_243 : i32 to vector<16x16xi32>
    %444 = arith.cmpi slt, %442, %443 : vector<16x16xi32>
    %cst_244 = arith.constant 0.000000e+00 : f32
    %445 = vector.broadcast %cst_244 : f32 to vector<16x16xf32>
    %446 = arith.select %444, %425, %445 : vector<16x16xi1>, vector<16x16xf32>
    %c4 = arith.constant 4 : index
    %c0_245 = arith.constant 0 : index
    %c0_246 = arith.constant 0 : index
    %447 = vector.load %arg5[%c4, %c0_245, %c0_246] : memref<8x1x16xf32, #tpu.memory_space<vmem>>, vector<1x1x16xf32>
    %448 = vector.shape_cast %447 : vector<1x1x16xf32> to vector<1x16xf32>
    %cst_247 = arith.constant 0.000000e+00 : f32
    %449 = vector.broadcast %cst_247 : f32 to vector<16x16xf32>
    %450 = arith.truncf %422 : vector<16x16xf32> to vector<16x16xbf16>
    %c4_248 = arith.constant 4 : index
    %c0_249 = arith.constant 0 : index
    %c0_250 = arith.constant 0 : index
    %c0_251 = arith.constant 0 : index
    %451 = vector.load %arg4[%c4_248, %c0_249, %c0_250, %c0_251] : memref<8x3x16x16xbf16, #tpu.memory_space<vmem>>, vector<1x1x16x16xbf16>
    %452 = vector.shape_cast %451 : vector<1x1x16x16xbf16> to vector<16x16xbf16>
    %cst_252 = arith.constant dense<0.000000e+00> : vector<16x16xf32>
    %453 = tpu.matmul %450, %452, %cst_252 {dimension_numbers = #tpu.dot_dimension_numbers<[1], [0], [0], [1], [0, 0, 1, 1], [], []>} : vector<16x16xbf16>, vector<16x16xbf16>, vector<16x16xf32> -> vector<16x16xf32>
    %454 = arith.addf %449, %453 : vector<16x16xf32>
    %455 = arith.truncf %328 : vector<16x16xf32> to vector<16x16xbf16>
    %c4_253 = arith.constant 4 : index
    %c1_254 = arith.constant 1 : index
    %c0_255 = arith.constant 0 : index
    %c0_256 = arith.constant 0 : index
    %456 = vector.load %arg4[%c4_253, %c1_254, %c0_255, %c0_256] : memref<8x3x16x16xbf16, #tpu.memory_space<vmem>>, vector<1x1x16x16xbf16>
    %457 = vector.shape_cast %456 : vector<1x1x16x16xbf16> to vector<16x16xbf16>
    %cst_257 = arith.constant dense<0.000000e+00> : vector<16x16xf32>
    %458 = tpu.matmul %455, %457, %cst_257 {dimension_numbers = #tpu.dot_dimension_numbers<[1], [0], [0], [1], [0, 0, 1, 1], [], []>} : vector<16x16xbf16>, vector<16x16xbf16>, vector<16x16xf32> -> vector<16x16xf32>
    %459 = arith.addf %454, %458 : vector<16x16xf32>
    %460 = arith.truncf %446 : vector<16x16xf32> to vector<16x16xbf16>
    %c4_258 = arith.constant 4 : index
    %c2_259 = arith.constant 2 : index
    %c0_260 = arith.constant 0 : index
    %c0_261 = arith.constant 0 : index
    %461 = vector.load %arg4[%c4_258, %c2_259, %c0_260, %c0_261] : memref<8x3x16x16xbf16, #tpu.memory_space<vmem>>, vector<1x1x16x16xbf16>
    %462 = vector.shape_cast %461 : vector<1x1x16x16xbf16> to vector<16x16xbf16>
    %cst_262 = arith.constant dense<0.000000e+00> : vector<16x16xf32>
    %463 = tpu.matmul %460, %462, %cst_262 {dimension_numbers = #tpu.dot_dimension_numbers<[1], [0], [0], [1], [0, 0, 1, 1], [], []>} : vector<16x16xbf16>, vector<16x16xbf16>, vector<16x16xf32> -> vector<16x16xf32>
    %464 = arith.addf %459, %463 : vector<16x16xf32>
    %465 = vector.broadcast %448 : vector<1x16xf32> to vector<16x16xf32>
    %466 = arith.addf %464, %465 : vector<16x16xf32>
    %467 = math.tanh %466 : vector<16x16xf32>
    %468 = arith.addf %467, %306 : vector<16x16xf32>
    %cst_263 = arith.constant 0.000000e+00 : f32
    %469 = vector.broadcast %cst_263 : f32 to vector<1x16xf32>
    %470 = vector.extract_strided_slice %398 {offsets = [0, 0], sizes = [15, 16], strides = [1, 1]} : vector<16x16xf32> to vector<15x16xf32>
    %471 = tpu.concatenate %469, %470 in 0 : vector<1x16xf32>, vector<15x16xf32> -> vector<16x16xf32>
    %472 = tpu.iota {dimensions = array<i32: 0>} : vector<16x16xi32>
    %c8_i32_264 = arith.constant 8 : i32
    %c0_i32_265 = arith.constant 0 : i32
    %473 = arith.cmpi eq, %c8_i32_264, %c0_i32_265 : i32
    %c1_i32_266 = arith.constant 1 : i32
    %474 = arith.select %473, %c1_i32_266, %c8_i32_264 : i32
    %475 = vector.broadcast %474 : i32 to vector<16x16xi32>
    %476 = arith.remsi %472, %475 : vector<16x16xi32>
    %c0_i32_267 = arith.constant 0 : i32
    %477 = vector.broadcast %c0_i32_267 : i32 to vector<16x16xi32>
    %478 = arith.cmpi ne, %476, %477 : vector<16x16xi32>
    %c0_i32_268 = arith.constant 0 : i32
    %479 = vector.broadcast %c0_i32_268 : i32 to vector<16x16xi32>
    %480 = arith.cmpi slt, %476, %479 : vector<16x16xi32>
    %c0_i32_269 = arith.constant 0 : i32
    %481 = arith.cmpi slt, %474, %c0_i32_269 : i32
    %482 = vector.broadcast %481 : i1 to vector<16x16xi1>
    %483 = vector.broadcast %482 : vector<16x16xi1> to vector<16x16xi1>
    %484 = arith.xori %480, %483 : vector<16x16xi1>
    %485 = arith.andi %484, %478 : vector<16x16xi1>
    %486 = vector.broadcast %474 : i32 to vector<16x16xi32>
    %487 = arith.addi %476, %486 : vector<16x16xi32>
    %488 = arith.select %485, %487, %476 : vector<16x16xi1>, vector<16x16xi32>
    %c1_i32_270 = arith.constant 1 : i32
    %489 = vector.broadcast %c1_i32_270 : i32 to vector<16x16xi32>
    %490 = arith.cmpi sge, %488, %489 : vector<16x16xi32>
    %cst_271 = arith.constant 0.000000e+00 : f32
    %491 = vector.broadcast %cst_271 : f32 to vector<16x16xf32>
    %492 = arith.select %490, %471, %491 : vector<16x16xi1>, vector<16x16xf32>
    %cst_272 = arith.constant 0.000000e+00 : f32
    %493 = vector.broadcast %cst_272 : f32 to vector<1x16xf32>
    %494 = vector.extract_strided_slice %398 {offsets = [1, 0], sizes = [15, 16], strides = [1, 1]} : vector<16x16xf32> to vector<15x16xf32>
    %495 = tpu.concatenate %494, %493 in 0 : vector<15x16xf32>, vector<1x16xf32> -> vector<16x16xf32>
    %496 = tpu.iota {dimensions = array<i32: 0>} : vector<16x16xi32>
    %c8_i32_273 = arith.constant 8 : i32
    %c0_i32_274 = arith.constant 0 : i32
    %497 = arith.cmpi eq, %c8_i32_273, %c0_i32_274 : i32
    %c1_i32_275 = arith.constant 1 : i32
    %498 = arith.select %497, %c1_i32_275, %c8_i32_273 : i32
    %499 = vector.broadcast %498 : i32 to vector<16x16xi32>
    %500 = arith.remsi %496, %499 : vector<16x16xi32>
    %c0_i32_276 = arith.constant 0 : i32
    %501 = vector.broadcast %c0_i32_276 : i32 to vector<16x16xi32>
    %502 = arith.cmpi ne, %500, %501 : vector<16x16xi32>
    %c0_i32_277 = arith.constant 0 : i32
    %503 = vector.broadcast %c0_i32_277 : i32 to vector<16x16xi32>
    %504 = arith.cmpi slt, %500, %503 : vector<16x16xi32>
    %c0_i32_278 = arith.constant 0 : i32
    %505 = arith.cmpi slt, %498, %c0_i32_278 : i32
    %506 = vector.broadcast %505 : i1 to vector<16x16xi1>
    %507 = vector.broadcast %506 : vector<16x16xi1> to vector<16x16xi1>
    %508 = arith.xori %504, %507 : vector<16x16xi1>
    %509 = arith.andi %508, %502 : vector<16x16xi1>
    %510 = vector.broadcast %498 : i32 to vector<16x16xi32>
    %511 = arith.addi %500, %510 : vector<16x16xi32>
    %512 = arith.select %509, %511, %500 : vector<16x16xi1>, vector<16x16xi32>
    %c7_i32_279 = arith.constant 7 : i32
    %513 = vector.broadcast %c7_i32_279 : i32 to vector<16x16xi32>
    %514 = arith.cmpi slt, %512, %513 : vector<16x16xi32>
    %cst_280 = arith.constant 0.000000e+00 : f32
    %515 = vector.broadcast %cst_280 : f32 to vector<16x16xf32>
    %516 = arith.select %514, %495, %515 : vector<16x16xi1>, vector<16x16xf32>
    %c3 = arith.constant 3 : index
    %c0_281 = arith.constant 0 : index
    %c0_282 = arith.constant 0 : index
    %517 = vector.load %arg3[%c3, %c0_281, %c0_282] : memref<8x1x16xf32, #tpu.memory_space<vmem>>, vector<1x1x16xf32>
    %518 = vector.shape_cast %517 : vector<1x1x16xf32> to vector<1x16xf32>
    %cst_283 = arith.constant 0.000000e+00 : f32
    %519 = vector.broadcast %cst_283 : f32 to vector<16x16xf32>
    %520 = arith.truncf %492 : vector<16x16xf32> to vector<16x16xbf16>
    %c3_284 = arith.constant 3 : index
    %c0_285 = arith.constant 0 : index
    %c0_286 = arith.constant 0 : index
    %c0_287 = arith.constant 0 : index
    %521 = vector.load %arg2[%c3_284, %c0_285, %c0_286, %c0_287] : memref<8x3x16x16xbf16, #tpu.memory_space<vmem>>, vector<1x1x16x16xbf16>
    %522 = vector.shape_cast %521 : vector<1x1x16x16xbf16> to vector<16x16xbf16>
    %cst_288 = arith.constant dense<0.000000e+00> : vector<16x16xf32>
    %523 = tpu.matmul %520, %522, %cst_288 {dimension_numbers = #tpu.dot_dimension_numbers<[1], [0], [0], [1], [0, 0, 1, 1], [], []>} : vector<16x16xbf16>, vector<16x16xbf16>, vector<16x16xf32> -> vector<16x16xf32>
    %524 = arith.addf %519, %523 : vector<16x16xf32>
    %525 = arith.truncf %398 : vector<16x16xf32> to vector<16x16xbf16>
    %c3_289 = arith.constant 3 : index
    %c1_290 = arith.constant 1 : index
    %c0_291 = arith.constant 0 : index
    %c0_292 = arith.constant 0 : index
    %526 = vector.load %arg2[%c3_289, %c1_290, %c0_291, %c0_292] : memref<8x3x16x16xbf16, #tpu.memory_space<vmem>>, vector<1x1x16x16xbf16>
    %527 = vector.shape_cast %526 : vector<1x1x16x16xbf16> to vector<16x16xbf16>
    %cst_293 = arith.constant dense<0.000000e+00> : vector<16x16xf32>
    %528 = tpu.matmul %525, %527, %cst_293 {dimension_numbers = #tpu.dot_dimension_numbers<[1], [0], [0], [1], [0, 0, 1, 1], [], []>} : vector<16x16xbf16>, vector<16x16xbf16>, vector<16x16xf32> -> vector<16x16xf32>
    %529 = arith.addf %524, %528 : vector<16x16xf32>
    %530 = arith.truncf %516 : vector<16x16xf32> to vector<16x16xbf16>
    %c3_294 = arith.constant 3 : index
    %c2_295 = arith.constant 2 : index
    %c0_296 = arith.constant 0 : index
    %c0_297 = arith.constant 0 : index
    %531 = vector.load %arg2[%c3_294, %c2_295, %c0_296, %c0_297] : memref<8x3x16x16xbf16, #tpu.memory_space<vmem>>, vector<1x1x16x16xbf16>
    %532 = vector.shape_cast %531 : vector<1x1x16x16xbf16> to vector<16x16xbf16>
    %cst_298 = arith.constant dense<0.000000e+00> : vector<16x16xf32>
    %533 = tpu.matmul %530, %532, %cst_298 {dimension_numbers = #tpu.dot_dimension_numbers<[1], [0], [0], [1], [0, 0, 1, 1], [], []>} : vector<16x16xbf16>, vector<16x16xbf16>, vector<16x16xf32> -> vector<16x16xf32>
    %534 = arith.addf %529, %533 : vector<16x16xf32>
    %535 = vector.broadcast %518 : vector<1x16xf32> to vector<16x16xf32>
    %536 = arith.addf %534, %535 : vector<16x16xf32>
    %537 = math.tanh %536 : vector<16x16xf32>
    %cst_299 = arith.constant 0.000000e+00 : f32
    %538 = vector.broadcast %cst_299 : f32 to vector<1x16xf32>
    %539 = vector.extract_strided_slice %537 {offsets = [0, 0], sizes = [15, 16], strides = [1, 1]} : vector<16x16xf32> to vector<15x16xf32>
    %540 = tpu.concatenate %538, %539 in 0 : vector<1x16xf32>, vector<15x16xf32> -> vector<16x16xf32>
    %541 = tpu.iota {dimensions = array<i32: 0>} : vector<16x16xi32>
    %c8_i32_300 = arith.constant 8 : i32
    %c0_i32_301 = arith.constant 0 : i32
    %542 = arith.cmpi eq, %c8_i32_300, %c0_i32_301 : i32
    %c1_i32_302 = arith.constant 1 : i32
    %543 = arith.select %542, %c1_i32_302, %c8_i32_300 : i32
    %544 = vector.broadcast %543 : i32 to vector<16x16xi32>
    %545 = arith.remsi %541, %544 : vector<16x16xi32>
    %c0_i32_303 = arith.constant 0 : i32
    %546 = vector.broadcast %c0_i32_303 : i32 to vector<16x16xi32>
    %547 = arith.cmpi ne, %545, %546 : vector<16x16xi32>
    %c0_i32_304 = arith.constant 0 : i32
    %548 = vector.broadcast %c0_i32_304 : i32 to vector<16x16xi32>
    %549 = arith.cmpi slt, %545, %548 : vector<16x16xi32>
    %c0_i32_305 = arith.constant 0 : i32
    %550 = arith.cmpi slt, %543, %c0_i32_305 : i32
    %551 = vector.broadcast %550 : i1 to vector<16x16xi1>
    %552 = vector.broadcast %551 : vector<16x16xi1> to vector<16x16xi1>
    %553 = arith.xori %549, %552 : vector<16x16xi1>
    %554 = arith.andi %553, %547 : vector<16x16xi1>
    %555 = vector.broadcast %543 : i32 to vector<16x16xi32>
    %556 = arith.addi %545, %555 : vector<16x16xi32>
    %557 = arith.select %554, %556, %545 : vector<16x16xi1>, vector<16x16xi32>
    %c1_i32_306 = arith.constant 1 : i32
    %558 = vector.broadcast %c1_i32_306 : i32 to vector<16x16xi32>
    %559 = arith.cmpi sge, %557, %558 : vector<16x16xi32>
    %cst_307 = arith.constant 0.000000e+00 : f32
    %560 = vector.broadcast %cst_307 : f32 to vector<16x16xf32>
    %561 = arith.select %559, %540, %560 : vector<16x16xi1>, vector<16x16xf32>
    %cst_308 = arith.constant 0.000000e+00 : f32
    %562 = vector.broadcast %cst_308 : f32 to vector<1x16xf32>
    %563 = vector.extract_strided_slice %537 {offsets = [1, 0], sizes = [15, 16], strides = [1, 1]} : vector<16x16xf32> to vector<15x16xf32>
    %564 = tpu.concatenate %563, %562 in 0 : vector<15x16xf32>, vector<1x16xf32> -> vector<16x16xf32>
    %565 = tpu.iota {dimensions = array<i32: 0>} : vector<16x16xi32>
    %c8_i32_309 = arith.constant 8 : i32
    %c0_i32_310 = arith.constant 0 : i32
    %566 = arith.cmpi eq, %c8_i32_309, %c0_i32_310 : i32
    %c1_i32_311 = arith.constant 1 : i32
    %567 = arith.select %566, %c1_i32_311, %c8_i32_309 : i32
    %568 = vector.broadcast %567 : i32 to vector<16x16xi32>
    %569 = arith.remsi %565, %568 : vector<16x16xi32>
    %c0_i32_312 = arith.constant 0 : i32
    %570 = vector.broadcast %c0_i32_312 : i32 to vector<16x16xi32>
    %571 = arith.cmpi ne, %569, %570 : vector<16x16xi32>
    %c0_i32_313 = arith.constant 0 : i32
    %572 = vector.broadcast %c0_i32_313 : i32 to vector<16x16xi32>
    %573 = arith.cmpi slt, %569, %572 : vector<16x16xi32>
    %c0_i32_314 = arith.constant 0 : i32
    %574 = arith.cmpi slt, %567, %c0_i32_314 : i32
    %575 = vector.broadcast %574 : i1 to vector<16x16xi1>
    %576 = vector.broadcast %575 : vector<16x16xi1> to vector<16x16xi1>
    %577 = arith.xori %573, %576 : vector<16x16xi1>
    %578 = arith.andi %577, %571 : vector<16x16xi1>
    %579 = vector.broadcast %567 : i32 to vector<16x16xi32>
    %580 = arith.addi %569, %579 : vector<16x16xi32>
    %581 = arith.select %578, %580, %569 : vector<16x16xi1>, vector<16x16xi32>
    %c7_i32_315 = arith.constant 7 : i32
    %582 = vector.broadcast %c7_i32_315 : i32 to vector<16x16xi32>
    %583 = arith.cmpi slt, %581, %582 : vector<16x16xi32>
    %cst_316 = arith.constant 0.000000e+00 : f32
    %584 = vector.broadcast %cst_316 : f32 to vector<16x16xf32>
    %585 = arith.select %583, %564, %584 : vector<16x16xi1>, vector<16x16xf32>
    %c3_317 = arith.constant 3 : index
    %c0_318 = arith.constant 0 : index
    %c0_319 = arith.constant 0 : index
    %586 = vector.load %arg5[%c3_317, %c0_318, %c0_319] : memref<8x1x16xf32, #tpu.memory_space<vmem>>, vector<1x1x16xf32>
    %587 = vector.shape_cast %586 : vector<1x1x16xf32> to vector<1x16xf32>
    %cst_320 = arith.constant 0.000000e+00 : f32
    %588 = vector.broadcast %cst_320 : f32 to vector<16x16xf32>
    %589 = arith.truncf %561 : vector<16x16xf32> to vector<16x16xbf16>
    %c3_321 = arith.constant 3 : index
    %c0_322 = arith.constant 0 : index
    %c0_323 = arith.constant 0 : index
    %c0_324 = arith.constant 0 : index
    %590 = vector.load %arg4[%c3_321, %c0_322, %c0_323, %c0_324] : memref<8x3x16x16xbf16, #tpu.memory_space<vmem>>, vector<1x1x16x16xbf16>
    %591 = vector.shape_cast %590 : vector<1x1x16x16xbf16> to vector<16x16xbf16>
    %cst_325 = arith.constant dense<0.000000e+00> : vector<16x16xf32>
    %592 = tpu.matmul %589, %591, %cst_325 {dimension_numbers = #tpu.dot_dimension_numbers<[1], [0], [0], [1], [0, 0, 1, 1], [], []>} : vector<16x16xbf16>, vector<16x16xbf16>, vector<16x16xf32> -> vector<16x16xf32>
    %593 = arith.addf %588, %592 : vector<16x16xf32>
    %594 = arith.truncf %537 : vector<16x16xf32> to vector<16x16xbf16>
    %c3_326 = arith.constant 3 : index
    %c1_327 = arith.constant 1 : index
    %c0_328 = arith.constant 0 : index
    %c0_329 = arith.constant 0 : index
    %595 = vector.load %arg4[%c3_326, %c1_327, %c0_328, %c0_329] : memref<8x3x16x16xbf16, #tpu.memory_space<vmem>>, vector<1x1x16x16xbf16>
    %596 = vector.shape_cast %595 : vector<1x1x16x16xbf16> to vector<16x16xbf16>
    %cst_330 = arith.constant dense<0.000000e+00> : vector<16x16xf32>
    %597 = tpu.matmul %594, %596, %cst_330 {dimension_numbers = #tpu.dot_dimension_numbers<[1], [0], [0], [1], [0, 0, 1, 1], [], []>} : vector<16x16xbf16>, vector<16x16xbf16>, vector<16x16xf32> -> vector<16x16xf32>
    %598 = arith.addf %593, %597 : vector<16x16xf32>
    %599 = arith.truncf %585 : vector<16x16xf32> to vector<16x16xbf16>
    %c3_331 = arith.constant 3 : index
    %c2_332 = arith.constant 2 : index
    %c0_333 = arith.constant 0 : index
    %c0_334 = arith.constant 0 : index
    %600 = vector.load %arg4[%c3_331, %c2_332, %c0_333, %c0_334] : memref<8x3x16x16xbf16, #tpu.memory_space<vmem>>, vector<1x1x16x16xbf16>
    %601 = vector.shape_cast %600 : vector<1x1x16x16xbf16> to vector<16x16xbf16>
    %cst_335 = arith.constant dense<0.000000e+00> : vector<16x16xf32>
    %602 = tpu.matmul %599, %601, %cst_335 {dimension_numbers = #tpu.dot_dimension_numbers<[1], [0], [0], [1], [0, 0, 1, 1], [], []>} : vector<16x16xbf16>, vector<16x16xbf16>, vector<16x16xf32> -> vector<16x16xf32>
    %603 = arith.addf %598, %602 : vector<16x16xf32>
    %604 = vector.broadcast %587 : vector<1x16xf32> to vector<16x16xf32>
    %605 = arith.addf %603, %604 : vector<16x16xf32>
    %606 = math.tanh %605 : vector<16x16xf32>
    %607 = arith.addf %606, %398 : vector<16x16xf32>
    %cst_336 = arith.constant 0.000000e+00 : f32
    %608 = vector.broadcast %cst_336 : f32 to vector<1x16xf32>
    %609 = vector.extract_strided_slice %468 {offsets = [0, 0], sizes = [15, 16], strides = [1, 1]} : vector<16x16xf32> to vector<15x16xf32>
    %610 = tpu.concatenate %608, %609 in 0 : vector<1x16xf32>, vector<15x16xf32> -> vector<16x16xf32>
    %611 = tpu.iota {dimensions = array<i32: 0>} : vector<16x16xi32>
    %c8_i32_337 = arith.constant 8 : i32
    %c0_i32_338 = arith.constant 0 : i32
    %612 = arith.cmpi eq, %c8_i32_337, %c0_i32_338 : i32
    %c1_i32_339 = arith.constant 1 : i32
    %613 = arith.select %612, %c1_i32_339, %c8_i32_337 : i32
    %614 = vector.broadcast %613 : i32 to vector<16x16xi32>
    %615 = arith.remsi %611, %614 : vector<16x16xi32>
    %c0_i32_340 = arith.constant 0 : i32
    %616 = vector.broadcast %c0_i32_340 : i32 to vector<16x16xi32>
    %617 = arith.cmpi ne, %615, %616 : vector<16x16xi32>
    %c0_i32_341 = arith.constant 0 : i32
    %618 = vector.broadcast %c0_i32_341 : i32 to vector<16x16xi32>
    %619 = arith.cmpi slt, %615, %618 : vector<16x16xi32>
    %c0_i32_342 = arith.constant 0 : i32
    %620 = arith.cmpi slt, %613, %c0_i32_342 : i32
    %621 = vector.broadcast %620 : i1 to vector<16x16xi1>
    %622 = vector.broadcast %621 : vector<16x16xi1> to vector<16x16xi1>
    %623 = arith.xori %619, %622 : vector<16x16xi1>
    %624 = arith.andi %623, %617 : vector<16x16xi1>
    %625 = vector.broadcast %613 : i32 to vector<16x16xi32>
    %626 = arith.addi %615, %625 : vector<16x16xi32>
    %627 = arith.select %624, %626, %615 : vector<16x16xi1>, vector<16x16xi32>
    %c1_i32_343 = arith.constant 1 : i32
    %628 = vector.broadcast %c1_i32_343 : i32 to vector<16x16xi32>
    %629 = arith.cmpi sge, %627, %628 : vector<16x16xi32>
    %cst_344 = arith.constant 0.000000e+00 : f32
    %630 = vector.broadcast %cst_344 : f32 to vector<16x16xf32>
    %631 = arith.select %629, %610, %630 : vector<16x16xi1>, vector<16x16xf32>
    %cst_345 = arith.constant 0.000000e+00 : f32
    %632 = vector.broadcast %cst_345 : f32 to vector<1x16xf32>
    %633 = vector.extract_strided_slice %468 {offsets = [1, 0], sizes = [15, 16], strides = [1, 1]} : vector<16x16xf32> to vector<15x16xf32>
    %634 = tpu.concatenate %633, %632 in 0 : vector<15x16xf32>, vector<1x16xf32> -> vector<16x16xf32>
    %635 = tpu.iota {dimensions = array<i32: 0>} : vector<16x16xi32>
    %c8_i32_346 = arith.constant 8 : i32
    %c0_i32_347 = arith.constant 0 : i32
    %636 = arith.cmpi eq, %c8_i32_346, %c0_i32_347 : i32
    %c1_i32_348 = arith.constant 1 : i32
    %637 = arith.select %636, %c1_i32_348, %c8_i32_346 : i32
    %638 = vector.broadcast %637 : i32 to vector<16x16xi32>
    %639 = arith.remsi %635, %638 : vector<16x16xi32>
    %c0_i32_349 = arith.constant 0 : i32
    %640 = vector.broadcast %c0_i32_349 : i32 to vector<16x16xi32>
    %641 = arith.cmpi ne, %639, %640 : vector<16x16xi32>
    %c0_i32_350 = arith.constant 0 : i32
    %642 = vector.broadcast %c0_i32_350 : i32 to vector<16x16xi32>
    %643 = arith.cmpi slt, %639, %642 : vector<16x16xi32>
    %c0_i32_351 = arith.constant 0 : i32
    %644 = arith.cmpi slt, %637, %c0_i32_351 : i32
    %645 = vector.broadcast %644 : i1 to vector<16x16xi1>
    %646 = vector.broadcast %645 : vector<16x16xi1> to vector<16x16xi1>
    %647 = arith.xori %643, %646 : vector<16x16xi1>
    %648 = arith.andi %647, %641 : vector<16x16xi1>
    %649 = vector.broadcast %637 : i32 to vector<16x16xi32>
    %650 = arith.addi %639, %649 : vector<16x16xi32>
    %651 = arith.select %648, %650, %639 : vector<16x16xi1>, vector<16x16xi32>
    %c7_i32_352 = arith.constant 7 : i32
    %652 = vector.broadcast %c7_i32_352 : i32 to vector<16x16xi32>
    %653 = arith.cmpi slt, %651, %652 : vector<16x16xi32>
    %cst_353 = arith.constant 0.000000e+00 : f32
    %654 = vector.broadcast %cst_353 : f32 to vector<16x16xf32>
    %655 = arith.select %653, %634, %654 : vector<16x16xi1>, vector<16x16xf32>
    %c5 = arith.constant 5 : index
    %c0_354 = arith.constant 0 : index
    %c0_355 = arith.constant 0 : index
    %656 = vector.load %arg3[%c5, %c0_354, %c0_355] : memref<8x1x16xf32, #tpu.memory_space<vmem>>, vector<1x1x16xf32>
    %657 = vector.shape_cast %656 : vector<1x1x16xf32> to vector<1x16xf32>
    %cst_356 = arith.constant 0.000000e+00 : f32
    %658 = vector.broadcast %cst_356 : f32 to vector<16x16xf32>
    %659 = arith.truncf %631 : vector<16x16xf32> to vector<16x16xbf16>
    %c5_357 = arith.constant 5 : index
    %c0_358 = arith.constant 0 : index
    %c0_359 = arith.constant 0 : index
    %c0_360 = arith.constant 0 : index
    %660 = vector.load %arg2[%c5_357, %c0_358, %c0_359, %c0_360] : memref<8x3x16x16xbf16, #tpu.memory_space<vmem>>, vector<1x1x16x16xbf16>
    %661 = vector.shape_cast %660 : vector<1x1x16x16xbf16> to vector<16x16xbf16>
    %cst_361 = arith.constant dense<0.000000e+00> : vector<16x16xf32>
    %662 = tpu.matmul %659, %661, %cst_361 {dimension_numbers = #tpu.dot_dimension_numbers<[1], [0], [0], [1], [0, 0, 1, 1], [], []>} : vector<16x16xbf16>, vector<16x16xbf16>, vector<16x16xf32> -> vector<16x16xf32>
    %663 = arith.addf %658, %662 : vector<16x16xf32>
    %664 = arith.truncf %468 : vector<16x16xf32> to vector<16x16xbf16>
    %c5_362 = arith.constant 5 : index
    %c1_363 = arith.constant 1 : index
    %c0_364 = arith.constant 0 : index
    %c0_365 = arith.constant 0 : index
    %665 = vector.load %arg2[%c5_362, %c1_363, %c0_364, %c0_365] : memref<8x3x16x16xbf16, #tpu.memory_space<vmem>>, vector<1x1x16x16xbf16>
    %666 = vector.shape_cast %665 : vector<1x1x16x16xbf16> to vector<16x16xbf16>
    %cst_366 = arith.constant dense<0.000000e+00> : vector<16x16xf32>
    %667 = tpu.matmul %664, %666, %cst_366 {dimension_numbers = #tpu.dot_dimension_numbers<[1], [0], [0], [1], [0, 0, 1, 1], [], []>} : vector<16x16xbf16>, vector<16x16xbf16>, vector<16x16xf32> -> vector<16x16xf32>
    %668 = arith.addf %663, %667 : vector<16x16xf32>
    %669 = arith.truncf %655 : vector<16x16xf32> to vector<16x16xbf16>
    %c5_367 = arith.constant 5 : index
    %c2_368 = arith.constant 2 : index
    %c0_369 = arith.constant 0 : index
    %c0_370 = arith.constant 0 : index
    %670 = vector.load %arg2[%c5_367, %c2_368, %c0_369, %c0_370] : memref<8x3x16x16xbf16, #tpu.memory_space<vmem>>, vector<1x1x16x16xbf16>
    %671 = vector.shape_cast %670 : vector<1x1x16x16xbf16> to vector<16x16xbf16>
    %cst_371 = arith.constant dense<0.000000e+00> : vector<16x16xf32>
    %672 = tpu.matmul %669, %671, %cst_371 {dimension_numbers = #tpu.dot_dimension_numbers<[1], [0], [0], [1], [0, 0, 1, 1], [], []>} : vector<16x16xbf16>, vector<16x16xbf16>, vector<16x16xf32> -> vector<16x16xf32>
    %673 = arith.addf %668, %672 : vector<16x16xf32>
    %674 = vector.broadcast %657 : vector<1x16xf32> to vector<16x16xf32>
    %675 = arith.addf %673, %674 : vector<16x16xf32>
    %676 = math.tanh %675 : vector<16x16xf32>
    %cst_372 = arith.constant 0.000000e+00 : f32
    %677 = vector.broadcast %cst_372 : f32 to vector<1x16xf32>
    %678 = vector.extract_strided_slice %676 {offsets = [0, 0], sizes = [15, 16], strides = [1, 1]} : vector<16x16xf32> to vector<15x16xf32>
    %679 = tpu.concatenate %677, %678 in 0 : vector<1x16xf32>, vector<15x16xf32> -> vector<16x16xf32>
    %680 = tpu.iota {dimensions = array<i32: 0>} : vector<16x16xi32>
    %c8_i32_373 = arith.constant 8 : i32
    %c0_i32_374 = arith.constant 0 : i32
    %681 = arith.cmpi eq, %c8_i32_373, %c0_i32_374 : i32
    %c1_i32_375 = arith.constant 1 : i32
    %682 = arith.select %681, %c1_i32_375, %c8_i32_373 : i32
    %683 = vector.broadcast %682 : i32 to vector<16x16xi32>
    %684 = arith.remsi %680, %683 : vector<16x16xi32>
    %c0_i32_376 = arith.constant 0 : i32
    %685 = vector.broadcast %c0_i32_376 : i32 to vector<16x16xi32>
    %686 = arith.cmpi ne, %684, %685 : vector<16x16xi32>
    %c0_i32_377 = arith.constant 0 : i32
    %687 = vector.broadcast %c0_i32_377 : i32 to vector<16x16xi32>
    %688 = arith.cmpi slt, %684, %687 : vector<16x16xi32>
    %c0_i32_378 = arith.constant 0 : i32
    %689 = arith.cmpi slt, %682, %c0_i32_378 : i32
    %690 = vector.broadcast %689 : i1 to vector<16x16xi1>
    %691 = vector.broadcast %690 : vector<16x16xi1> to vector<16x16xi1>
    %692 = arith.xori %688, %691 : vector<16x16xi1>
    %693 = arith.andi %692, %686 : vector<16x16xi1>
    %694 = vector.broadcast %682 : i32 to vector<16x16xi32>
    %695 = arith.addi %684, %694 : vector<16x16xi32>
    %696 = arith.select %693, %695, %684 : vector<16x16xi1>, vector<16x16xi32>
    %c1_i32_379 = arith.constant 1 : i32
    %697 = vector.broadcast %c1_i32_379 : i32 to vector<16x16xi32>
    %698 = arith.cmpi sge, %696, %697 : vector<16x16xi32>
    %cst_380 = arith.constant 0.000000e+00 : f32
    %699 = vector.broadcast %cst_380 : f32 to vector<16x16xf32>
    %700 = arith.select %698, %679, %699 : vector<16x16xi1>, vector<16x16xf32>
    %cst_381 = arith.constant 0.000000e+00 : f32
    %701 = vector.broadcast %cst_381 : f32 to vector<1x16xf32>
    %702 = vector.extract_strided_slice %676 {offsets = [1, 0], sizes = [15, 16], strides = [1, 1]} : vector<16x16xf32> to vector<15x16xf32>
    %703 = tpu.concatenate %702, %701 in 0 : vector<15x16xf32>, vector<1x16xf32> -> vector<16x16xf32>
    %704 = tpu.iota {dimensions = array<i32: 0>} : vector<16x16xi32>
    %c8_i32_382 = arith.constant 8 : i32
    %c0_i32_383 = arith.constant 0 : i32
    %705 = arith.cmpi eq, %c8_i32_382, %c0_i32_383 : i32
    %c1_i32_384 = arith.constant 1 : i32
    %706 = arith.select %705, %c1_i32_384, %c8_i32_382 : i32
    %707 = vector.broadcast %706 : i32 to vector<16x16xi32>
    %708 = arith.remsi %704, %707 : vector<16x16xi32>
    %c0_i32_385 = arith.constant 0 : i32
    %709 = vector.broadcast %c0_i32_385 : i32 to vector<16x16xi32>
    %710 = arith.cmpi ne, %708, %709 : vector<16x16xi32>
    %c0_i32_386 = arith.constant 0 : i32
    %711 = vector.broadcast %c0_i32_386 : i32 to vector<16x16xi32>
    %712 = arith.cmpi slt, %708, %711 : vector<16x16xi32>
    %c0_i32_387 = arith.constant 0 : i32
    %713 = arith.cmpi slt, %706, %c0_i32_387 : i32
    %714 = vector.broadcast %713 : i1 to vector<16x16xi1>
    %715 = vector.broadcast %714 : vector<16x16xi1> to vector<16x16xi1>
    %716 = arith.xori %712, %715 : vector<16x16xi1>
    %717 = arith.andi %716, %710 : vector<16x16xi1>
    %718 = vector.broadcast %706 : i32 to vector<16x16xi32>
    %719 = arith.addi %708, %718 : vector<16x16xi32>
    %720 = arith.select %717, %719, %708 : vector<16x16xi1>, vector<16x16xi32>
    %c7_i32_388 = arith.constant 7 : i32
    %721 = vector.broadcast %c7_i32_388 : i32 to vector<16x16xi32>
    %722 = arith.cmpi slt, %720, %721 : vector<16x16xi32>
    %cst_389 = arith.constant 0.000000e+00 : f32
    %723 = vector.broadcast %cst_389 : f32 to vector<16x16xf32>
    %724 = arith.select %722, %703, %723 : vector<16x16xi1>, vector<16x16xf32>
    %c5_390 = arith.constant 5 : index
    %c0_391 = arith.constant 0 : index
    %c0_392 = arith.constant 0 : index
    %725 = vector.load %arg5[%c5_390, %c0_391, %c0_392] : memref<8x1x16xf32, #tpu.memory_space<vmem>>, vector<1x1x16xf32>
    %726 = vector.shape_cast %725 : vector<1x1x16xf32> to vector<1x16xf32>
    %cst_393 = arith.constant 0.000000e+00 : f32
    %727 = vector.broadcast %cst_393 : f32 to vector<16x16xf32>
    %728 = arith.truncf %700 : vector<16x16xf32> to vector<16x16xbf16>
    %c5_394 = arith.constant 5 : index
    %c0_395 = arith.constant 0 : index
    %c0_396 = arith.constant 0 : index
    %c0_397 = arith.constant 0 : index
    %729 = vector.load %arg4[%c5_394, %c0_395, %c0_396, %c0_397] : memref<8x3x16x16xbf16, #tpu.memory_space<vmem>>, vector<1x1x16x16xbf16>
    %730 = vector.shape_cast %729 : vector<1x1x16x16xbf16> to vector<16x16xbf16>
    %cst_398 = arith.constant dense<0.000000e+00> : vector<16x16xf32>
    %731 = tpu.matmul %728, %730, %cst_398 {dimension_numbers = #tpu.dot_dimension_numbers<[1], [0], [0], [1], [0, 0, 1, 1], [], []>} : vector<16x16xbf16>, vector<16x16xbf16>, vector<16x16xf32> -> vector<16x16xf32>
    %732 = arith.addf %727, %731 : vector<16x16xf32>
    %733 = arith.truncf %676 : vector<16x16xf32> to vector<16x16xbf16>
    %c5_399 = arith.constant 5 : index
    %c1_400 = arith.constant 1 : index
    %c0_401 = arith.constant 0 : index
    %c0_402 = arith.constant 0 : index
    %734 = vector.load %arg4[%c5_399, %c1_400, %c0_401, %c0_402] : memref<8x3x16x16xbf16, #tpu.memory_space<vmem>>, vector<1x1x16x16xbf16>
    %735 = vector.shape_cast %734 : vector<1x1x16x16xbf16> to vector<16x16xbf16>
    %cst_403 = arith.constant dense<0.000000e+00> : vector<16x16xf32>
    %736 = tpu.matmul %733, %735, %cst_403 {dimension_numbers = #tpu.dot_dimension_numbers<[1], [0], [0], [1], [0, 0, 1, 1], [], []>} : vector<16x16xbf16>, vector<16x16xbf16>, vector<16x16xf32> -> vector<16x16xf32>
    %737 = arith.addf %732, %736 : vector<16x16xf32>
    %738 = arith.truncf %724 : vector<16x16xf32> to vector<16x16xbf16>
    %c5_404 = arith.constant 5 : index
    %c2_405 = arith.constant 2 : index
    %c0_406 = arith.constant 0 : index
    %c0_407 = arith.constant 0 : index
    %739 = vector.load %arg4[%c5_404, %c2_405, %c0_406, %c0_407] : memref<8x3x16x16xbf16, #tpu.memory_space<vmem>>, vector<1x1x16x16xbf16>
    %740 = vector.shape_cast %739 : vector<1x1x16x16xbf16> to vector<16x16xbf16>
    %cst_408 = arith.constant dense<0.000000e+00> : vector<16x16xf32>
    %741 = tpu.matmul %738, %740, %cst_408 {dimension_numbers = #tpu.dot_dimension_numbers<[1], [0], [0], [1], [0, 0, 1, 1], [], []>} : vector<16x16xbf16>, vector<16x16xbf16>, vector<16x16xf32> -> vector<16x16xf32>
    %742 = arith.addf %737, %741 : vector<16x16xf32>
    %743 = vector.broadcast %726 : vector<1x16xf32> to vector<16x16xf32>
    %744 = arith.addf %742, %743 : vector<16x16xf32>
    %745 = math.tanh %744 : vector<16x16xf32>
    %746 = arith.addf %745, %468 : vector<16x16xf32>
    %cst_409 = arith.constant 0.000000e+00 : f32
    %747 = vector.broadcast %cst_409 : f32 to vector<1x16xf32>
    %748 = vector.extract_strided_slice %746 {offsets = [0, 0], sizes = [15, 16], strides = [1, 1]} : vector<16x16xf32> to vector<15x16xf32>
    %749 = tpu.concatenate %747, %748 in 0 : vector<1x16xf32>, vector<15x16xf32> -> vector<16x16xf32>
    %750 = tpu.iota {dimensions = array<i32: 0>} : vector<16x16xi32>
    %c8_i32_410 = arith.constant 8 : i32
    %c0_i32_411 = arith.constant 0 : i32
    %751 = arith.cmpi eq, %c8_i32_410, %c0_i32_411 : i32
    %c1_i32_412 = arith.constant 1 : i32
    %752 = arith.select %751, %c1_i32_412, %c8_i32_410 : i32
    %753 = vector.broadcast %752 : i32 to vector<16x16xi32>
    %754 = arith.remsi %750, %753 : vector<16x16xi32>
    %c0_i32_413 = arith.constant 0 : i32
    %755 = vector.broadcast %c0_i32_413 : i32 to vector<16x16xi32>
    %756 = arith.cmpi ne, %754, %755 : vector<16x16xi32>
    %c0_i32_414 = arith.constant 0 : i32
    %757 = vector.broadcast %c0_i32_414 : i32 to vector<16x16xi32>
    %758 = arith.cmpi slt, %754, %757 : vector<16x16xi32>
    %c0_i32_415 = arith.constant 0 : i32
    %759 = arith.cmpi slt, %752, %c0_i32_415 : i32
    %760 = vector.broadcast %759 : i1 to vector<16x16xi1>
    %761 = vector.broadcast %760 : vector<16x16xi1> to vector<16x16xi1>
    %762 = arith.xori %758, %761 : vector<16x16xi1>
    %763 = arith.andi %762, %756 : vector<16x16xi1>
    %764 = vector.broadcast %752 : i32 to vector<16x16xi32>
    %765 = arith.addi %754, %764 : vector<16x16xi32>
    %766 = arith.select %763, %765, %754 : vector<16x16xi1>, vector<16x16xi32>
    %c1_i32_416 = arith.constant 1 : i32
    %767 = vector.broadcast %c1_i32_416 : i32 to vector<16x16xi32>
    %768 = arith.cmpi sge, %766, %767 : vector<16x16xi32>
    %cst_417 = arith.constant 0.000000e+00 : f32
    %769 = vector.broadcast %cst_417 : f32 to vector<16x16xf32>
    %770 = arith.select %768, %749, %769 : vector<16x16xi1>, vector<16x16xf32>
    %cst_418 = arith.constant 0.000000e+00 : f32
    %771 = vector.broadcast %cst_418 : f32 to vector<1x16xf32>
    %772 = vector.extract_strided_slice %746 {offsets = [1, 0], sizes = [15, 16], strides = [1, 1]} : vector<16x16xf32> to vector<15x16xf32>
    %773 = tpu.concatenate %772, %771 in 0 : vector<15x16xf32>, vector<1x16xf32> -> vector<16x16xf32>
    %774 = tpu.iota {dimensions = array<i32: 0>} : vector<16x16xi32>
    %c8_i32_419 = arith.constant 8 : i32
    %c0_i32_420 = arith.constant 0 : i32
    %775 = arith.cmpi eq, %c8_i32_419, %c0_i32_420 : i32
    %c1_i32_421 = arith.constant 1 : i32
    %776 = arith.select %775, %c1_i32_421, %c8_i32_419 : i32
    %777 = vector.broadcast %776 : i32 to vector<16x16xi32>
    %778 = arith.remsi %774, %777 : vector<16x16xi32>
    %c0_i32_422 = arith.constant 0 : i32
    %779 = vector.broadcast %c0_i32_422 : i32 to vector<16x16xi32>
    %780 = arith.cmpi ne, %778, %779 : vector<16x16xi32>
    %c0_i32_423 = arith.constant 0 : i32
    %781 = vector.broadcast %c0_i32_423 : i32 to vector<16x16xi32>
    %782 = arith.cmpi slt, %778, %781 : vector<16x16xi32>
    %c0_i32_424 = arith.constant 0 : i32
    %783 = arith.cmpi slt, %776, %c0_i32_424 : i32
    %784 = vector.broadcast %783 : i1 to vector<16x16xi1>
    %785 = vector.broadcast %784 : vector<16x16xi1> to vector<16x16xi1>
    %786 = arith.xori %782, %785 : vector<16x16xi1>
    %787 = arith.andi %786, %780 : vector<16x16xi1>
    %788 = vector.broadcast %776 : i32 to vector<16x16xi32>
    %789 = arith.addi %778, %788 : vector<16x16xi32>
    %790 = arith.select %787, %789, %778 : vector<16x16xi1>, vector<16x16xi32>
    %c7_i32_425 = arith.constant 7 : i32
    %791 = vector.broadcast %c7_i32_425 : i32 to vector<16x16xi32>
    %792 = arith.cmpi slt, %790, %791 : vector<16x16xi32>
    %cst_426 = arith.constant 0.000000e+00 : f32
    %793 = vector.broadcast %cst_426 : f32 to vector<16x16xf32>
    %794 = arith.select %792, %773, %793 : vector<16x16xi1>, vector<16x16xf32>
    %c6 = arith.constant 6 : index
    %c0_427 = arith.constant 0 : index
    %c0_428 = arith.constant 0 : index
    %795 = vector.load %arg3[%c6, %c0_427, %c0_428] : memref<8x1x16xf32, #tpu.memory_space<vmem>>, vector<1x1x16xf32>
    %796 = vector.shape_cast %795 : vector<1x1x16xf32> to vector<1x16xf32>
    %cst_429 = arith.constant 0.000000e+00 : f32
    %797 = vector.broadcast %cst_429 : f32 to vector<16x16xf32>
    %798 = arith.truncf %770 : vector<16x16xf32> to vector<16x16xbf16>
    %c6_430 = arith.constant 6 : index
    %c0_431 = arith.constant 0 : index
    %c0_432 = arith.constant 0 : index
    %c0_433 = arith.constant 0 : index
    %799 = vector.load %arg2[%c6_430, %c0_431, %c0_432, %c0_433] : memref<8x3x16x16xbf16, #tpu.memory_space<vmem>>, vector<1x1x16x16xbf16>
    %800 = vector.shape_cast %799 : vector<1x1x16x16xbf16> to vector<16x16xbf16>
    %cst_434 = arith.constant dense<0.000000e+00> : vector<16x16xf32>
    %801 = tpu.matmul %798, %800, %cst_434 {dimension_numbers = #tpu.dot_dimension_numbers<[1], [0], [0], [1], [0, 0, 1, 1], [], []>} : vector<16x16xbf16>, vector<16x16xbf16>, vector<16x16xf32> -> vector<16x16xf32>
    %802 = arith.addf %797, %801 : vector<16x16xf32>
    %803 = arith.truncf %746 : vector<16x16xf32> to vector<16x16xbf16>
    %c6_435 = arith.constant 6 : index
    %c1_436 = arith.constant 1 : index
    %c0_437 = arith.constant 0 : index
    %c0_438 = arith.constant 0 : index
    %804 = vector.load %arg2[%c6_435, %c1_436, %c0_437, %c0_438] : memref<8x3x16x16xbf16, #tpu.memory_space<vmem>>, vector<1x1x16x16xbf16>
    %805 = vector.shape_cast %804 : vector<1x1x16x16xbf16> to vector<16x16xbf16>
    %cst_439 = arith.constant dense<0.000000e+00> : vector<16x16xf32>
    %806 = tpu.matmul %803, %805, %cst_439 {dimension_numbers = #tpu.dot_dimension_numbers<[1], [0], [0], [1], [0, 0, 1, 1], [], []>} : vector<16x16xbf16>, vector<16x16xbf16>, vector<16x16xf32> -> vector<16x16xf32>
    %807 = arith.addf %802, %806 : vector<16x16xf32>
    %808 = arith.truncf %794 : vector<16x16xf32> to vector<16x16xbf16>
    %c6_440 = arith.constant 6 : index
    %c2_441 = arith.constant 2 : index
    %c0_442 = arith.constant 0 : index
    %c0_443 = arith.constant 0 : index
    %809 = vector.load %arg2[%c6_440, %c2_441, %c0_442, %c0_443] : memref<8x3x16x16xbf16, #tpu.memory_space<vmem>>, vector<1x1x16x16xbf16>
    %810 = vector.shape_cast %809 : vector<1x1x16x16xbf16> to vector<16x16xbf16>
    %cst_444 = arith.constant dense<0.000000e+00> : vector<16x16xf32>
    %811 = tpu.matmul %808, %810, %cst_444 {dimension_numbers = #tpu.dot_dimension_numbers<[1], [0], [0], [1], [0, 0, 1, 1], [], []>} : vector<16x16xbf16>, vector<16x16xbf16>, vector<16x16xf32> -> vector<16x16xf32>
    %812 = arith.addf %807, %811 : vector<16x16xf32>
    %813 = vector.broadcast %796 : vector<1x16xf32> to vector<16x16xf32>
    %814 = arith.addf %812, %813 : vector<16x16xf32>
    %815 = math.tanh %814 : vector<16x16xf32>
    %cst_445 = arith.constant 0.000000e+00 : f32
    %816 = vector.broadcast %cst_445 : f32 to vector<1x16xf32>
    %817 = vector.extract_strided_slice %815 {offsets = [0, 0], sizes = [15, 16], strides = [1, 1]} : vector<16x16xf32> to vector<15x16xf32>
    %818 = tpu.concatenate %816, %817 in 0 : vector<1x16xf32>, vector<15x16xf32> -> vector<16x16xf32>
    %819 = tpu.iota {dimensions = array<i32: 0>} : vector<16x16xi32>
    %c8_i32_446 = arith.constant 8 : i32
    %c0_i32_447 = arith.constant 0 : i32
    %820 = arith.cmpi eq, %c8_i32_446, %c0_i32_447 : i32
    %c1_i32_448 = arith.constant 1 : i32
    %821 = arith.select %820, %c1_i32_448, %c8_i32_446 : i32
    %822 = vector.broadcast %821 : i32 to vector<16x16xi32>
    %823 = arith.remsi %819, %822 : vector<16x16xi32>
    %c0_i32_449 = arith.constant 0 : i32
    %824 = vector.broadcast %c0_i32_449 : i32 to vector<16x16xi32>
    %825 = arith.cmpi ne, %823, %824 : vector<16x16xi32>
    %c0_i32_450 = arith.constant 0 : i32
    %826 = vector.broadcast %c0_i32_450 : i32 to vector<16x16xi32>
    %827 = arith.cmpi slt, %823, %826 : vector<16x16xi32>
    %c0_i32_451 = arith.constant 0 : i32
    %828 = arith.cmpi slt, %821, %c0_i32_451 : i32
    %829 = vector.broadcast %828 : i1 to vector<16x16xi1>
    %830 = vector.broadcast %829 : vector<16x16xi1> to vector<16x16xi1>
    %831 = arith.xori %827, %830 : vector<16x16xi1>
    %832 = arith.andi %831, %825 : vector<16x16xi1>
    %833 = vector.broadcast %821 : i32 to vector<16x16xi32>
    %834 = arith.addi %823, %833 : vector<16x16xi32>
    %835 = arith.select %832, %834, %823 : vector<16x16xi1>, vector<16x16xi32>
    %c1_i32_452 = arith.constant 1 : i32
    %836 = vector.broadcast %c1_i32_452 : i32 to vector<16x16xi32>
    %837 = arith.cmpi sge, %835, %836 : vector<16x16xi32>
    %cst_453 = arith.constant 0.000000e+00 : f32
    %838 = vector.broadcast %cst_453 : f32 to vector<16x16xf32>
    %839 = arith.select %837, %818, %838 : vector<16x16xi1>, vector<16x16xf32>
    %cst_454 = arith.constant 0.000000e+00 : f32
    %840 = vector.broadcast %cst_454 : f32 to vector<1x16xf32>
    %841 = vector.extract_strided_slice %815 {offsets = [1, 0], sizes = [15, 16], strides = [1, 1]} : vector<16x16xf32> to vector<15x16xf32>
    %842 = tpu.concatenate %841, %840 in 0 : vector<15x16xf32>, vector<1x16xf32> -> vector<16x16xf32>
    %843 = tpu.iota {dimensions = array<i32: 0>} : vector<16x16xi32>
    %c8_i32_455 = arith.constant 8 : i32
    %c0_i32_456 = arith.constant 0 : i32
    %844 = arith.cmpi eq, %c8_i32_455, %c0_i32_456 : i32
    %c1_i32_457 = arith.constant 1 : i32
    %845 = arith.select %844, %c1_i32_457, %c8_i32_455 : i32
    %846 = vector.broadcast %845 : i32 to vector<16x16xi32>
    %847 = arith.remsi %843, %846 : vector<16x16xi32>
    %c0_i32_458 = arith.constant 0 : i32
    %848 = vector.broadcast %c0_i32_458 : i32 to vector<16x16xi32>
    %849 = arith.cmpi ne, %847, %848 : vector<16x16xi32>
    %c0_i32_459 = arith.constant 0 : i32
    %850 = vector.broadcast %c0_i32_459 : i32 to vector<16x16xi32>
    %851 = arith.cmpi slt, %847, %850 : vector<16x16xi32>
    %c0_i32_460 = arith.constant 0 : i32
    %852 = arith.cmpi slt, %845, %c0_i32_460 : i32
    %853 = vector.broadcast %852 : i1 to vector<16x16xi1>
    %854 = vector.broadcast %853 : vector<16x16xi1> to vector<16x16xi1>
    %855 = arith.xori %851, %854 : vector<16x16xi1>
    %856 = arith.andi %855, %849 : vector<16x16xi1>
    %857 = vector.broadcast %845 : i32 to vector<16x16xi32>
    %858 = arith.addi %847, %857 : vector<16x16xi32>
    %859 = arith.select %856, %858, %847 : vector<16x16xi1>, vector<16x16xi32>
    %c7_i32_461 = arith.constant 7 : i32
    %860 = vector.broadcast %c7_i32_461 : i32 to vector<16x16xi32>
    %861 = arith.cmpi slt, %859, %860 : vector<16x16xi32>
    %cst_462 = arith.constant 0.000000e+00 : f32
    %862 = vector.broadcast %cst_462 : f32 to vector<16x16xf32>
    %863 = arith.select %861, %842, %862 : vector<16x16xi1>, vector<16x16xf32>
    %c6_463 = arith.constant 6 : index
    %c0_464 = arith.constant 0 : index
    %c0_465 = arith.constant 0 : index
    %864 = vector.load %arg5[%c6_463, %c0_464, %c0_465] : memref<8x1x16xf32, #tpu.memory_space<vmem>>, vector<1x1x16xf32>
    %865 = vector.shape_cast %864 : vector<1x1x16xf32> to vector<1x16xf32>
    %cst_466 = arith.constant 0.000000e+00 : f32
    %866 = vector.broadcast %cst_466 : f32 to vector<16x16xf32>
    %867 = arith.truncf %839 : vector<16x16xf32> to vector<16x16xbf16>
    %c6_467 = arith.constant 6 : index
    %c0_468 = arith.constant 0 : index
    %c0_469 = arith.constant 0 : index
    %c0_470 = arith.constant 0 : index
    %868 = vector.load %arg4[%c6_467, %c0_468, %c0_469, %c0_470] : memref<8x3x16x16xbf16, #tpu.memory_space<vmem>>, vector<1x1x16x16xbf16>
    %869 = vector.shape_cast %868 : vector<1x1x16x16xbf16> to vector<16x16xbf16>
    %cst_471 = arith.constant dense<0.000000e+00> : vector<16x16xf32>
    %870 = tpu.matmul %867, %869, %cst_471 {dimension_numbers = #tpu.dot_dimension_numbers<[1], [0], [0], [1], [0, 0, 1, 1], [], []>} : vector<16x16xbf16>, vector<16x16xbf16>, vector<16x16xf32> -> vector<16x16xf32>
    %871 = arith.addf %866, %870 : vector<16x16xf32>
    %872 = arith.truncf %815 : vector<16x16xf32> to vector<16x16xbf16>
    %c6_472 = arith.constant 6 : index
    %c1_473 = arith.constant 1 : index
    %c0_474 = arith.constant 0 : index
    %c0_475 = arith.constant 0 : index
    %873 = vector.load %arg4[%c6_472, %c1_473, %c0_474, %c0_475] : memref<8x3x16x16xbf16, #tpu.memory_space<vmem>>, vector<1x1x16x16xbf16>
    %874 = vector.shape_cast %873 : vector<1x1x16x16xbf16> to vector<16x16xbf16>
    %cst_476 = arith.constant dense<0.000000e+00> : vector<16x16xf32>
    %875 = tpu.matmul %872, %874, %cst_476 {dimension_numbers = #tpu.dot_dimension_numbers<[1], [0], [0], [1], [0, 0, 1, 1], [], []>} : vector<16x16xbf16>, vector<16x16xbf16>, vector<16x16xf32> -> vector<16x16xf32>
    %876 = arith.addf %871, %875 : vector<16x16xf32>
    %877 = arith.truncf %863 : vector<16x16xf32> to vector<16x16xbf16>
    %c6_477 = arith.constant 6 : index
    %c2_478 = arith.constant 2 : index
    %c0_479 = arith.constant 0 : index
    %c0_480 = arith.constant 0 : index
    %878 = vector.load %arg4[%c6_477, %c2_478, %c0_479, %c0_480] : memref<8x3x16x16xbf16, #tpu.memory_space<vmem>>, vector<1x1x16x16xbf16>
    %879 = vector.shape_cast %878 : vector<1x1x16x16xbf16> to vector<16x16xbf16>
    %cst_481 = arith.constant dense<0.000000e+00> : vector<16x16xf32>
    %880 = tpu.matmul %877, %879, %cst_481 {dimension_numbers = #tpu.dot_dimension_numbers<[1], [0], [0], [1], [0, 0, 1, 1], [], []>} : vector<16x16xbf16>, vector<16x16xbf16>, vector<16x16xf32> -> vector<16x16xf32>
    %881 = arith.addf %876, %880 : vector<16x16xf32>
    %882 = vector.broadcast %865 : vector<1x16xf32> to vector<16x16xf32>
    %883 = arith.addf %881, %882 : vector<16x16xf32>
    %884 = math.tanh %883 : vector<16x16xf32>
    %885 = arith.addf %884, %746 : vector<16x16xf32>
    %cst_482 = arith.constant 0.000000e+00 : f32
    %886 = vector.broadcast %cst_482 : f32 to vector<1x16xf32>
    %887 = vector.extract_strided_slice %885 {offsets = [0, 0], sizes = [15, 16], strides = [1, 1]} : vector<16x16xf32> to vector<15x16xf32>
    %888 = tpu.concatenate %886, %887 in 0 : vector<1x16xf32>, vector<15x16xf32> -> vector<16x16xf32>
    %889 = tpu.iota {dimensions = array<i32: 0>} : vector<16x16xi32>
    %c8_i32_483 = arith.constant 8 : i32
    %c0_i32_484 = arith.constant 0 : i32
    %890 = arith.cmpi eq, %c8_i32_483, %c0_i32_484 : i32
    %c1_i32_485 = arith.constant 1 : i32
    %891 = arith.select %890, %c1_i32_485, %c8_i32_483 : i32
    %892 = vector.broadcast %891 : i32 to vector<16x16xi32>
    %893 = arith.remsi %889, %892 : vector<16x16xi32>
    %c0_i32_486 = arith.constant 0 : i32
    %894 = vector.broadcast %c0_i32_486 : i32 to vector<16x16xi32>
    %895 = arith.cmpi ne, %893, %894 : vector<16x16xi32>
    %c0_i32_487 = arith.constant 0 : i32
    %896 = vector.broadcast %c0_i32_487 : i32 to vector<16x16xi32>
    %897 = arith.cmpi slt, %893, %896 : vector<16x16xi32>
    %c0_i32_488 = arith.constant 0 : i32
    %898 = arith.cmpi slt, %891, %c0_i32_488 : i32
    %899 = vector.broadcast %898 : i1 to vector<16x16xi1>
    %900 = vector.broadcast %899 : vector<16x16xi1> to vector<16x16xi1>
    %901 = arith.xori %897, %900 : vector<16x16xi1>
    %902 = arith.andi %901, %895 : vector<16x16xi1>
    %903 = vector.broadcast %891 : i32 to vector<16x16xi32>
    %904 = arith.addi %893, %903 : vector<16x16xi32>
    %905 = arith.select %902, %904, %893 : vector<16x16xi1>, vector<16x16xi32>
    %c1_i32_489 = arith.constant 1 : i32
    %906 = vector.broadcast %c1_i32_489 : i32 to vector<16x16xi32>
    %907 = arith.cmpi sge, %905, %906 : vector<16x16xi32>
    %cst_490 = arith.constant 0.000000e+00 : f32
    %908 = vector.broadcast %cst_490 : f32 to vector<16x16xf32>
    %909 = arith.select %907, %888, %908 : vector<16x16xi1>, vector<16x16xf32>
    %cst_491 = arith.constant 0.000000e+00 : f32
    %910 = vector.broadcast %cst_491 : f32 to vector<1x16xf32>
    %911 = vector.extract_strided_slice %885 {offsets = [1, 0], sizes = [15, 16], strides = [1, 1]} : vector<16x16xf32> to vector<15x16xf32>
    %912 = tpu.concatenate %911, %910 in 0 : vector<15x16xf32>, vector<1x16xf32> -> vector<16x16xf32>
    %913 = tpu.iota {dimensions = array<i32: 0>} : vector<16x16xi32>
    %c8_i32_492 = arith.constant 8 : i32
    %c0_i32_493 = arith.constant 0 : i32
    %914 = arith.cmpi eq, %c8_i32_492, %c0_i32_493 : i32
    %c1_i32_494 = arith.constant 1 : i32
    %915 = arith.select %914, %c1_i32_494, %c8_i32_492 : i32
    %916 = vector.broadcast %915 : i32 to vector<16x16xi32>
    %917 = arith.remsi %913, %916 : vector<16x16xi32>
    %c0_i32_495 = arith.constant 0 : i32
    %918 = vector.broadcast %c0_i32_495 : i32 to vector<16x16xi32>
    %919 = arith.cmpi ne, %917, %918 : vector<16x16xi32>
    %c0_i32_496 = arith.constant 0 : i32
    %920 = vector.broadcast %c0_i32_496 : i32 to vector<16x16xi32>
    %921 = arith.cmpi slt, %917, %920 : vector<16x16xi32>
    %c0_i32_497 = arith.constant 0 : i32
    %922 = arith.cmpi slt, %915, %c0_i32_497 : i32
    %923 = vector.broadcast %922 : i1 to vector<16x16xi1>
    %924 = vector.broadcast %923 : vector<16x16xi1> to vector<16x16xi1>
    %925 = arith.xori %921, %924 : vector<16x16xi1>
    %926 = arith.andi %925, %919 : vector<16x16xi1>
    %927 = vector.broadcast %915 : i32 to vector<16x16xi32>
    %928 = arith.addi %917, %927 : vector<16x16xi32>
    %929 = arith.select %926, %928, %917 : vector<16x16xi1>, vector<16x16xi32>
    %c7_i32_498 = arith.constant 7 : i32
    %930 = vector.broadcast %c7_i32_498 : i32 to vector<16x16xi32>
    %931 = arith.cmpi slt, %929, %930 : vector<16x16xi32>
    %cst_499 = arith.constant 0.000000e+00 : f32
    %932 = vector.broadcast %cst_499 : f32 to vector<16x16xf32>
    %933 = arith.select %931, %912, %932 : vector<16x16xi1>, vector<16x16xf32>
    %c7 = arith.constant 7 : index
    %c0_500 = arith.constant 0 : index
    %c0_501 = arith.constant 0 : index
    %934 = vector.load %arg3[%c7, %c0_500, %c0_501] : memref<8x1x16xf32, #tpu.memory_space<vmem>>, vector<1x1x16xf32>
    %935 = vector.shape_cast %934 : vector<1x1x16xf32> to vector<1x16xf32>
    %cst_502 = arith.constant 0.000000e+00 : f32
    %936 = vector.broadcast %cst_502 : f32 to vector<16x16xf32>
    %937 = arith.truncf %909 : vector<16x16xf32> to vector<16x16xbf16>
    %c7_503 = arith.constant 7 : index
    %c0_504 = arith.constant 0 : index
    %c0_505 = arith.constant 0 : index
    %c0_506 = arith.constant 0 : index
    %938 = vector.load %arg2[%c7_503, %c0_504, %c0_505, %c0_506] : memref<8x3x16x16xbf16, #tpu.memory_space<vmem>>, vector<1x1x16x16xbf16>
    %939 = vector.shape_cast %938 : vector<1x1x16x16xbf16> to vector<16x16xbf16>
    %cst_507 = arith.constant dense<0.000000e+00> : vector<16x16xf32>
    %940 = tpu.matmul %937, %939, %cst_507 {dimension_numbers = #tpu.dot_dimension_numbers<[1], [0], [0], [1], [0, 0, 1, 1], [], []>} : vector<16x16xbf16>, vector<16x16xbf16>, vector<16x16xf32> -> vector<16x16xf32>
    %941 = arith.addf %936, %940 : vector<16x16xf32>
    %942 = arith.truncf %885 : vector<16x16xf32> to vector<16x16xbf16>
    %c7_508 = arith.constant 7 : index
    %c1_509 = arith.constant 1 : index
    %c0_510 = arith.constant 0 : index
    %c0_511 = arith.constant 0 : index
    %943 = vector.load %arg2[%c7_508, %c1_509, %c0_510, %c0_511] : memref<8x3x16x16xbf16, #tpu.memory_space<vmem>>, vector<1x1x16x16xbf16>
    %944 = vector.shape_cast %943 : vector<1x1x16x16xbf16> to vector<16x16xbf16>
    %cst_512 = arith.constant dense<0.000000e+00> : vector<16x16xf32>
    %945 = tpu.matmul %942, %944, %cst_512 {dimension_numbers = #tpu.dot_dimension_numbers<[1], [0], [0], [1], [0, 0, 1, 1], [], []>} : vector<16x16xbf16>, vector<16x16xbf16>, vector<16x16xf32> -> vector<16x16xf32>
    %946 = arith.addf %941, %945 : vector<16x16xf32>
    %947 = arith.truncf %933 : vector<16x16xf32> to vector<16x16xbf16>
    %c7_513 = arith.constant 7 : index
    %c2_514 = arith.constant 2 : index
    %c0_515 = arith.constant 0 : index
    %c0_516 = arith.constant 0 : index
    %948 = vector.load %arg2[%c7_513, %c2_514, %c0_515, %c0_516] : memref<8x3x16x16xbf16, #tpu.memory_space<vmem>>, vector<1x1x16x16xbf16>
    %949 = vector.shape_cast %948 : vector<1x1x16x16xbf16> to vector<16x16xbf16>
    %cst_517 = arith.constant dense<0.000000e+00> : vector<16x16xf32>
    %950 = tpu.matmul %947, %949, %cst_517 {dimension_numbers = #tpu.dot_dimension_numbers<[1], [0], [0], [1], [0, 0, 1, 1], [], []>} : vector<16x16xbf16>, vector<16x16xbf16>, vector<16x16xf32> -> vector<16x16xf32>
    %951 = arith.addf %946, %950 : vector<16x16xf32>
    %952 = vector.broadcast %935 : vector<1x16xf32> to vector<16x16xf32>
    %953 = arith.addf %951, %952 : vector<16x16xf32>
    %954 = math.tanh %953 : vector<16x16xf32>
    %cst_518 = arith.constant 0.000000e+00 : f32
    %955 = vector.broadcast %cst_518 : f32 to vector<1x16xf32>
    %956 = vector.extract_strided_slice %954 {offsets = [0, 0], sizes = [15, 16], strides = [1, 1]} : vector<16x16xf32> to vector<15x16xf32>
    %957 = tpu.concatenate %955, %956 in 0 : vector<1x16xf32>, vector<15x16xf32> -> vector<16x16xf32>
    %958 = tpu.iota {dimensions = array<i32: 0>} : vector<16x16xi32>
    %c8_i32_519 = arith.constant 8 : i32
    %c0_i32_520 = arith.constant 0 : i32
    %959 = arith.cmpi eq, %c8_i32_519, %c0_i32_520 : i32
    %c1_i32_521 = arith.constant 1 : i32
    %960 = arith.select %959, %c1_i32_521, %c8_i32_519 : i32
    %961 = vector.broadcast %960 : i32 to vector<16x16xi32>
    %962 = arith.remsi %958, %961 : vector<16x16xi32>
    %c0_i32_522 = arith.constant 0 : i32
    %963 = vector.broadcast %c0_i32_522 : i32 to vector<16x16xi32>
    %964 = arith.cmpi ne, %962, %963 : vector<16x16xi32>
    %c0_i32_523 = arith.constant 0 : i32
    %965 = vector.broadcast %c0_i32_523 : i32 to vector<16x16xi32>
    %966 = arith.cmpi slt, %962, %965 : vector<16x16xi32>
    %c0_i32_524 = arith.constant 0 : i32
    %967 = arith.cmpi slt, %960, %c0_i32_524 : i32
    %968 = vector.broadcast %967 : i1 to vector<16x16xi1>
    %969 = vector.broadcast %968 : vector<16x16xi1> to vector<16x16xi1>
    %970 = arith.xori %966, %969 : vector<16x16xi1>
    %971 = arith.andi %970, %964 : vector<16x16xi1>
    %972 = vector.broadcast %960 : i32 to vector<16x16xi32>
    %973 = arith.addi %962, %972 : vector<16x16xi32>
    %974 = arith.select %971, %973, %962 : vector<16x16xi1>, vector<16x16xi32>
    %c1_i32_525 = arith.constant 1 : i32
    %975 = vector.broadcast %c1_i32_525 : i32 to vector<16x16xi32>
    %976 = arith.cmpi sge, %974, %975 : vector<16x16xi32>
    %cst_526 = arith.constant 0.000000e+00 : f32
    %977 = vector.broadcast %cst_526 : f32 to vector<16x16xf32>
    %978 = arith.select %976, %957, %977 : vector<16x16xi1>, vector<16x16xf32>
    %cst_527 = arith.constant 0.000000e+00 : f32
    %979 = vector.broadcast %cst_527 : f32 to vector<1x16xf32>
    %980 = vector.extract_strided_slice %954 {offsets = [1, 0], sizes = [15, 16], strides = [1, 1]} : vector<16x16xf32> to vector<15x16xf32>
    %981 = tpu.concatenate %980, %979 in 0 : vector<15x16xf32>, vector<1x16xf32> -> vector<16x16xf32>
    %982 = tpu.iota {dimensions = array<i32: 0>} : vector<16x16xi32>
    %c8_i32_528 = arith.constant 8 : i32
    %c0_i32_529 = arith.constant 0 : i32
    %983 = arith.cmpi eq, %c8_i32_528, %c0_i32_529 : i32
    %c1_i32_530 = arith.constant 1 : i32
    %984 = arith.select %983, %c1_i32_530, %c8_i32_528 : i32
    %985 = vector.broadcast %984 : i32 to vector<16x16xi32>
    %986 = arith.remsi %982, %985 : vector<16x16xi32>
    %c0_i32_531 = arith.constant 0 : i32
    %987 = vector.broadcast %c0_i32_531 : i32 to vector<16x16xi32>
    %988 = arith.cmpi ne, %986, %987 : vector<16x16xi32>
    %c0_i32_532 = arith.constant 0 : i32
    %989 = vector.broadcast %c0_i32_532 : i32 to vector<16x16xi32>
    %990 = arith.cmpi slt, %986, %989 : vector<16x16xi32>
    %c0_i32_533 = arith.constant 0 : i32
    %991 = arith.cmpi slt, %984, %c0_i32_533 : i32
    %992 = vector.broadcast %991 : i1 to vector<16x16xi1>
    %993 = vector.broadcast %992 : vector<16x16xi1> to vector<16x16xi1>
    %994 = arith.xori %990, %993 : vector<16x16xi1>
    %995 = arith.andi %994, %988 : vector<16x16xi1>
    %996 = vector.broadcast %984 : i32 to vector<16x16xi32>
    %997 = arith.addi %986, %996 : vector<16x16xi32>
    %998 = arith.select %995, %997, %986 : vector<16x16xi1>, vector<16x16xi32>
    %c7_i32_534 = arith.constant 7 : i32
    %999 = vector.broadcast %c7_i32_534 : i32 to vector<16x16xi32>
    %1000 = arith.cmpi slt, %998, %999 : vector<16x16xi32>
    %cst_535 = arith.constant 0.000000e+00 : f32
    %1001 = vector.broadcast %cst_535 : f32 to vector<16x16xf32>
    %1002 = arith.select %1000, %981, %1001 : vector<16x16xi1>, vector<16x16xf32>
    %c7_536 = arith.constant 7 : index
    %c0_537 = arith.constant 0 : index
    %c0_538 = arith.constant 0 : index
    %1003 = vector.load %arg5[%c7_536, %c0_537, %c0_538] : memref<8x1x16xf32, #tpu.memory_space<vmem>>, vector<1x1x16xf32>
    %1004 = vector.shape_cast %1003 : vector<1x1x16xf32> to vector<1x16xf32>
    %cst_539 = arith.constant 0.000000e+00 : f32
    %1005 = vector.broadcast %cst_539 : f32 to vector<16x16xf32>
    %1006 = arith.truncf %978 : vector<16x16xf32> to vector<16x16xbf16>
    %c7_540 = arith.constant 7 : index
    %c0_541 = arith.constant 0 : index
    %c0_542 = arith.constant 0 : index
    %c0_543 = arith.constant 0 : index
    %1007 = vector.load %arg4[%c7_540, %c0_541, %c0_542, %c0_543] : memref<8x3x16x16xbf16, #tpu.memory_space<vmem>>, vector<1x1x16x16xbf16>
    %1008 = vector.shape_cast %1007 : vector<1x1x16x16xbf16> to vector<16x16xbf16>
    %cst_544 = arith.constant dense<0.000000e+00> : vector<16x16xf32>
    %1009 = tpu.matmul %1006, %1008, %cst_544 {dimension_numbers = #tpu.dot_dimension_numbers<[1], [0], [0], [1], [0, 0, 1, 1], [], []>} : vector<16x16xbf16>, vector<16x16xbf16>, vector<16x16xf32> -> vector<16x16xf32>
    %1010 = arith.addf %1005, %1009 : vector<16x16xf32>
    %1011 = arith.truncf %954 : vector<16x16xf32> to vector<16x16xbf16>
    %c7_545 = arith.constant 7 : index
    %c1_546 = arith.constant 1 : index
    %c0_547 = arith.constant 0 : index
    %c0_548 = arith.constant 0 : index
    %1012 = vector.load %arg4[%c7_545, %c1_546, %c0_547, %c0_548] : memref<8x3x16x16xbf16, #tpu.memory_space<vmem>>, vector<1x1x16x16xbf16>
    %1013 = vector.shape_cast %1012 : vector<1x1x16x16xbf16> to vector<16x16xbf16>
    %cst_549 = arith.constant dense<0.000000e+00> : vector<16x16xf32>
    %1014 = tpu.matmul %1011, %1013, %cst_549 {dimension_numbers = #tpu.dot_dimension_numbers<[1], [0], [0], [1], [0, 0, 1, 1], [], []>} : vector<16x16xbf16>, vector<16x16xbf16>, vector<16x16xf32> -> vector<16x16xf32>
    %1015 = arith.addf %1010, %1014 : vector<16x16xf32>
    %1016 = arith.truncf %1002 : vector<16x16xf32> to vector<16x16xbf16>
    %c7_550 = arith.constant 7 : index
    %c2_551 = arith.constant 2 : index
    %c0_552 = arith.constant 0 : index
    %c0_553 = arith.constant 0 : index
    %1017 = vector.load %arg4[%c7_550, %c2_551, %c0_552, %c0_553] : memref<8x3x16x16xbf16, #tpu.memory_space<vmem>>, vector<1x1x16x16xbf16>
    %1018 = vector.shape_cast %1017 : vector<1x1x16x16xbf16> to vector<16x16xbf16>
    %cst_554 = arith.constant dense<0.000000e+00> : vector<16x16xf32>
    %1019 = tpu.matmul %1016, %1018, %cst_554 {dimension_numbers = #tpu.dot_dimension_numbers<[1], [0], [0], [1], [0, 0, 1, 1], [], []>} : vector<16x16xbf16>, vector<16x16xbf16>, vector<16x16xf32> -> vector<16x16xf32>
    %1020 = arith.addf %1015, %1019 : vector<16x16xf32>
    %1021 = vector.broadcast %1004 : vector<1x16xf32> to vector<16x16xf32>
    %1022 = arith.addf %1020, %1021 : vector<16x16xf32>
    %1023 = math.tanh %1022 : vector<16x16xf32>
    %1024 = arith.addf %1023, %885 : vector<16x16xf32>
    %1025 = vector.extract_strided_slice %607 {offsets = [0, 0], sizes = [8, 16], strides = [1, 1]} : vector<16x16xf32> to vector<8x16xf32>
    %c0_555 = arith.constant 0 : index
    %c0_556 = arith.constant 0 : index
    %c0_557 = arith.constant 0 : index
    %1026 = vector.load %arg8[%c0_555, %c0_556, %c0_557] : memref<2x16x16xf32, #tpu.memory_space<vmem>>, vector<1x8x16xf32>
    %1027 = vector.shape_cast %1026 : vector<1x8x16xf32> to vector<8x16xf32>
    %1028 = vector.shape_cast %1025 : vector<8x16xf32> to vector<1x8x16xf32>
    tpu.vector_store %arg8[%c0_555, %c0_556, %c0_557], %1028 {strides = array<i32>} : memref<2x16x16xf32, #tpu.memory_space<vmem>>, vector<1x8x16xf32>,
    %1029 = vector.extract_strided_slice %1024 {offsets = [0, 0], sizes = [8, 16], strides = [1, 1]} : vector<16x16xf32> to vector<8x16xf32>
    %c0_558 = arith.constant 0 : index
    %c8 = arith.constant 8 : index
    %c0_559 = arith.constant 0 : index
    %1030 = vector.load %arg8[%c0_558, %c8, %c0_559] : memref<2x16x16xf32, #tpu.memory_space<vmem>>, vector<1x8x16xf32>
    %1031 = vector.shape_cast %1030 : vector<1x8x16xf32> to vector<8x16xf32>
    %1032 = vector.shape_cast %1029 : vector<8x16xf32> to vector<1x8x16xf32>
    tpu.vector_store %arg8[%c0_558, %c8, %c0_559], %1032 {strides = array<i32>} : memref<2x16x16xf32, #tpu.memory_space<vmem>>, vector<1x8x16xf32>,
    %1033 = vector.extract_strided_slice %607 {offsets = [8, 0], sizes = [8, 16], strides = [1, 1]} : vector<16x16xf32> to vector<8x16xf32>
    %c1_560 = arith.constant 1 : index
    %c0_561 = arith.constant 0 : index
    %c0_562 = arith.constant 0 : index
    %1034 = vector.load %arg8[%c1_560, %c0_561, %c0_562] : memref<2x16x16xf32, #tpu.memory_space<vmem>>, vector<1x8x16xf32>
    %1035 = vector.shape_cast %1034 : vector<1x8x16xf32> to vector<8x16xf32>
    %1036 = vector.shape_cast %1033 : vector<8x16xf32> to vector<1x8x16xf32>
    tpu.vector_store %arg8[%c1_560, %c0_561, %c0_562], %1036 {strides = array<i32>} : memref<2x16x16xf32, #tpu.memory_space<vmem>>, vector<1x8x16xf32>,
    %1037 = vector.extract_strided_slice %1024 {offsets = [8, 0], sizes = [8, 16], strides = [1, 1]} : vector<16x16xf32> to vector<8x16xf32>
    %c1_563 = arith.constant 1 : index
    %c8_564 = arith.constant 8 : index
    %c0_565 = arith.constant 0 : index
    %1038 = vector.load %arg8[%c1_563, %c8_564, %c0_565] : memref<2x16x16xf32, #tpu.memory_space<vmem>>, vector<1x8x16xf32>
    %1039 = vector.shape_cast %1038 : vector<1x8x16xf32> to vector<8x16xf32>
    %1040 = vector.shape_cast %1037 : vector<8x16xf32> to vector<1x8x16xf32>
    tpu.vector_store %arg8[%c1_563, %c8_564, %c0_565], %1040 {strides = array<i32>} : memref<2x16x16xf32, #tpu.memory_space<vmem>>, vector<1x8x16xf32>,
    return
  }
  func.func @transform_0(%arg0: i32) -> (i32, i32, i32) {
    %c0_i32 = arith.constant 0 : i32
    %c0_i32_0 = arith.constant 0 : i32
    %c0_i32_1 = arith.constant 0 : i32
    return %arg0, %c0_i32, %c0_i32_0 : i32, i32, i32
  }
  func.func @transform_1(%arg0: i32) -> (i32, i32, i32, i32) {
    %c0_i32 = arith.constant 0 : i32
    %c0_i32_0 = arith.constant 0 : i32
    %c0_i32_1 = arith.constant 0 : i32
    %c0_i32_2 = arith.constant 0 : i32
    %c0_i32_3 = arith.constant 0 : i32
    return %c0_i32, %c0_i32_0, %c0_i32_1, %c0_i32_2 : i32, i32, i32, i32
  }
  func.func @transform_2(%arg0: i32) -> (i32, i32, i32) {
    %c0_i32 = arith.constant 0 : i32
    %c0_i32_0 = arith.constant 0 : i32
    %c0_i32_1 = arith.constant 0 : i32
    %c0_i32_2 = arith.constant 0 : i32
    return %c0_i32, %c0_i32_0, %c0_i32_1 : i32, i32, i32
  }
  func.func @transform_3(%arg0: i32) -> (i32, i32, i32, i32) {
    %c0_i32 = arith.constant 0 : i32
    %c0_i32_0 = arith.constant 0 : i32
    %c0_i32_1 = arith.constant 0 : i32
    %c0_i32_2 = arith.constant 0 : i32
    %c0_i32_3 = arith.constant 0 : i32
    return %c0_i32, %c0_i32_0, %c0_i32_1, %c0_i32_2 : i32, i32, i32, i32
  }
  func.func @transform_4(%arg0: i32) -> (i32, i32, i32) {
    %c0_i32 = arith.constant 0 : i32
    %c0_i32_0 = arith.constant 0 : i32
    %c0_i32_1 = arith.constant 0 : i32
    %c0_i32_2 = arith.constant 0 : i32
    return %c0_i32, %c0_i32_0, %c0_i32_1 : i32, i32, i32
  }
  func.func @transform_5(%arg0: i32) -> (i32, i32, i32) {
    %c0_i32 = arith.constant 0 : i32
    %c0_i32_0 = arith.constant 0 : i32
    %c0_i32_1 = arith.constant 0 : i32
    %c0_i32_2 = arith.constant 0 : i32
    return %c0_i32, %c0_i32_0, %c0_i32_1 : i32, i32, i32
  }
  func.func @transform_6(%arg0: i32) -> (i32, i32) {
    %c0_i32 = arith.constant 0 : i32
    %c0_i32_0 = arith.constant 0 : i32
    %c0_i32_1 = arith.constant 0 : i32
    return %c0_i32, %c0_i32_0 : i32, i32
  }
  func.func @transform_7(%arg0: i32) -> (i32, i32, i32) {
    %c0_i32 = arith.constant 0 : i32
    %c0_i32_0 = arith.constant 0 : i32
    %c0_i32_1 = arith.constant 0 : i32
    return %arg0, %c0_i32, %c0_i32_0 : i32, i32, i32
  }
}

</mosaic_0001>

<llo_original>
// kernel: tpu_custom_call.1
$region0: #{tpu_custom_call.1}
  #allocation0 [shape = 'u32[]', space=smem, size = 0x4, offset = 0x4, fixed_abs, tag = 'smem constant byte address 0x4 - core index']
  #allocation1 [shape = 'u32[144,128]{1,0:T(1,128)}', space=vmem, size = 0x12000, scoped, tag = 'internal scratch']
  #allocation2 [shape = 'f32[34,16]{1,0:T(8,128)}', space=vmem, size = 0x5000, scoped, tag = 'scratch operand']
  %s0 = inlined_call_operand.vmem [shape: f32[4,32,16], index: 0, kind: input, shape index: {}]
  %s1 = inlined_call_operand.vmem [shape: bf16[8,3,16,16], index: 1, kind: input, shape index: {}]
  %s2 = inlined_call_operand.hbm [shape: f32[8,1,16], index: 2, kind: input, shape index: {}]
  %s3 = inlined_call_operand.hbm [shape: bf16[8,3,16,16], index: 3, kind: input, shape index: {}]
  %s4 = inlined_call_operand.hbm [shape: f32[8,1,16], index: 4, kind: input, shape index: {}]
  %s5 = inlined_call_operand.hbm [shape: bf16[3,16,32], index: 5, kind: input, shape index: {}]
  %s6 = inlined_call_operand.vmem [shape: f32[1,32], index: 6, kind: input, shape index: {}]
  %s7 = inlined_call_operand.hbm [shape: f32[4,16,16], index: 7, kind: output, shape index: {}]
  %s8 = sld [smem:[#allocation0]]
  $region77: #{tpu_custom_call.1} parent=0
    _
  %s10 = ssub.s32 1, %s8
  %s11 = scalar_select 0, %s10, %s8
  $region1: #{tpu_custom_call.1} parent=0
    #allocation3 [shape = 'u8[4096]{0}', space=vmem, size = 0x1000, scoped, tag = 'input window, operand 2, single buffered']
    #allocation4 [shape = 's32[2]{0}', space=sflag, size = 0x8, scoped, tag = 'scoped memory for tpu_custom_call.1']
    #allocation5 [shape = 's32[2]{0}', space=sflag, size = 0x8, scoped, tag = 'scoped memory for tpu_custom_call.1']
    #allocation6 [shape = 'u8[98304]{0}', space=vmem, size = 0x18000, scoped, tag = 'input window, operand 3, single buffered']
    #allocation7 [shape = 's32[1]{0}', space=sflag, size = 0x4, scoped, tag = 'scoped memory for tpu_custom_call.1']
    #allocation8 [shape = 'u8[4096]{0}', space=vmem, size = 0x1000, scoped, tag = 'input window, operand 4, single buffered']
    #allocation9 [shape = 'u8[12288]{0}', space=vmem, size = 0x3000, scoped, tag = 'input window, operand 5, single buffered']
    #allocation10 [shape = 's32[1]{0}', space=sflag, size = 0x4, scoped, tag = 'scoped memory for tpu_custom_call.1']
    #allocation11 [shape = 'u8[32768]{0}', space=vmem, size = 0x8000, scoped, tag = 'output window, operand 0']
    %12 = vsyncpa [#allocation4], 0
    %13 = vsyncpa [#allocation7], 0
    %14 = vsyncpa [#allocation10], 0
    %15 = vsyncpa [#allocation5], 0
    %s16 = scalar_lea.sflag [#allocation5], 1
    %17 = vsyncpa %s16, 0
    loop: start=0, step=1, limit=4
    $region2: #{tpu_custom_call.1} parent=1 // loop_pre_header
      _
    $region3: #{tpu_custom_call.1} parent=1 // loop_header
      %s19 = sphi 0, %s23
      %p20 = scmp.ge.s32.totalorder %s19, 4
      %s29 = sphi 0, %s31
      %s32 = sphi 0, %s29
      %s33 = sphi 0, %s32
      %s49 = sphi 0, %s33
      %s53 = sphi 0, %s53
      %s55 = sphi 0, %s53
      %s56 = sphi 0, %s55
      %s70 = sphi 0, %s56
      %s74 = sphi 0, %s74
      %s76 = sphi 0, %s74
      %s77 = sphi 0, %s76
      %s91 = sphi 0, %s77
      %s95 = sphi 0, %s95
      %s97 = sphi 0, %s95
      %s98 = sphi 0, %s97
      %s112 = sphi 0, %s98
      %s116 = sphi 0, %s116
      %s118 = sphi 0, %s116
      %s119 = sphi 0, %s118
      %s133 = sphi 0, %s119
      %s137 = sphi 0, %s137
      %s139 = sphi 0, %s137
      %s140 = sphi 0, %s139
      %s154 = sphi 0, %s140
      %s158 = sphi 0, %s158
      %s160 = sphi 0, %s158
      %s161 = sphi 0, %s160
      %s175 = sphi 0, %s161
      %s181 = sphi 0, %s183
      %s184 = sphi 0, %s181
      %s185 = sphi 0, %s184
      %s201 = sphi 0, %s185
    $region4: #{tpu_custom_call.1} parent=1 // loop_header_branch
      %22 = sbr.rel (%p20) target = $region8
    $region5: #{tpu_custom_call.1} parent=1 // loop_body
      %s24 = ssub.s32 %s19, 1
      %s25 = ssub.s32 %s19, 2
      %s26 = sadd.s32 %s19, 1
      %s27 = ssub.s32 %s19, %s26
      %p28 = scmp.eq.s32.totalorder %s27, 0
      %s30 = sadd.s32 %s29, 1
      %s31 = scalar_select %p28, %s29, %s30
      %p34 = pneg %p28
      %p35 = scmp.eq.s32.totalorder %s19, 1
      %p36 = por %p34, %p35
      %p37 = scmp.ne.s32.totalorder %s29, %s32
      %p38 = scmp.eq.s32.totalorder %s19, 0
      %p39 = por %p37, %p38
      %p40 = scmp.ne.s32.totalorder %s29, %s32
      %p41 = scmp.eq.s32.totalorder %s24, 1
      %p42 = por %p40, %p41
      %p43 = scmp.ne.s32.totalorder %s32, %s33
      %p44 = scmp.eq.s32.totalorder %s24, 0
      %p45 = por %p43, %p44
      %p46 = scmp.ne.s32.totalorder %s32, %s33
      %p47 = scmp.eq.s32.totalorder %s25, 1
      %p48 = por %p46, %p47
      %p50 = scmp.ne.s32.totalorder %s33, %s49
      %p51 = scmp.eq.s32.totalorder %s25, 0
      %p52 = por %p50, %p51
      %s54 = sadd.s32 %s53, 1
      %p57 = scmp.eq.s32.totalorder %s19, 1
      %p58 = scmp.ne.s32.totalorder %s53, %s55
      %p59 = scmp.eq.s32.totalorder %s19, 0
      %p60 = por %p58, %p59
      %p61 = scmp.ne.s32.totalorder %s53, %s55
      %p62 = scmp.eq.s32.totalorder %s24, 1
      %p63 = por %p61, %p62
      %p64 = scmp.ne.s32.totalorder %s55, %s56
      %p65 = scmp.eq.s32.totalorder %s24, 0
      %p66 = por %p64, %p65
      %p67 = scmp.ne.s32.totalorder %s55, %s56
      %p68 = scmp.eq.s32.totalorder %s25, 1
      %p69 = por %p67, %p68
      %p71 = scmp.ne.s32.totalorder %s56, %s70
      %p72 = scmp.eq.s32.totalorder %s25, 0
      %p73 = por %p71, %p72
      %s75 = sadd.s32 %s74, 1
      %p78 = scmp.eq.s32.totalorder %s19, 1
      %p79 = scmp.ne.s32.totalorder %s74, %s76
      %p80 = scmp.eq.s32.totalorder %s19, 0
      %p81 = por %p79, %p80
      %p82 = scmp.ne.s32.totalorder %s74, %s76
      %p83 = scmp.eq.s32.totalorder %s24, 1
      %p84 = por %p82, %p83
      %p85 = scmp.ne.s32.totalorder %s76, %s77
      %p86 = scmp.eq.s32.totalorder %s24, 0
      %p87 = por %p85, %p86
      %p88 = scmp.ne.s32.totalorder %s76, %s77
      %p89 = scmp.eq.s32.totalorder %s25, 1
      %p90 = por %p88, %p89
      %p92 = scmp.ne.s32.totalorder %s77, %s91
      %p93 = scmp.eq.s32.totalorder %s25, 0
      %p94 = por %p92, %p93
      %s96 = sadd.s32 %s95, 1
      %p99 = scmp.eq.s32.totalorder %s19, 1
      %p100 = scmp.ne.s32.totalorder %s95, %s97
      %p101 = scmp.eq.s32.totalorder %s19, 0
      %p102 = por %p100, %p101
      %p103 = scmp.ne.s32.totalorder %s95, %s97
      %p104 = scmp.eq.s32.totalorder %s24, 1
      %p105 = por %p103, %p104
      %p106 = scmp.ne.s32.totalorder %s97, %s98
      %p107 = scmp.eq.s32.totalorder %s24, 0
      %p108 = por %p106, %p107
      %p109 = scmp.ne.s32.totalorder %s97, %s98
      %p110 = scmp.eq.s32.totalorder %s25, 1
      %p111 = por %p109, %p110
      %p113 = scmp.ne.s32.totalorder %s98, %s112
      %p114 = scmp.eq.s32.totalorder %s25, 0
      %p115 = por %p113, %p114
      %s117 = sadd.s32 %s116, 1
      %p120 = scmp.eq.s32.totalorder %s19, 1
      %p121 = scmp.ne.s32.totalorder %s116, %s118
      %p122 = scmp.eq.s32.totalorder %s19, 0
      %p123 = por %p121, %p122
      %p124 = scmp.ne.s32.totalorder %s116, %s118
      %p125 = scmp.eq.s32.totalorder %s24, 1
      %p126 = por %p124, %p125
      %p127 = scmp.ne.s32.totalorder %s118, %s119
      %p128 = scmp.eq.s32.totalorder %s24, 0
      %p129 = por %p127, %p128
      %p130 = scmp.ne.s32.totalorder %s118, %s119
      %p131 = scmp.eq.s32.totalorder %s25, 1
      %p132 = por %p130, %p131
      %p134 = scmp.ne.s32.totalorder %s119, %s133
      %p135 = scmp.eq.s32.totalorder %s25, 0
      %p136 = por %p134, %p135
      %s138 = sadd.s32 %s137, 1
      %p141 = scmp.eq.s32.totalorder %s19, 1
      %p142 = scmp.ne.s32.totalorder %s137, %s139
      %p143 = scmp.eq.s32.totalorder %s19, 0
      %p144 = por %p142, %p143
      %p145 = scmp.ne.s32.totalorder %s137, %s139
      %p146 = scmp.eq.s32.totalorder %s24, 1
      %p147 = por %p145, %p146
      %p148 = scmp.ne.s32.totalorder %s139, %s140
      %p149 = scmp.eq.s32.totalorder %s24, 0
      %p150 = por %p148, %p149
      %p151 = scmp.ne.s32.totalorder %s139, %s140
      %p152 = scmp.eq.s32.totalorder %s25, 1
      %p153 = por %p151, %p152
      %p155 = scmp.ne.s32.totalorder %s140, %s154
      %p156 = scmp.eq.s32.totalorder %s25, 0
      %p157 = por %p155, %p156
      %s159 = sadd.s32 %s158, 1
      %p162 = scmp.eq.s32.totalorder %s19, 1
      %p163 = scmp.ne.s32.totalorder %s158, %s160
      %p164 = scmp.eq.s32.totalorder %s19, 0
      %p165 = por %p163, %p164
      %p166 = scmp.ne.s32.totalorder %s158, %s160
      %p167 = scmp.eq.s32.totalorder %s24, 1
      %p168 = por %p166, %p167
      %p169 = scmp.ne.s32.totalorder %s160, %s161
      %p170 = scmp.eq.s32.totalorder %s24, 0
      %p171 = por %p169, %p170
      %p172 = scmp.ne.s32.totalorder %s160, %s161
      %p173 = scmp.eq.s32.totalorder %s25, 1
      %p174 = por %p172, %p173
      %p176 = scmp.ne.s32.totalorder %s161, %s175
      %p177 = scmp.eq.s32.totalorder %s25, 0
      %p178 = por %p176, %p177
      %s179 = ssub.s32 %s19, %s26
      %p180 = scmp.eq.s32.totalorder %s179, 0
      %s182 = sadd.s32 %s181, 1
      %s183 = scalar_select %p180, %s181, %s182
      %p186 = pneg %p180
      %p187 = scmp.eq.s32.totalorder %s19, 1
      %p188 = por %p186, %p187
      %p189 = scmp.ne.s32.totalorder %s181, %s184
      %p190 = scmp.eq.s32.totalorder %s19, 0
      %p191 = por %p189, %p190
      %p192 = scmp.ne.s32.totalorder %s181, %s184
      %p193 = scmp.eq.s32.totalorder %s24, 1
      %p194 = por %p192, %p193
      %p195 = scmp.ne.s32.totalorder %s184, %s185
      %p196 = scmp.eq.s32.totalorder %s24, 0
      %p197 = por %p195, %p196
      %p198 = scmp.ne.s32.totalorder %s184, %s185
      %p199 = scmp.eq.s32.totalorder %s25, 1
      %p200 = por %p198, %p199
      %p202 = scmp.ne.s32.totalorder %s185, %s201
      %p203 = scmp.eq.s32.totalorder %s25, 0
      %p204 = por %p202, %p203
      %p205 = scmp.le.s32.totalorder 1, %s19
      %p206 = scmp.lt.s32.totalorder %s19, 3
      %p207 = pnand %p205, %p206
      %p208 = pneg %p207
      // Predicated region
      $region9: #{tpu_custom_call.1} parent=5 // pred_check
        _
      $region10: #{tpu_custom_call.1} parent=5 // pred_check_branch
        %210 = sbr.rel (%p207) target = $region12
      $region11: #{tpu_custom_call.1} parent=5 // pred_region
        %s211 = ssub.s32 %s19, 1
        // Predicated region
        $region13: #{tpu_custom_call.1} parent=11 // pred_check
          %p212 = pneg %p66
        $region14: #{tpu_custom_call.1} parent=11 // pred_check_branch
          %214 = sbr.rel (%p212) target = $region16
        $region15: #{tpu_custom_call.1} parent=11 // pred_region
          _
        $region16: #{tpu_custom_call.1} parent=11 // pred_fallthru
          _
        // Predicated region
        $region17: #{tpu_custom_call.1} parent=11 // pred_check
          %p215 = pneg %p87
        $region18: #{tpu_custom_call.1} parent=11 // pred_check_branch
          %217 = sbr.rel (%p215) target = $region20
        $region19: #{tpu_custom_call.1} parent=11 // pred_region
          %s219 = ssub.s32 128, 128
          %220 = vsyncadd [#allocation4], %s219
          %s221 = sshll.u32 [#allocation3], 4
          %s222 = int_to_ptr.vmem [resolvable:$true] %s221
          %227 = dma.hbm_to_vmem [thread:$0]  %s2, 128, %s222, [#allocation4], 16, 16, 1
        $region20: #{tpu_custom_call.1} parent=11 // pred_fallthru
          _
        // Predicated region
        $region21: #{tpu_custom_call.1} parent=11 // pred_check
          %p228 = pneg %p108
        $region22: #{tpu_custom_call.1} parent=11 // pred_check_branch
          %230 = sbr.rel (%p228) target = $region24
        $region23: #{tpu_custom_call.1} parent=11 // pred_region
          %s232 = ssub.s32 3072, 3072
          %233 = vsyncadd [#allocation7], %s232
          %s234 = sshll.u32 [#allocation6], 4
          %s235 = int_to_ptr.vmem [resolvable:$true] %s234
          %240 = dma.hbm_to_vmem [thread:$0]  %s3, 3072, %s235, [#allocation7], 64, 64, 4
        $region24: #{tpu_custom_call.1} parent=11 // pred_fallthru
          _
        // Predicated region
        $region25: #{tpu_custom_call.1} parent=11 // pred_check
          %p241 = pneg %p129
        $region26: #{tpu_custom_call.1} parent=11 // pred_check_branch
          %243 = sbr.rel (%p241) target = $region28
        $region27: #{tpu_custom_call.1} parent=11 // pred_region
          %s245 = ssub.s32 128, 128
          %246 = vsyncadd [#allocation7], %s245
          %s247 = sshll.u32 [#allocation8], 4
          %s248 = int_to_ptr.vmem [resolvable:$true] %s247
          %253 = dma.hbm_to_vmem [thread:$0]  %s4, 128, %s248, [#allocation7], 16, 16, 1
        $region28: #{tpu_custom_call.1} parent=11 // pred_fallthru
          _
        // Predicated region
        $region29: #{tpu_custom_call.1} parent=11 // pred_check
          %p254 = pneg %p150
        $region30: #{tpu_custom_call.1} parent=11 // pred_check_branch
          %256 = sbr.rel (%p254) target = $region32
        $region31: #{tpu_custom_call.1} parent=11 // pred_region
          %s258 = ssub.s32 384, 384
          %259 = vsyncadd [#allocation10], %s258
          %s260 = sshll.u32 [#allocation9], 4
          %s261 = int_to_ptr.vmem [resolvable:$true] %s260
          %266 = dma.hbm_to_vmem [thread:$0]  %s5, 384, %s261, [#allocation10], 64, 64, 4
        $region32: #{tpu_custom_call.1} parent=11 // pred_fallthru
          _
        // Predicated region
        $region33: #{tpu_custom_call.1} parent=11 // pred_check
          %p267 = pneg %p171
        $region34: #{tpu_custom_call.1} parent=11 // pred_check_branch
          %269 = sbr.rel (%p267) target = $region36
        $region35: #{tpu_custom_call.1} parent=11 // pred_region
          _
        $region36: #{tpu_custom_call.1} parent=11 // pred_fallthru
          _
      $region12: #{tpu_custom_call.1} parent=5 // pred_fallthru
        _
      %p270 = scmp.lt.s32.totalorder %s19, 2
      // Predicated region
      $region37: #{tpu_custom_call.1} parent=5 // pred_check
        %p271 = pneg %p270
      $region38: #{tpu_custom_call.1} parent=5 // pred_check_branch
        %273 = sbr.rel (%p271) target = $region40
      $region39: #{tpu_custom_call.1} parent=5 // pred_region
        // Predicated region
        $region41: #{tpu_custom_call.1} parent=39 // pred_check
          %p274 = pneg %p39
        $region42: #{tpu_custom_call.1} parent=39 // pred_check_branch
          %276 = sbr.rel (%p274) target = $region44
        $region43: #{tpu_custom_call.1} parent=39 // pred_region
          %s277 = smul.u32 2, %s19
          %p278 = scmp.lt.s32.totalorder %s277, 3
          %s279 = scalar_select %p278, %s277, 3
          %s280 = smul.addr %s279, 4
          %s281 = smul.addr %s280, 8
          %s282 = scalar_lea.vmem %s0, %s281
          %s283 = smul.u32 2, %s19
        $region44: #{tpu_custom_call.1} parent=39 // pred_fallthru
          _
      $region40: #{tpu_custom_call.1} parent=5 // pred_fallthru
        _
      %p284 = scmp.le.s32.totalorder 1, %s19
      %p285 = scmp.lt.s32.totalorder %s19, 3
      %p286 = pnand %p284, %p285
      %p287 = pneg %p286
      // Predicated region
      $region45: #{tpu_custom_call.1} parent=5 // pred_check
        _
      $region46: #{tpu_custom_call.1} parent=5 // pred_check_branch
        %289 = sbr.rel (%p286) target = $region48
      $region47: #{tpu_custom_call.1} parent=5 // pred_region
        %s290 = ssub.s32 %s19, 1
        // Predicated region
        $region49: #{tpu_custom_call.1} parent=47 // pred_check
          %p291 = pneg %p87
        $region50: #{tpu_custom_call.1} parent=47 // pred_check_branch
          %293 = sbr.rel (%p291) target = $region52
        $region51: #{tpu_custom_call.1} parent=47 // pred_region
          %294 = dma.done [#allocation4], 128
        $region52: #{tpu_custom_call.1} parent=47 // pred_fallthru
          _
        // Predicated region
        $region53: #{tpu_custom_call.1} parent=47 // pred_check
          %p295 = pneg %p108
        $region54: #{tpu_custom_call.1} parent=47 // pred_check_branch
          %297 = sbr.rel (%p295) target = $region56
        $region55: #{tpu_custom_call.1} parent=47 // pred_region
          %298 = dma.done [#allocation7], 3072
        $region56: #{tpu_custom_call.1} parent=47 // pred_fallthru
          _
        // Predicated region
        $region57: #{tpu_custom_call.1} parent=47 // pred_check
          %p299 = pneg %p129
        $region58: #{tpu_custom_call.1} parent=47 // pred_check_branch
          %301 = sbr.rel (%p299) target = $region60
        $region59: #{tpu_custom_call.1} parent=47 // pred_region
          %302 = dma.done [#allocation7], 128
        $region60: #{tpu_custom_call.1} parent=47 // pred_fallthru
          _
        // Predicated region
        $region61: #{tpu_custom_call.1} parent=47 // pred_check
          %p303 = pneg %p150
        $region62: #{tpu_custom_call.1} parent=47 // pred_check_branch
          %305 = sbr.rel (%p303) target = $region64
        $region63: #{tpu_custom_call.1} parent=47 // pred_region
          %306 = dma.done [#allocation10], 384
        $region64: #{tpu_custom_call.1} parent=47 // pred_fallthru
          _
        %s307 = smul.u32 2, %s24
        %p308 = scmp.lt.s32.totalorder %s307, 3
        %s309 = scalar_select %p308, %s307, 3
        %s310 = smul.addr %s309, 4
        %s311 = smul.addr %s310, 8
        %s312 = scalar_lea.vmem %s0, %s311
        %p313 = pneg %p45
        %p314 = pneg %p42
        %p315 = pneg %p66
        %p316 = pneg %p63
        %p317 = pneg %p87
        %p318 = pneg %p84
        %p319 = pneg %p108
        %p320 = pneg %p105
        %p321 = pneg %p129
        %p322 = pneg %p126
        %p323 = pneg %p150
        %p324 = pneg %p147
        %p325 = pneg %p171
        %p326 = pneg %p168
        %p327 = pneg %p197
        %p328 = pneg %p194
        %s329 = sand.u32 %s184, 1
        %s330 = scalar_lea.sflag [#allocation5], %s329
        %s331 = sand.u32 %s184, 1
        %s332 = smul.addr %s331, 32
        %s333 = scalar_lea.vmem [#allocation11], %s332
        %s334 = smul.u32 2, %s24
        %p335 = scmp.lt.s32.totalorder %s334, 3
        %s336 = scalar_select %p335, %s334, 3
        %s337 = smul.addr %s336, 4
        %s338 = smul.addr %s337, 8
        %s339 = scalar_lea.vmem %s0, %s338
        %s340 = smul.u32 2, %s24
        %s341 = smul.u32 2, %s24
        %vm343 = vcmask 122880
        %344 = vst.msk [vmem:[#allocation2] sm:$0x1] %vm343, 0.0
        %v345 = vld [vmem:[%s339] sm:$0xff]
        %v346 = vld [vmem:[%s339 + $0x8] sm:$0xff]
        %v347 = vld [vmem:[%s339 + $0x10] sm:$0xff]
        %v348 = vld [vmem:[%s339 + $0x18] sm:$0xff]
        %s349 = scalar_lea.vmem %s339, 32
        %v350 = vld [vmem:[%s349] sm:$0xff]
        %v351 = vld [vmem:[%s349 + $0x8] sm:$0xff]
        %v352 = vld [vmem:[%s349 + $0x10] sm:$0xff]
        %v353 = vld [vmem:[%s349 + $0x18] sm:$0xff]
        %vm354 = vcmask 130048
        %355 = vst.msk [vmem:[#allocation2 + $0x1] sm:$0xff] %vm354, %v345
        %356 = vst.msk [vmem:[#allocation2 + $0x9] sm:$0xff] %vm354, %v346
        %357 = vst.msk [vmem:[#allocation2 + $0x11] sm:$0xff] %vm354, %v347
        %358 = vst.msk [vmem:[#allocation2 + $0x19] sm:$0xff] %vm354, %v348
        %v359 = vld [vmem:[#allocation2] ss:$2 sm:$0xff]
        %s360 = scalar_lea.vmem [#allocation2], 16
        %v361 = vld [vmem:[%s360] ss:$2 sm:$0xff]
        %s362 = scalar_lea.vmem [#allocation2], 1
        %v363 = vld [vmem:[%s362] ss:$2 sm:$0xff]
        %s364 = scalar_lea.vmem [#allocation2], 17
        %v365 = vld [vmem:[%s364] ss:$2 sm:$0xff]
        %s366 = scalar_lea.vmem [#allocation2], 2
        %v367 = vld [vmem:[%s366] ss:$2 sm:$0xff]
        %s368 = scalar_lea.vmem [#allocation2], 18
        %v369 = vld [vmem:[%s368] ss:$2 sm:$0xff]
        %370 = vst.msk [vmem:[#allocation2 + $0x1] sm:$0xff] %vm354, %v350
        %371 = vst.msk [vmem:[#allocation2 + $0x9] sm:$0xff] %vm354, %v351
        %372 = vst.msk [vmem:[#allocation2 + $0x11] sm:$0xff] %vm354, %v352
        %373 = vst.msk [vmem:[#allocation2 + $0x19] sm:$0xff] %vm354, %v353
        %v374 = vld [vmem:[#allocation2] ss:$2 sm:$0xff]
        %v375 = vld [vmem:[%s360] ss:$2 sm:$0xff]
        %v376 = vld [vmem:[%s362] ss:$2 sm:$0xff]
        %v377 = vld [vmem:[%s364] ss:$2 sm:$0xff]
        %v378 = vld [vmem:[%s366] ss:$2 sm:$0xff]
        %v379 = vld [vmem:[%s368] ss:$2 sm:$0xff]
        %v380 = vlaneseq
        %v381 = vshrl.u32 %v380, 7
        %v382 = vadd.s32 %v381, 8
        %v383 = vadd.s32 %v381, 16
        %v384 = vadd.s32 %v381, 24
        %vm385 = vcmp.lt.s32.totalorder %v381, 0
        %v386 = vsub.s32 0, %v381
        %v387 = vsel %vm385, %v386, %v381
        %v388 = vshrl.u32 %v387, 4
        %v389 = vand.u32 %v387, 15
        %v390 = vsub.s32 0, %v389
        %v391 = vsel %vm385, %v390, %v389
        %vm392 = vcmp.lt.s32.totalorder %v382, 0
        %v393 = vsub.s32 0, %v382
        %v394 = vsel %vm392, %v393, %v382
        %v395 = vshrl.u32 %v394, 4
        %v396 = vand.u32 %v394, 15
        %v397 = vsub.s32 0, %v396
        %v398 = vsel %vm392, %v397, %v396
        %vm399 = vcmp.lt.s32.totalorder %v383, 0
        %v400 = vsub.s32 0, %v383
        %v401 = vsel %vm399, %v400, %v383
        %v402 = vshrl.u32 %v401, 4
        %v403 = vand.u32 %v401, 15
        %v404 = vsub.s32 0, %v403
        %v405 = vsel %vm399, %v404, %v403
        %vm406 = vcmp.lt.s32.totalorder %v384, 0
        %v407 = vsub.s32 0, %v384
        %v408 = vsel %vm406, %v407, %v384
        %v409 = vshrl.u32 %v408, 4
        %v410 = vand.u32 %v408, 15
        %v411 = vsub.s32 0, %v410
        %v412 = vsel %vm406, %v411, %v410
        %vm413 = vcmp.ne.s32.totalorder %v391, 0
        %vm414 = vcmp.ne.s32.totalorder %v398, 0
        %vm415 = vcmp.ne.s32.totalorder %v405, 0
        %vm416 = vcmp.ne.s32.totalorder %v412, 0
        %vm417 = vcmp.lt.s32.totalorder %v391, 0
        %vm418 = vcmp.lt.s32.totalorder %v398, 0
        %vm419 = vcmp.lt.s32.totalorder %v405, 0
        %vm420 = vcmp.lt.s32.totalorder %v412, 0
        %vm421 = vmand %vm417, %vm413
        %vm422 = vmand %vm418, %vm414
        %vm423 = vmand %vm419, %vm415
        %vm424 = vmand %vm420, %vm416
        %v425 = vadd.s32 %v391, 16
        %v426 = vadd.s32 %v398, 16
        %v427 = vadd.s32 %v405, 16
        %v428 = vadd.s32 %v412, 16
        %v429 = vsel %vm421, %v425, %v391
        %v430 = vsel %vm422, %v426, %v398
        %v431 = vsel %vm423, %v427, %v405
        %v432 = vsel %vm424, %v428, %v412
        %vm433 = vcmp.eq.s32.totalorder %v429, 0
        %vm434 = vcmp.eq.s32.totalorder %v430, 0
        %vm435 = vcmp.eq.s32.totalorder %v431, 0
        %vm436 = vcmp.eq.s32.totalorder %v432, 0
        %v437 = vsel %vm433, %v363, %v359
        %v438 = vsel %vm434, %v365, %v361
        %v439 = vsel %vm435, %v376, %v374
        %v440 = vsel %vm436, %v377, %v375
        %v441 = vmax.f32 %v437, %v363
        %v442 = vmax.f32 %v438, %v365
        %v443 = vmax.f32 %v439, %v376
        %v444 = vmax.f32 %v440, %v377
        %v445 = vmax.f32 %v441, %v367
        %v446 = vmax.f32 %v442, %v369
        %v447 = vmax.f32 %v443, %v378
        %v448 = vmax.f32 %v444, %v379
        %v449 = vld [vmem:[#allocation3] sm:$0x1]
        %v450 = vpack.c.bf16 %v361, %v359
        %v451 = vpack.c.bf16 %v375, %v374
        %v452 = vld [vmem:[%s1] sm:$0xf]
        %v453 = vld [vmem:[%s1 + $0x4] sm:$0xf]
        %v454 = vpack.c.bf16 %v365, %v363
        %v455 = vpack.c.bf16 %v377, %v376
        %s456 = scalar_lea.vmem %s1, 8
        %v457 = vld [vmem:[%s456] sm:$0xf]
        %v458 = vld [vmem:[%s456 + $0x4] sm:$0xf]
        %v461 = vunpack.c.l.b16 %v457
        %v462 = vunpack.c.l.b16 %v458
        %v463 = vpack.c.b16 %v462, %v461
        %v466 = vsel %vm354, %v454, 0
        %v469 = vsel %vm354, %v455, 0
        %471 = vmatprep.subr.bf16.mxu0 0
        %472 = vmatpush1.bf16.msra.mxu0 0
        %473 = vmatprep.subr.bf16.mxu0 0
        %474 = vmatpush1.bf16.msra.mxu0 0
        %475 = vmatprep.subr.bf16.mxu0 0
        %476 = vmatpush1.bf16.msra.mxu0 0
        %477 = vmatprep.subr.bf16.mxu0 0
        %478 = vmatpush1.bf16.msra.mxu0 0
        %479 = vmatprep.subr.bf16.mxu0 0
        %480 = vmatpush1.bf16.msra.mxu0 0
        %481 = vmatprep.subr.bf16.mxu0 0
        %482 = vmatpush1.bf16.msra.mxu0 0
        %483 = vmatprep.subr.bf16.mxu0 0
        %484 = vmatpush1.bf16.msra.mxu0 0
        %485 = vmatprep.subr.bf16.mxu0 0
        %486 = vmatpush1.bf16.msra.mxu0 %v463
        %487 = vmatprep.subr.bf16.mxu0 0
        %488 = vmatpush2.bf16.msra.mxu0 0
        %489 = vmatprep.subr.bf16.mxu0 0
        %490 = vmatpush2.bf16.msra.mxu0 0
        %491 = vmatprep.subr.bf16.mxu0 0
        %492 = vmatpush2.bf16.msra.mxu0 0
        %493 = vmatprep.subr.bf16.mxu0 0
        %494 = vmatpush2.bf16.msra.mxu0 0
        %495 = vmatprep.subr.bf16.mxu0 0
        %496 = vmatpush2.bf16.msra.mxu0 0
        %497 = vmatprep.subr.bf16.mxu0 0
        %498 = vmatpush2.bf16.msra.mxu0 0
        %499 = vmatprep.subr.bf16.mxu0 0
        %500 = vmatpush2.bf16.msra.mxu0 0
        %501 = vmatprep.subr.bf16.mxu0 0
        %502 = vmatpush2.bf16.msra.mxu0 0
        %503 = vmatprep.mubr.bf16.mxu0 0
        %504 = vmatmul.mubr.bf16.gmra.mxu0 %v466
        %v505 = vpop.f32.mrf.mxu0
        %v506 = vadd.f32 0.0, %v505
        %v507 = vpop.f32.mrf.mxu0
        %v508 = vpop.f32.mrf.mxu0
        %v509 = vadd.f32 0.0, %v508
        %v510 = vpop.f32.mrf.mxu0
        %511 = vmatprep.mubr.bf16.mxu0 0
        %512 = vmatmul.mubr.bf16.gmra.mxu0 %v469
        %v513 = vpop.f32.mrf.mxu0
        %v514 = vadd.f32 0.0, %v513
        %v515 = vpop.f32.mrf.mxu0
        %v516 = vpop.f32.mrf.mxu0
        %v517 = vadd.f32 0.0, %v516
        %v518 = vpop.f32.mrf.mxu0
        %519 = vdwg.mxu0
        %v522 = vunpack.c.l.b16 %v452
        %v523 = vunpack.c.l.b16 %v453
        %v524 = vpack.c.b16 %v523, %v522
        %v527 = vsel %vm354, %v450, 0
        %v530 = vsel %vm354, %v451, 0
        %532 = vmatprep.subr.bf16.mxu0 0
        %533 = vmatpush1.bf16.msra.mxu0 0
        %534 = vmatprep.subr.bf16.mxu0 0
        %535 = vmatpush1.bf16.msra.mxu0 0
        %536 = vmatprep.subr.bf16.mxu0 0
        %537 = vmatpush1.bf16.msra.mxu0 0
        %538 = vmatprep.subr.bf16.mxu0 0
        %539 = vmatpush1.bf16.msra.mxu0 0
        %540 = vmatprep.subr.bf16.mxu0 0
        %541 = vmatpush1.bf16.msra.mxu0 0
        %542 = vmatprep.subr.bf16.mxu0 0
        %543 = vmatpush1.bf16.msra.mxu0 0
        %544 = vmatprep.subr.bf16.mxu0 0
        %545 = vmatpush1.bf16.msra.mxu0 0
        %546 = vmatprep.subr.bf16.mxu0 0
        %547 = vmatpush1.bf16.msra.mxu0 %v524
        %548 = vmatprep.subr.bf16.mxu0 0
        %549 = vmatpush2.bf16.msra.mxu0 0
        %550 = vmatprep.subr.bf16.mxu0 0
        %551 = vmatpush2.bf16.msra.mxu0 0
        %552 = vmatprep.subr.bf16.mxu0 0
        %553 = vmatpush2.bf16.msra.mxu0 0
        %554 = vmatprep.subr.bf16.mxu0 0
        %555 = vmatpush2.bf16.msra.mxu0 0
        %556 = vmatprep.subr.bf16.mxu0 0
        %557 = vmatpush2.bf16.msra.mxu0 0
        %558 = vmatprep.subr.bf16.mxu0 0
        %559 = vmatpush2.bf16.msra.mxu0 0
        %560 = vmatprep.subr.bf16.mxu0 0
        %561 = vmatpush2.bf16.msra.mxu0 0
        %562 = vmatprep.subr.bf16.mxu0 0
        %563 = vmatpush2.bf16.msra.mxu0 0
        %564 = vmatprep.mubr.bf16.mxu0 0
        %565 = vmatmul.mubr.bf16.gmra.mxu0 %v527
        %v566 = vpop.f32.mrf.mxu0
        %v567 = vadd.f32 %v506, %v566
        %v568 = vpop.f32.mrf.mxu0
        %v569 = vpop.f32.mrf.mxu0
        %v570 = vadd.f32 %v509, %v569
        %v571 = vpop.f32.mrf.mxu0
        %572 = vmatprep.mubr.bf16.mxu0 0
        %573 = vmatmul.mubr.bf16.gmra.mxu0 %v530
        %v574 = vpop.f32.mrf.mxu0
        %v575 = vadd.f32 %v514, %v574
        %v576 = vpop.f32.mrf.mxu0
        %v577 = vpop.f32.mrf.mxu0
        %v578 = vadd.f32 %v517, %v577
        %v579 = vpop.f32.mrf.mxu0
        %580 = vdwg.mxu0
        %v581 = vpack.c.bf16 %v369, %v367
        %v582 = vpack.c.bf16 %v379, %v378
        %s583 = scalar_lea.vmem %s1, 16
        %v584 = vld [vmem:[%s583] sm:$0xf]
        %v585 = vld [vmem:[%s583 + $0x4] sm:$0xf]
        %v588 = vunpack.c.l.b16 %v584
        %v589 = vunpack.c.l.b16 %v585
        %v590 = vpack.c.b16 %v589, %v588
        %v593 = vsel %vm354, %v581, 0
        %v596 = vsel %vm354, %v582, 0
        %598 = vmatprep.subr.bf16.mxu0 0
        %599 = vmatpush1.bf16.msra.mxu0 0
        %600 = vmatprep.subr.bf16.mxu0 0
        %601 = vmatpush1.bf16.msra.mxu0 0
        %602 = vmatprep.subr.bf16.mxu0 0
        %603 = vmatpush1.bf16.msra.mxu0 0
        %604 = vmatprep.subr.bf16.mxu0 0
        %605 = vmatpush1.bf16.msra.mxu0 0
        %606 = vmatprep.subr.bf16.mxu0 0
        %607 = vmatpush1.bf16.msra.mxu0 0
        %608 = vmatprep.subr.bf16.mxu0 0
        %609 = vmatpush1.bf16.msra.mxu0 0
        %610 = vmatprep.subr.bf16.mxu0 0
        %611 = vmatpush1.bf16.msra.mxu0 0
        %612 = vmatprep.subr.bf16.mxu0 0
        %613 = vmatpush1.bf16.msra.mxu0 %v590
        %614 = vmatprep.subr.bf16.mxu0 0
        %615 = vmatpush2.bf16.msra.mxu0 0
        %616 = vmatprep.subr.bf16.mxu0 0
        %617 = vmatpush2.bf16.msra.mxu0 0
        %618 = vmatprep.subr.bf16.mxu0 0
        %619 = vmatpush2.bf16.msra.mxu0 0
        %620 = vmatprep.subr.bf16.mxu0 0
        %621 = vmatpush2.bf16.msra.mxu0 0
        %622 = vmatprep.subr.bf16.mxu0 0
        %623 = vmatpush2.bf16.msra.mxu0 0
        %624 = vmatprep.subr.bf16.mxu0 0
        %625 = vmatpush2.bf16.msra.mxu0 0
        %626 = vmatprep.subr.bf16.mxu0 0
        %627 = vmatpush2.bf16.msra.mxu0 0
        %628 = vmatprep.subr.bf16.mxu0 0
        %629 = vmatpush2.bf16.msra.mxu0 0
        %630 = vmatprep.mubr.bf16.mxu0 0
        %631 = vmatmul.mubr.bf16.gmra.mxu0 %v593
        %v632 = vpop.f32.mrf.mxu0
        %v633 = vadd.f32 0.0, %v632
        %v634 = vpop.f32.mrf.mxu0
        %v635 = vpop.f32.mrf.mxu0
        %v636 = vadd.f32 0.0, %v635
        %v637 = vpop.f32.mrf.mxu0
        %638 = vmatprep.mubr.bf16.mxu0 0
        %639 = vmatmul.mubr.bf16.gmra.mxu0 %v596
        %v640 = vpop.f32.mrf.mxu0
        %v641 = vadd.f32 0.0, %v640
        %v642 = vpop.f32.mrf.mxu0
        %v643 = vpop.f32.mrf.mxu0
        %v644 = vadd.f32 0.0, %v643
        %v645 = vpop.f32.mrf.mxu0
        %646 = vdwg.mxu0
        %v647 = vadd.f32 %v567, %v633
        %v648 = vadd.f32 %v570, %v636
        %v649 = vadd.f32 %v575, %v641
        %v650 = vadd.f32 %v578, %v644
        %v652 = vlaneseq
        %v653 = vshrl.u32 %v652, 7
        %v654 = vsub.s32 0, %v653
        %v655 = vrot.slane %v449, %v654
        %v657 = vadd.f32 %v647, %v655
        %v658 = vadd.f32 %v648, %v655
        %v659 = vadd.f32 %v649, %v655
        %v660 = vadd.f32 %v650, %v655
        %v661 = vtanh.pop %v657
        %v662 = vtanh.pop %v658
        %v663 = vtanh.pop %v659
        %v664 = vtanh.pop %v660
        %vm669 = vcmask 1040384
        %v670 = vrot.slane %v661, 7
        %v671 = vrot.slane %v662, 7
        %v672 = vsel %vm669, %v670, %v671
        %v673 = vrot.slane %v663, 7
        %v674 = vsel %vm669, %v671, %v673
        %v675 = vrot.slane %v664, 7
        %v676 = vsel %vm669, %v673, %v675
        %v681 = vsel %vm669, 0.0, %v670
        %vm682 = vcmp.ge.s32.totalorder %v429, 1
        %vm683 = vcmp.ge.s32.totalorder %v430, 1
        %vm684 = vcmp.ge.s32.totalorder %v431, 1
        %vm685 = vcmp.ge.s32.totalorder %v432, 1
        %v686 = vsel %vm682, %v681, 0.0
        %v687 = vsel %vm683, %v672, 0.0
        %v688 = vsel %vm684, %v674, 0.0
        %v689 = vsel %vm685, %v676, 0.0
        %vm690 = vcmask 1046528
        %v691 = vrot.slane %v661, 1
        %v692 = vrot.slane %v662, 1
        %v693 = vsel %vm690, %v691, %v692
        %v694 = vrot.slane %v663, 1
        %v695 = vsel %vm690, %v692, %v694
        %v696 = vrot.slane %v664, 1
        %v697 = vsel %vm690, %v694, %v696
        %v702 = vsel %vm690, %v696, 0.0
        %vm703 = vcmp.lt.s32.totalorder %v429, 15
        %vm704 = vcmp.lt.s32.totalorder %v430, 15
        %vm705 = vcmp.lt.s32.totalorder %v431, 15
        %vm706 = vcmp.lt.s32.totalorder %v432, 15
        %v707 = vsel %vm703, %v693, 0.0
        %v708 = vsel %vm704, %v695, 0.0
        %v709 = vsel %vm705, %v697, 0.0
        %v710 = vsel %vm706, %v702, 0.0
        %v711 = vld [vmem:[#allocation8] sm:$0x1]
        %v712 = vpack.c.bf16 %v687, %v686
        %v713 = vpack.c.bf16 %v689, %v688
        %v714 = vld [vmem:[#allocation6] sm:$0xf]
        %v715 = vld [vmem:[#allocation6 + $0x4] sm:$0xf]
        %v716 = vpack.c.bf16 %v662, %v661
        %v717 = vpack.c.bf16 %v664, %v663
        %s718 = scalar_lea.vmem [#allocation6], 8
        %v719 = vld [vmem:[%s718] sm:$0xf]
        %v720 = vld [vmem:[%s718 + $0x4] sm:$0xf]
        %v723 = vunpack.c.l.b16 %v719
        %v724 = vunpack.c.l.b16 %v720
        %v725 = vpack.c.b16 %v724, %v723
        %v728 = vsel %vm354, %v716, 0
        %v731 = vsel %vm354, %v717, 0
        %733 = vmatprep.subr.bf16.mxu0 0
        %734 = vmatpush1.bf16.msra.mxu0 0
        %735 = vmatprep.subr.bf16.mxu0 0
        %736 = vmatpush1.bf16.msra.mxu0 0
        %737 = vmatprep.subr.bf16.mxu0 0
        %738 = vmatpush1.bf16.msra.mxu0 0
        %739 = vmatprep.subr.bf16.mxu0 0
        %740 = vmatpush1.bf16.msra.mxu0 0
        %741 = vmatprep.subr.bf16.mxu0 0
        %742 = vmatpush1.bf16.msra.mxu0 0
        %743 = vmatprep.subr.bf16.mxu0 0
        %744 = vmatpush1.bf16.msra.mxu0 0
        %745 = vmatprep.subr.bf16.mxu0 0
        %746 = vmatpush1.bf16.msra.mxu0 0
        %747 = vmatprep.subr.bf16.mxu0 0
        %748 = vmatpush1.bf16.msra.mxu0 %v725
        %749 = vmatprep.subr.bf16.mxu0 0
        %750 = vmatpush2.bf16.msra.mxu0 0
        %751 = vmatprep.subr.bf16.mxu0 0
        %752 = vmatpush2.bf16.msra.mxu0 0
        %753 = vmatprep.subr.bf16.mxu0 0
        %754 = vmatpush2.bf16.msra.mxu0 0
        %755 = vmatprep.subr.bf16.mxu0 0
        %756 = vmatpush2.bf16.msra.mxu0 0
        %757 = vmatprep.subr.bf16.mxu0 0
        %758 = vmatpush2.bf16.msra.mxu0 0
        %759 = vmatprep.subr.bf16.mxu0 0
        %760 = vmatpush2.bf16.msra.mxu0 0
        %761 = vmatprep.subr.bf16.mxu0 0
        %762 = vmatpush2.bf16.msra.mxu0 0
        %763 = vmatprep.subr.bf16.mxu0 0
        %764 = vmatpush2.bf16.msra.mxu0 0
        %765 = vmatprep.mubr.bf16.mxu0 0
        %766 = vmatmul.mubr.bf16.gmra.mxu0 %v728
        %v767 = vpop.f32.mrf.mxu0
        %v768 = vadd.f32 0.0, %v767
        %v769 = vpop.f32.mrf.mxu0
        %v770 = vpop.f32.mrf.mxu0
        %v771 = vadd.f32 0.0, %v770
        %v772 = vpop.f32.mrf.mxu0
        %773 = vmatprep.mubr.bf16.mxu0 0
        %774 = vmatmul.mubr.bf16.gmra.mxu0 %v731
        %v775 = vpop.f32.mrf.mxu0
        %v776 = vadd.f32 0.0, %v775
        %v777 = vpop.f32.mrf.mxu0
        %v778 = vpop.f32.mrf.mxu0
        %v779 = vadd.f32 0.0, %v778
        %v780 = vpop.f32.mrf.mxu0
        %781 = vdwg.mxu0
        %v784 = vunpack.c.l.b16 %v714
        %v785 = vunpack.c.l.b16 %v715
        %v786 = vpack.c.b16 %v785, %v784
        %v789 = vsel %vm354, %v712, 0
        %v792 = vsel %vm354, %v713, 0
        %794 = vmatprep.subr.bf16.mxu0 0
        %795 = vmatpush1.bf16.msra.mxu0 0
        %796 = vmatprep.subr.bf16.mxu0 0
        %797 = vmatpush1.bf16.msra.mxu0 0
        %798 = vmatprep.subr.bf16.mxu0 0
        %799 = vmatpush1.bf16.msra.mxu0 0
        %800 = vmatprep.subr.bf16.mxu0 0
        %801 = vmatpush1.bf16.msra.mxu0 0
        %802 = vmatprep.subr.bf16.mxu0 0
        %803 = vmatpush1.bf16.msra.mxu0 0
        %804 = vmatprep.subr.bf16.mxu0 0
        %805 = vmatpush1.bf16.msra.mxu0 0
        %806 = vmatprep.subr.bf16.mxu0 0
        %807 = vmatpush1.bf16.msra.mxu0 0
        %808 = vmatprep.subr.bf16.mxu0 0
        %809 = vmatpush1.bf16.msra.mxu0 %v786
        %810 = vmatprep.subr.bf16.mxu0 0
        %811 = vmatpush2.bf16.msra.mxu0 0
        %812 = vmatprep.subr.bf16.mxu0 0
        %813 = vmatpush2.bf16.msra.mxu0 0
        %814 = vmatprep.subr.bf16.mxu0 0
        %815 = vmatpush2.bf16.msra.mxu0 0
        %816 = vmatprep.subr.bf16.mxu0 0
        %817 = vmatpush2.bf16.msra.mxu0 0
        %818 = vmatprep.subr.bf16.mxu0 0
        %819 = vmatpush2.bf16.msra.mxu0 0
        %820 = vmatprep.subr.bf16.mxu0 0
        %821 = vmatpush2.bf16.msra.mxu0 0
        %822 = vmatprep.subr.bf16.mxu0 0
        %823 = vmatpush2.bf16.msra.mxu0 0
        %824 = vmatprep.subr.bf16.mxu0 0
        %825 = vmatpush2.bf16.msra.mxu0 0
        %826 = vmatprep.mubr.bf16.mxu0 0
        %827 = vmatmul.mubr.bf16.gmra.mxu0 %v789
        %v828 = vpop.f32.mrf.mxu0
        %v829 = vadd.f32 %v768, %v828
        %v830 = vpop.f32.mrf.mxu0
        %v831 = vpop.f32.mrf.mxu0
        %v832 = vadd.f32 %v771, %v831
        %v833 = vpop.f32.mrf.mxu0
        %834 = vmatprep.mubr.bf16.mxu0 0
        %835 = vmatmul.mubr.bf16.gmra.mxu0 %v792
        %v836 = vpop.f32.mrf.mxu0
        %v837 = vadd.f32 %v776, %v836
        %v838 = vpop.f32.mrf.mxu0
        %v839 = vpop.f32.mrf.mxu0
        %v840 = vadd.f32 %v779, %v839
        %v841 = vpop.f32.mrf.mxu0
        %842 = vdwg.mxu0
        %v843 = vpack.c.bf16 %v708, %v707
        %v844 = vpack.c.bf16 %v710, %v709
        %s845 = scalar_lea.vmem [#allocation6], 16
        %v846 = vld [vmem:[%s845] sm:$0xf]
        %v847 = vld [vmem:[%s845 + $0x4] sm:$0xf]
        %v850 = vunpack.c.l.b16 %v846
        %v851 = vunpack.c.l.b16 %v847
        %v852 = vpack.c.b16 %v851, %v850
        %v855 = vsel %vm354, %v843, 0
        %v858 = vsel %vm354, %v844, 0
        %860 = vmatprep.subr.bf16.mxu0 0
        %861 = vmatpush1.bf16.msra.mxu0 0
        %862 = vmatprep.subr.bf16.mxu0 0
        %863 = vmatpush1.bf16.msra.mxu0 0
        %864 = vmatprep.subr.bf16.mxu0 0
        %865 = vmatpush1.bf16.msra.mxu0 0
        %866 = vmatprep.subr.bf16.mxu0 0
        %867 = vmatpush1.bf16.msra.mxu0 0
        %868 = vmatprep.subr.bf16.mxu0 0
        %869 = vmatpush1.bf16.msra.mxu0 0
        %870 = vmatprep.subr.bf16.mxu0 0
        %871 = vmatpush1.bf16.msra.mxu0 0
        %872 = vmatprep.subr.bf16.mxu0 0
        %873 = vmatpush1.bf16.msra.mxu0 0
        %874 = vmatprep.subr.bf16.mxu0 0
        %875 = vmatpush1.bf16.msra.mxu0 %v852
        %876 = vmatprep.subr.bf16.mxu0 0
        %877 = vmatpush2.bf16.msra.mxu0 0
        %878 = vmatprep.subr.bf16.mxu0 0
        %879 = vmatpush2.bf16.msra.mxu0 0
        %880 = vmatprep.subr.bf16.mxu0 0
        %881 = vmatpush2.bf16.msra.mxu0 0
        %882 = vmatprep.subr.bf16.mxu0 0
        %883 = vmatpush2.bf16.msra.mxu0 0
        %884 = vmatprep.subr.bf16.mxu0 0
        %885 = vmatpush2.bf16.msra.mxu0 0
        %886 = vmatprep.subr.bf16.mxu0 0
        %887 = vmatpush2.bf16.msra.mxu0 0
        %888 = vmatprep.subr.bf16.mxu0 0
        %889 = vmatpush2.bf16.msra.mxu0 0
        %890 = vmatprep.subr.bf16.mxu0 0
        %891 = vmatpush2.bf16.msra.mxu0 0
        %892 = vmatprep.mubr.bf16.mxu0 0
        %893 = vmatmul.mubr.bf16.gmra.mxu0 %v855
        %v894 = vpop.f32.mrf.mxu0
        %v895 = vadd.f32 0.0, %v894
        %v896 = vpop.f32.mrf.mxu0
        %v897 = vpop.f32.mrf.mxu0
        %v898 = vadd.f32 0.0, %v897
        %v899 = vpop.f32.mrf.mxu0
        %900 = vmatprep.mubr.bf16.mxu0 0
        %901 = vmatmul.mubr.bf16.gmra.mxu0 %v858
        %v902 = vpop.f32.mrf.mxu0
        %v903 = vadd.f32 0.0, %v902
        %v904 = vpop.f32.mrf.mxu0
        %v905 = vpop.f32.mrf.mxu0
        %v906 = vadd.f32 0.0, %v905
        %v907 = vpop.f32.mrf.mxu0
        %908 = vdwg.mxu0
        %v909 = vadd.f32 %v829, %v895
        %v910 = vadd.f32 %v832, %v898
        %v911 = vadd.f32 %v837, %v903
        %v912 = vadd.f32 %v840, %v906
        %v914 = vlaneseq
        %v915 = vshrl.u32 %v914, 7
        %v916 = vsub.s32 0, %v915
        %v917 = vrot.slane %v711, %v916
        %v919 = vadd.f32 %v909, %v917
        %v920 = vadd.f32 %v910, %v917
        %v921 = vadd.f32 %v911, %v917
        %v922 = vadd.f32 %v912, %v917
        %v923 = vtanh.pop %v919
        %v924 = vtanh.pop %v920
        %v925 = vtanh.pop %v921
        %v926 = vtanh.pop %v922
        %v927 = vadd.f32 %v923, %v445
        %v928 = vadd.f32 %v924, %v446
        %v929 = vadd.f32 %v925, %v447
        %v930 = vadd.f32 %v926, %v448
        %v935 = vrot.slane %v927, 7
        %v936 = vrot.slane %v928, 7
        %v937 = vsel %vm669, %v935, %v936
        %v938 = vrot.slane %v929, 7
        %v939 = vsel %vm669, %v936, %v938
        %v940 = vrot.slane %v930, 7
        %v941 = vsel %vm669, %v938, %v940
        %v946 = vsel %vm669, 0.0, %v935
        %v947 = vsel %vm682, %v946, 0.0
        %v948 = vsel %vm683, %v937, 0.0
        %v949 = vsel %vm684, %v939, 0.0
        %v950 = vsel %vm685, %v941, 0.0
        %v951 = vrot.slane %v927, 1
        %v952 = vrot.slane %v928, 1
        %v953 = vsel %vm690, %v951, %v952
        %v954 = vrot.slane %v929, 1
        %v955 = vsel %vm690, %v952, %v954
        %v956 = vrot.slane %v930, 1
        %v957 = vsel %vm690, %v954, %v956
        %v962 = vsel %vm690, %v956, 0.0
        %v963 = vsel %vm703, %v953, 0.0
        %v964 = vsel %vm704, %v955, 0.0
        %v965 = vsel %vm705, %v957, 0.0
        %v966 = vsel %vm706, %v962, 0.0
        %s967 = scalar_lea.vmem [#allocation3], 1
        %v968 = vld [vmem:[%s967] sm:$0x1]
        %v969 = vpack.c.bf16 %v948, %v947
        %v970 = vpack.c.bf16 %v950, %v949
        %s971 = scalar_lea.vmem %s1, 24
        %v972 = vld [vmem:[%s971] sm:$0xf]
        %v973 = vld [vmem:[%s971 + $0x4] sm:$0xf]
        %v974 = vpack.c.bf16 %v928, %v927
        %v975 = vpack.c.bf16 %v930, %v929
        %s976 = scalar_lea.vmem %s1, 32
        %v977 = vld [vmem:[%s976] sm:$0xf]
        %v978 = vld [vmem:[%s976 + $0x4] sm:$0xf]
        %v981 = vunpack.c.l.b16 %v977
        %v982 = vunpack.c.l.b16 %v978
        %v983 = vpack.c.b16 %v982, %v981
        %v986 = vsel %vm354, %v974, 0
        %v989 = vsel %vm354, %v975, 0
        %991 = vmatprep.subr.bf16.mxu0 0
        %992 = vmatpush1.bf16.msra.mxu0 0
        %993 = vmatprep.subr.bf16.mxu0 0
        %994 = vmatpush1.bf16.msra.mxu0 0
        %995 = vmatprep.subr.bf16.mxu0 0
        %996 = vmatpush1.bf16.msra.mxu0 0
        %997 = vmatprep.subr.bf16.mxu0 0
        %998 = vmatpush1.bf16.msra.mxu0 0
        %999 = vmatprep.subr.bf16.mxu0 0
        %1000 = vmatpush1.bf16.msra.mxu0 0
        %1001 = vmatprep.subr.bf16.mxu0 0
        %1002 = vmatpush1.bf16.msra.mxu0 0
        %1003 = vmatprep.subr.bf16.mxu0 0
        %1004 = vmatpush1.bf16.msra.mxu0 0
        %1005 = vmatprep.subr.bf16.mxu0 0
        %1006 = vmatpush1.bf16.msra.mxu0 %v983
        %1007 = vmatprep.subr.bf16.mxu0 0
        %1008 = vmatpush2.bf16.msra.mxu0 0
        %1009 = vmatprep.subr.bf16.mxu0 0
        %1010 = vmatpush2.bf16.msra.mxu0 0
        %1011 = vmatprep.subr.bf16.mxu0 0
        %1012 = vmatpush2.bf16.msra.mxu0 0
        %1013 = vmatprep.subr.bf16.mxu0 0
        %1014 = vmatpush2.bf16.msra.mxu0 0
        %1015 = vmatprep.subr.bf16.mxu0 0
        %1016 = vmatpush2.bf16.msra.mxu0 0
        %1017 = vmatprep.subr.bf16.mxu0 0
        %1018 = vmatpush2.bf16.msra.mxu0 0
        %1019 = vmatprep.subr.bf16.mxu0 0
        %1020 = vmatpush2.bf16.msra.mxu0 0
        %1021 = vmatprep.subr.bf16.mxu0 0
        %1022 = vmatpush2.bf16.msra.mxu0 0
        %1023 = vmatprep.mubr.bf16.mxu0 0
        %1024 = vmatmul.mubr.bf16.gmra.mxu0 %v986
        %v1025 = vpop.f32.mrf.mxu0
        %v1026 = vadd.f32 0.0, %v1025
        %v1027 = vpop.f32.mrf.mxu0
        %v1028 = vpop.f32.mrf.mxu0
        %v1029 = vadd.f32 0.0, %v1028
        %v1030 = vpop.f32.mrf.mxu0
        %1031 = vmatprep.mubr.bf16.mxu0 0
        %1032 = vmatmul.mubr.bf16.gmra.mxu0 %v989
        %v1033 = vpop.f32.mrf.mxu0
        %v1034 = vadd.f32 0.0, %v1033
        %v1035 = vpop.f32.mrf.mxu0
        %v1036 = vpop.f32.mrf.mxu0
        %v1037 = vadd.f32 0.0, %v1036
        %v1038 = vpop.f32.mrf.mxu0
        %1039 = vdwg.mxu0
        %v1042 = vunpack.c.l.b16 %v972
        %v1043 = vunpack.c.l.b16 %v973
        %v1044 = vpack.c.b16 %v1043, %v1042
        %v1047 = vsel %vm354, %v969, 0
        %v1050 = vsel %vm354, %v970, 0
        %1052 = vmatprep.subr.bf16.mxu0 0
        %1053 = vmatpush1.bf16.msra.mxu0 0
        %1054 = vmatprep.subr.bf16.mxu0 0
        %1055 = vmatpush1.bf16.msra.mxu0 0
        %1056 = vmatprep.subr.bf16.mxu0 0
        %1057 = vmatpush1.bf16.msra.mxu0 0
        %1058 = vmatprep.subr.bf16.mxu0 0
        %1059 = vmatpush1.bf16.msra.mxu0 0
        %1060 = vmatprep.subr.bf16.mxu0 0
        %1061 = vmatpush1.bf16.msra.mxu0 0
        %1062 = vmatprep.subr.bf16.mxu0 0
        %1063 = vmatpush1.bf16.msra.mxu0 0
        %1064 = vmatprep.subr.bf16.mxu0 0
        %1065 = vmatpush1.bf16.msra.mxu0 0
        %1066 = vmatprep.subr.bf16.mxu0 0
        %1067 = vmatpush1.bf16.msra.mxu0 %v1044
        %1068 = vmatprep.subr.bf16.mxu0 0
        %1069 = vmatpush2.bf16.msra.mxu0 0
        %1070 = vmatprep.subr.bf16.mxu0 0
        %1071 = vmatpush2.bf16.msra.mxu0 0
        %1072 = vmatprep.subr.bf16.mxu0 0
        %1073 = vmatpush2.bf16.msra.mxu0 0
        %1074 = vmatprep.subr.bf16.mxu0 0
        %1075 = vmatpush2.bf16.msra.mxu0 0
        %1076 = vmatprep.subr.bf16.mxu0 0
        %1077 = vmatpush2.bf16.msra.mxu0 0
        %1078 = vmatprep.subr.bf16.mxu0 0
        %1079 = vmatpush2.bf16.msra.mxu0 0
        %1080 = vmatprep.subr.bf16.mxu0 0
        %1081 = vmatpush2.bf16.msra.mxu0 0
        %1082 = vmatprep.subr.bf16.mxu0 0
        %1083 = vmatpush2.bf16.msra.mxu0 0
        %1084 = vmatprep.mubr.bf16.mxu0 0
        %1085 = vmatmul.mubr.bf16.gmra.mxu0 %v1047
        %v1086 = vpop.f32.mrf.mxu0
        %v1087 = vadd.f32 %v1026, %v1086
        %v1088 = vpop.f32.mrf.mxu0
        %v1089 = vpop.f32.mrf.mxu0
        %v1090 = vadd.f32 %v1029, %v1089
        %v1091 = vpop.f32.mrf.mxu0
        %1092 = vmatprep.mubr.bf16.mxu0 0
        %1093 = vmatmul.mubr.bf16.gmra.mxu0 %v1050
        %v1094 = vpop.f32.mrf.mxu0
        %v1095 = vadd.f32 %v1034, %v1094
        %v1096 = vpop.f32.mrf.mxu0
        %v1097 = vpop.f32.mrf.mxu0
        %v1098 = vadd.f32 %v1037, %v1097
        %v1099 = vpop.f32.mrf.mxu0
        %1100 = vdwg.mxu0
        %v1101 = vpack.c.bf16 %v964, %v963
        %v1102 = vpack.c.bf16 %v966, %v965
        %s1103 = scalar_lea.vmem %s1, 40
        %v1104 = vld [vmem:[%s1103] sm:$0xf]
        %v1105 = vld [vmem:[%s1103 + $0x4] sm:$0xf]
        %v1108 = vunpack.c.l.b16 %v1104
        %v1109 = vunpack.c.l.b16 %v1105
        %v1110 = vpack.c.b16 %v1109, %v1108
        %v1113 = vsel %vm354, %v1101, 0
        %v1116 = vsel %vm354, %v1102, 0
        %1118 = vmatprep.subr.bf16.mxu0 0
        %1119 = vmatpush1.bf16.msra.mxu0 0
        %1120 = vmatprep.subr.bf16.mxu0 0
        %1121 = vmatpush1.bf16.msra.mxu0 0
        %1122 = vmatprep.subr.bf16.mxu0 0
        %1123 = vmatpush1.bf16.msra.mxu0 0
        %1124 = vmatprep.subr.bf16.mxu0 0
        %1125 = vmatpush1.bf16.msra.mxu0 0
        %1126 = vmatprep.subr.bf16.mxu0 0
        %1127 = vmatpush1.bf16.msra.mxu0 0
        %1128 = vmatprep.subr.bf16.mxu0 0
        %1129 = vmatpush1.bf16.msra.mxu0 0
        %1130 = vmatprep.subr.bf16.mxu0 0
        %1131 = vmatpush1.bf16.msra.mxu0 0
        %1132 = vmatprep.subr.bf16.mxu0 0
        %1133 = vmatpush1.bf16.msra.mxu0 %v1110
        %1134 = vmatprep.subr.bf16.mxu0 0
        %1135 = vmatpush2.bf16.msra.mxu0 0
        %1136 = vmatprep.subr.bf16.mxu0 0
        %1137 = vmatpush2.bf16.msra.mxu0 0
        %1138 = vmatprep.subr.bf16.mxu0 0
        %1139 = vmatpush2.bf16.msra.mxu0 0
        %1140 = vmatprep.subr.bf16.mxu0 0
        %1141 = vmatpush2.bf16.msra.mxu0 0
        %1142 = vmatprep.subr.bf16.mxu0 0
        %1143 = vmatpush2.bf16.msra.mxu0 0
        %1144 = vmatprep.subr.bf16.mxu0 0
        %1145 = vmatpush2.bf16.msra.mxu0 0
        %1146 = vmatprep.subr.bf16.mxu0 0
        %1147 = vmatpush2.bf16.msra.mxu0 0
        %1148 = vmatprep.subr.bf16.mxu0 0
        %1149 = vmatpush2.bf16.msra.mxu0 0
        %1150 = vmatprep.mubr.bf16.mxu0 0
        %1151 = vmatmul.mubr.bf16.gmra.mxu0 %v1113
        %v1152 = vpop.f32.mrf.mxu0
        %v1153 = vadd.f32 0.0, %v1152
        %v1154 = vpop.f32.mrf.mxu0
        %v1155 = vpop.f32.mrf.mxu0
        %v1156 = vadd.f32 0.0, %v1155
        %v1157 = vpop.f32.mrf.mxu0
        %1158 = vmatprep.mubr.bf16.mxu0 0
        %1159 = vmatmul.mubr.bf16.gmra.mxu0 %v1116
        %v1160 = vpop.f32.mrf.mxu0
        %v1161 = vadd.f32 0.0, %v1160
        %v1162 = vpop.f32.mrf.mxu0
        %v1163 = vpop.f32.mrf.mxu0
        %v1164 = vadd.f32 0.0, %v1163
        %v1165 = vpop.f32.mrf.mxu0
        %1166 = vdwg.mxu0
        %v1167 = vadd.f32 %v1087, %v1153
        %v1168 = vadd.f32 %v1090, %v1156
        %v1169 = vadd.f32 %v1095, %v1161
        %v1170 = vadd.f32 %v1098, %v1164
        %v1172 = vlaneseq
        %v1173 = vshrl.u32 %v1172, 7
        %v1174 = vsub.s32 0, %v1173
        %v1175 = vrot.slane %v968, %v1174
        %v1177 = vadd.f32 %v1167, %v1175
        %v1178 = vadd.f32 %v1168, %v1175
        %v1179 = vadd.f32 %v1169, %v1175
        %v1180 = vadd.f32 %v1170, %v1175
        %v1181 = vtanh.pop %v1177
        %v1182 = vtanh.pop %v1178
        %v1183 = vtanh.pop %v1179
        %v1184 = vtanh.pop %v1180
        %v1189 = vrot.slane %v1181, 7
        %v1190 = vrot.slane %v1182, 7
        %v1191 = vsel %vm669, %v1189, %v1190
        %v1192 = vrot.slane %v1183, 7
        %v1193 = vsel %vm669, %v1190, %v1192
        %v1194 = vrot.slane %v1184, 7
        %v1195 = vsel %vm669, %v1192, %v1194
        %v1200 = vsel %vm669, 0.0, %v1189
        %v1201 = vsel %vm682, %v1200, 0.0
        %v1202 = vsel %vm683, %v1191, 0.0
        %v1203 = vsel %vm684, %v1193, 0.0
        %v1204 = vsel %vm685, %v1195, 0.0
        %v1205 = vrot.slane %v1181, 1
        %v1206 = vrot.slane %v1182, 1
        %v1207 = vsel %vm690, %v1205, %v1206
        %v1208 = vrot.slane %v1183, 1
        %v1209 = vsel %vm690, %v1206, %v1208
        %v1210 = vrot.slane %v1184, 1
        %v1211 = vsel %vm690, %v1208, %v1210
        %v1216 = vsel %vm690, %v1210, 0.0
        %v1217 = vsel %vm703, %v1207, 0.0
        %v1218 = vsel %vm704, %v1209, 0.0
        %v1219 = vsel %vm705, %v1211, 0.0
        %v1220 = vsel %vm706, %v1216, 0.0
        %s1221 = scalar_lea.vmem [#allocation8], 1
        %v1222 = vld [vmem:[%s1221] sm:$0x1]
        %v1223 = vpack.c.bf16 %v1202, %v1201
        %v1224 = vpack.c.bf16 %v1204, %v1203
        %s1225 = scalar_lea.vmem [#allocation6], 24
        %v1226 = vld [vmem:[%s1225] sm:$0xf]
        %v1227 = vld [vmem:[%s1225 + $0x4] sm:$0xf]
        %v1228 = vpack.c.bf16 %v1182, %v1181
        %v1229 = vpack.c.bf16 %v1184, %v1183
        %s1230 = scalar_lea.vmem [#allocation6], 32
        %v1231 = vld [vmem:[%s1230] sm:$0xf]
        %v1232 = vld [vmem:[%s1230 + $0x4] sm:$0xf]
        %v1235 = vunpack.c.l.b16 %v1231
        %v1236 = vunpack.c.l.b16 %v1232
        %v1237 = vpack.c.b16 %v1236, %v1235
        %v1240 = vsel %vm354, %v1228, 0
        %v1243 = vsel %vm354, %v1229, 0
        %1245 = vmatprep.subr.bf16.mxu0 0
        %1246 = vmatpush1.bf16.msra.mxu0 0
        %1247 = vmatprep.subr.bf16.mxu0 0
        %1248 = vmatpush1.bf16.msra.mxu0 0
        %1249 = vmatprep.subr.bf16.mxu0 0
        %1250 = vmatpush1.bf16.msra.mxu0 0
        %1251 = vmatprep.subr.bf16.mxu0 0
        %1252 = vmatpush1.bf16.msra.mxu0 0
        %1253 = vmatprep.subr.bf16.mxu0 0
        %1254 = vmatpush1.bf16.msra.mxu0 0
        %1255 = vmatprep.subr.bf16.mxu0 0
        %1256 = vmatpush1.bf16.msra.mxu0 0
        %1257 = vmatprep.subr.bf16.mxu0 0
        %1258 = vmatpush1.bf16.msra.mxu0 0
        %1259 = vmatprep.subr.bf16.mxu0 0
        %1260 = vmatpush1.bf16.msra.mxu0 %v1237
        %1261 = vmatprep.subr.bf16.mxu0 0
        %1262 = vmatpush2.bf16.msra.mxu0 0
        %1263 = vmatprep.subr.bf16.mxu0 0
        %1264 = vmatpush2.bf16.msra.mxu0 0
        %1265 = vmatprep.subr.bf16.mxu0 0
        %1266 = vmatpush2.bf16.msra.mxu0 0
        %1267 = vmatprep.subr.bf16.mxu0 0
        %1268 = vmatpush2.bf16.msra.mxu0 0
        %1269 = vmatprep.subr.bf16.mxu0 0
        %1270 = vmatpush2.bf16.msra.mxu0 0
        %1271 = vmatprep.subr.bf16.mxu0 0
        %1272 = vmatpush2.bf16.msra.mxu0 0
        %1273 = vmatprep.subr.bf16.mxu0 0
        %1274 = vmatpush2.bf16.msra.mxu0 0
        %1275 = vmatprep.subr.bf16.mxu0 0
        %1276 = vmatpush2.bf16.msra.mxu0 0
        %1277 = vmatprep.mubr.bf16.mxu0 0
        %1278 = vmatmul.mubr.bf16.gmra.mxu0 %v1240
        %v1279 = vpop.f32.mrf.mxu0
        %v1280 = vadd.f32 0.0, %v1279
        %v1281 = vpop.f32.mrf.mxu0
        %v1282 = vpop.f32.mrf.mxu0
        %v1283 = vadd.f32 0.0, %v1282
        %v1284 = vpop.f32.mrf.mxu0
        %1285 = vmatprep.mubr.bf16.mxu0 0
        %1286 = vmatmul.mubr.bf16.gmra.mxu0 %v1243
        %v1287 = vpop.f32.mrf.mxu0
        %v1288 = vadd.f32 0.0, %v1287
        %v1289 = vpop.f32.mrf.mxu0
        %v1290 = vpop.f32.mrf.mxu0
        %v1291 = vadd.f32 0.0, %v1290
        %v1292 = vpop.f32.mrf.mxu0
        %1293 = vdwg.mxu0
        %v1296 = vunpack.c.l.b16 %v1226
        %v1297 = vunpack.c.l.b16 %v1227
        %v1298 = vpack.c.b16 %v1297, %v1296
        %v1301 = vsel %vm354, %v1223, 0
        %v1304 = vsel %vm354, %v1224, 0
        %1306 = vmatprep.subr.bf16.mxu0 0
        %1307 = vmatpush1.bf16.msra.mxu0 0
        %1308 = vmatprep.subr.bf16.mxu0 0
        %1309 = vmatpush1.bf16.msra.mxu0 0
        %1310 = vmatprep.subr.bf16.mxu0 0
        %1311 = vmatpush1.bf16.msra.mxu0 0
        %1312 = vmatprep.subr.bf16.mxu0 0
        %1313 = vmatpush1.bf16.msra.mxu0 0
        %1314 = vmatprep.subr.bf16.mxu0 0
        %1315 = vmatpush1.bf16.msra.mxu0 0
        %1316 = vmatprep.subr.bf16.mxu0 0
        %1317 = vmatpush1.bf16.msra.mxu0 0
        %1318 = vmatprep.subr.bf16.mxu0 0
        %1319 = vmatpush1.bf16.msra.mxu0 0
        %1320 = vmatprep.subr.bf16.mxu0 0
        %1321 = vmatpush1.bf16.msra.mxu0 %v1298
        %1322 = vmatprep.subr.bf16.mxu0 0
        %1323 = vmatpush2.bf16.msra.mxu0 0
        %1324 = vmatprep.subr.bf16.mxu0 0
        %1325 = vmatpush2.bf16.msra.mxu0 0
        %1326 = vmatprep.subr.bf16.mxu0 0
        %1327 = vmatpush2.bf16.msra.mxu0 0
        %1328 = vmatprep.subr.bf16.mxu0 0
        %1329 = vmatpush2.bf16.msra.mxu0 0
        %1330 = vmatprep.subr.bf16.mxu0 0
        %1331 = vmatpush2.bf16.msra.mxu0 0
        %1332 = vmatprep.subr.bf16.mxu0 0
        %1333 = vmatpush2.bf16.msra.mxu0 0
        %1334 = vmatprep.subr.bf16.mxu0 0
        %1335 = vmatpush2.bf16.msra.mxu0 0
        %1336 = vmatprep.subr.bf16.mxu0 0
        %1337 = vmatpush2.bf16.msra.mxu0 0
        %1338 = vmatprep.mubr.bf16.mxu0 0
        %1339 = vmatmul.mubr.bf16.gmra.mxu0 %v1301
        %v1340 = vpop.f32.mrf.mxu0
        %v1341 = vadd.f32 %v1280, %v1340
        %v1342 = vpop.f32.mrf.mxu0
        %v1343 = vpop.f32.mrf.mxu0
        %v1344 = vadd.f32 %v1283, %v1343
        %v1345 = vpop.f32.mrf.mxu0
        %1346 = vmatprep.mubr.bf16.mxu0 0
        %1347 = vmatmul.mubr.bf16.gmra.mxu0 %v1304
        %v1348 = vpop.f32.mrf.mxu0
        %v1349 = vadd.f32 %v1288, %v1348
        %v1350 = vpop.f32.mrf.mxu0
        %v1351 = vpop.f32.mrf.mxu0
        %v1352 = vadd.f32 %v1291, %v1351
        %v1353 = vpop.f32.mrf.mxu0
        %1354 = vdwg.mxu0
        %v1355 = vpack.c.bf16 %v1218, %v1217
        %v1356 = vpack.c.bf16 %v1220, %v1219
        %s1357 = scalar_lea.vmem [#allocation6], 40
        %v1358 = vld [vmem:[%s1357] sm:$0xf]
        %v1359 = vld [vmem:[%s1357 + $0x4] sm:$0xf]
        %v1362 = vunpack.c.l.b16 %v1358
        %v1363 = vunpack.c.l.b16 %v1359
        %v1364 = vpack.c.b16 %v1363, %v1362
        %v1367 = vsel %vm354, %v1355, 0
        %v1370 = vsel %vm354, %v1356, 0
        %1372 = vmatprep.subr.bf16.mxu0 0
        %1373 = vmatpush1.bf16.msra.mxu0 0
        %1374 = vmatprep.subr.bf16.mxu0 0
        %1375 = vmatpush1.bf16.msra.mxu0 0
        %1376 = vmatprep.subr.bf16.mxu0 0
        %1377 = vmatpush1.bf16.msra.mxu0 0
        %1378 = vmatprep.subr.bf16.mxu0 0
        %1379 = vmatpush1.bf16.msra.mxu0 0
        %1380 = vmatprep.subr.bf16.mxu0 0
        %1381 = vmatpush1.bf16.msra.mxu0 0
        %1382 = vmatprep.subr.bf16.mxu0 0
        %1383 = vmatpush1.bf16.msra.mxu0 0
        %1384 = vmatprep.subr.bf16.mxu0 0
        %1385 = vmatpush1.bf16.msra.mxu0 0
        %1386 = vmatprep.subr.bf16.mxu0 0
        %1387 = vmatpush1.bf16.msra.mxu0 %v1364
        %1388 = vmatprep.subr.bf16.mxu0 0
        %1389 = vmatpush2.bf16.msra.mxu0 0
        %1390 = vmatprep.subr.bf16.mxu0 0
        %1391 = vmatpush2.bf16.msra.mxu0 0
        %1392 = vmatprep.subr.bf16.mxu0 0
        %1393 = vmatpush2.bf16.msra.mxu0 0
        %1394 = vmatprep.subr.bf16.mxu0 0
        %1395 = vmatpush2.bf16.msra.mxu0 0
        %1396 = vmatprep.subr.bf16.mxu0 0
        %1397 = vmatpush2.bf16.msra.mxu0 0
        %1398 = vmatprep.subr.bf16.mxu0 0
        %1399 = vmatpush2.bf16.msra.mxu0 0
        %1400 = vmatprep.subr.bf16.mxu0 0
        %1401 = vmatpush2.bf16.msra.mxu0 0
        %1402 = vmatprep.subr.bf16.mxu0 0
        %1403 = vmatpush2.bf16.msra.mxu0 0
        %1404 = vmatprep.mubr.bf16.mxu0 0
        %1405 = vmatmul.mubr.bf16.gmra.mxu0 %v1367
        %v1406 = vpop.f32.mrf.mxu0
        %v1407 = vadd.f32 0.0, %v1406
        %v1408 = vpop.f32.mrf.mxu0
        %v1409 = vpop.f32.mrf.mxu0
        %v1410 = vadd.f32 0.0, %v1409
        %v1411 = vpop.f32.mrf.mxu0
        %1412 = vmatprep.mubr.bf16.mxu0 0
        %1413 = vmatmul.mubr.bf16.gmra.mxu0 %v1370
        %v1414 = vpop.f32.mrf.mxu0
        %v1415 = vadd.f32 0.0, %v1414
        %v1416 = vpop.f32.mrf.mxu0
        %v1417 = vpop.f32.mrf.mxu0
        %v1418 = vadd.f32 0.0, %v1417
        %v1419 = vpop.f32.mrf.mxu0
        %1420 = vdwg.mxu0
        %v1421 = vadd.f32 %v1341, %v1407
        %v1422 = vadd.f32 %v1344, %v1410
        %v1423 = vadd.f32 %v1349, %v1415
        %v1424 = vadd.f32 %v1352, %v1418
        %v1426 = vlaneseq
        %v1427 = vshrl.u32 %v1426, 7
        %v1428 = vsub.s32 0, %v1427
        %v1429 = vrot.slane %v1222, %v1428
        %v1431 = vadd.f32 %v1421, %v1429
        %v1432 = vadd.f32 %v1422, %v1429
        %v1433 = vadd.f32 %v1423, %v1429
        %v1434 = vadd.f32 %v1424, %v1429
        %v1435 = vtanh.pop %v1431
        %v1436 = vtanh.pop %v1432
        %v1437 = vtanh.pop %v1433
        %v1438 = vtanh.pop %v1434
        %v1439 = vadd.f32 %v1435, %v927
        %v1440 = vadd.f32 %v1436, %v928
        %v1441 = vadd.f32 %v1437, %v929
        %v1442 = vadd.f32 %v1438, %v930
        %1443 = vst.msk [vmem:[#allocation2 + $0x1] sm:$0xff] %vm354, %v1439
        %1444 = vst.msk [vmem:[#allocation2 + $0x9] sm:$0xff] %vm354, %v1440
        %v1445 = vld [vmem:[#allocation2] ss:$2 sm:$0xff]
        %v1446 = vld [vmem:[%s362] ss:$2 sm:$0xff]
        %v1447 = vld [vmem:[%s366] ss:$2 sm:$0xff]
        %1448 = vst.msk [vmem:[#allocation2 + $0x1] sm:$0xff] %vm354, %v1441
        %1449 = vst.msk [vmem:[#allocation2 + $0x9] sm:$0xff] %vm354, %v1442
        %v1450 = vld [vmem:[#allocation2] ss:$2 sm:$0xff]
        %v1451 = vld [vmem:[%s362] ss:$2 sm:$0xff]
        %v1452 = vld [vmem:[%s366] ss:$2 sm:$0xff]
        %vm1453 = vcmp.lt.s32.totalorder %v381, 0
        %v1454 = vsub.s32 0, %v381
        %v1455 = vsel %vm1453, %v1454, %v381
        %v1456 = vshrl.u32 %v1455, 3
        %v1457 = vand.u32 %v1455, 7
        %v1458 = vsub.s32 0, %v1457
        %v1459 = vsel %vm1453, %v1458, %v1457
        %vm1460 = vcmp.lt.s32.totalorder %v382, 0
        %v1461 = vsub.s32 0, %v382
        %v1462 = vsel %vm1460, %v1461, %v382
        %v1463 = vshrl.u32 %v1462, 3
        %v1464 = vand.u32 %v1462, 7
        %v1465 = vsub.s32 0, %v1464
        %v1466 = vsel %vm1460, %v1465, %v1464
        %vm1467 = vcmp.ne.s32.totalorder %v1459, 0
        %vm1468 = vcmp.ne.s32.totalorder %v1466, 0
        %vm1469 = vcmp.lt.s32.totalorder %v1459, 0
        %vm1470 = vcmp.lt.s32.totalorder %v1466, 0
        %vm1471 = vmand %vm1469, %vm1467
        %vm1472 = vmand %vm1470, %vm1468
        %v1473 = vadd.s32 %v1459, 8
        %v1474 = vadd.s32 %v1466, 8
        %v1475 = vsel %vm1471, %v1473, %v1459
        %v1476 = vsel %vm1472, %v1474, %v1466
        %vm1477 = vcmp.eq.s32.totalorder %v1475, 0
        %vm1478 = vcmp.eq.s32.totalorder %v1476, 0
        %v1479 = vsel %vm1477, %v1446, %v1445
        %v1480 = vsel %vm1478, %v1451, %v1450
        %v1481 = vmax.f32 %v1479, %v1446
        %v1482 = vmax.f32 %v1480, %v1451
        %v1483 = vmax.f32 %v1481, %v1447
        %v1484 = vmax.f32 %v1482, %v1452
        %v1485 = vld [vmem:[%s6] sm:$0x1]
        %v1486 = vpack.c.bf16 %v1450, %v1445
        %v1487 = vld [vmem:[#allocation9] sm:$0xf]
        %v1488 = vld [vmem:[#allocation9 + $0x4] sm:$0xf]
        %v1489 = vpack.c.bf16 %v1451, %v1446
        %s1490 = scalar_lea.vmem [#allocation9], 8
        %v1491 = vld [vmem:[%s1490] sm:$0xf]
        %v1492 = vld [vmem:[%s1490 + $0x4] sm:$0xf]
        %v1495 = vunpack.c.l.b16 %v1491
        %v1496 = vunpack.c.l.b16 %v1492
        %v1497 = vpack.c.b16 %v1496, %v1495
        %v1500 = vsel %vm354, %v1489, 0
        %1502 = vmatprep.subr.bf16.mxu0 0
        %1503 = vmatpush1.bf16.msra.mxu0 0
        %1504 = vmatprep.subr.bf16.mxu0 0
        %1505 = vmatpush1.bf16.msra.mxu0 0
        %1506 = vmatprep.subr.bf16.mxu0 0
        %1507 = vmatpush1.bf16.msra.mxu0 0
        %1508 = vmatprep.subr.bf16.mxu0 0
        %1509 = vmatpush1.bf16.msra.mxu0 0
        %1510 = vmatprep.subr.bf16.mxu0 0
        %1511 = vmatpush1.bf16.msra.mxu0 0
        %1512 = vmatprep.subr.bf16.mxu0 0
        %1513 = vmatpush1.bf16.msra.mxu0 0
        %1514 = vmatprep.subr.bf16.mxu0 0
        %1515 = vmatpush1.bf16.msra.mxu0 0
        %1516 = vmatprep.subr.bf16.mxu0 0
        %1517 = vmatpush1.bf16.msra.mxu0 %v1497
        %1518 = vmatprep.subr.bf16.mxu0 0
        %1519 = vmatpush2.bf16.msra.mxu0 0
        %1520 = vmatprep.subr.bf16.mxu0 0
        %1521 = vmatpush2.bf16.msra.mxu0 0
        %1522 = vmatprep.subr.bf16.mxu0 0
        %1523 = vmatpush2.bf16.msra.mxu0 0
        %1524 = vmatprep.subr.bf16.mxu0 0
        %1525 = vmatpush2.bf16.msra.mxu0 0
        %1526 = vmatprep.subr.bf16.mxu0 0
        %1527 = vmatpush2.bf16.msra.mxu0 0
        %1528 = vmatprep.subr.bf16.mxu0 0
        %1529 = vmatpush2.bf16.msra.mxu0 0
        %1530 = vmatprep.subr.bf16.mxu0 0
        %1531 = vmatpush2.bf16.msra.mxu0 0
        %1532 = vmatprep.subr.bf16.mxu0 0
        %1533 = vmatpush2.bf16.msra.mxu0 0
        %1534 = vmatprep.mubr.bf16.mxu0 0
        %1535 = vmatmul.mubr.bf16.gmra.mxu0 %v1500
        %v1536 = vpop.f32.mrf.mxu0
        %v1537 = vadd.f32 0.0, %v1536
        %v1538 = vpop.f32.mrf.mxu0
        %v1539 = vpop.f32.mrf.mxu0
        %v1540 = vadd.f32 0.0, %v1539
        %v1541 = vpop.f32.mrf.mxu0
        %1542 = vdwg.mxu0
        %v1545 = vunpack.c.l.b16 %v1487
        %v1546 = vunpack.c.l.b16 %v1488
        %v1547 = vpack.c.b16 %v1546, %v1545
        %v1550 = vsel %vm354, %v1486, 0
        %1552 = vmatprep.subr.bf16.mxu0 0
        %1553 = vmatpush1.bf16.msra.mxu0 0
        %1554 = vmatprep.subr.bf16.mxu0 0
        %1555 = vmatpush1.bf16.msra.mxu0 0
        %1556 = vmatprep.subr.bf16.mxu0 0
        %1557 = vmatpush1.bf16.msra.mxu0 0
        %1558 = vmatprep.subr.bf16.mxu0 0
        %1559 = vmatpush1.bf16.msra.mxu0 0
        %1560 = vmatprep.subr.bf16.mxu0 0
        %1561 = vmatpush1.bf16.msra.mxu0 0
        %1562 = vmatprep.subr.bf16.mxu0 0
        %1563 = vmatpush1.bf16.msra.mxu0 0
        %1564 = vmatprep.subr.bf16.mxu0 0
        %1565 = vmatpush1.bf16.msra.mxu0 0
        %1566 = vmatprep.subr.bf16.mxu0 0
        %1567 = vmatpush1.bf16.msra.mxu0 %v1547
        %1568 = vmatprep.subr.bf16.mxu0 0
        %1569 = vmatpush2.bf16.msra.mxu0 0
        %1570 = vmatprep.subr.bf16.mxu0 0
        %1571 = vmatpush2.bf16.msra.mxu0 0
        %1572 = vmatprep.subr.bf16.mxu0 0
        %1573 = vmatpush2.bf16.msra.mxu0 0
        %1574 = vmatprep.subr.bf16.mxu0 0
        %1575 = vmatpush2.bf16.msra.mxu0 0
        %1576 = vmatprep.subr.bf16.mxu0 0
        %1577 = vmatpush2.bf16.msra.mxu0 0
        %1578 = vmatprep.subr.bf16.mxu0 0
        %1579 = vmatpush2.bf16.msra.mxu0 0
        %1580 = vmatprep.subr.bf16.mxu0 0
        %1581 = vmatpush2.bf16.msra.mxu0 0
        %1582 = vmatprep.subr.bf16.mxu0 0
        %1583 = vmatpush2.bf16.msra.mxu0 0
        %1584 = vmatprep.mubr.bf16.mxu0 0
        %1585 = vmatmul.mubr.bf16.gmra.mxu0 %v1550
        %v1586 = vpop.f32.mrf.mxu0
        %v1587 = vadd.f32 %v1537, %v1586
        %v1588 = vpop.f32.mrf.mxu0
        %v1589 = vpop.f32.mrf.mxu0
        %v1590 = vadd.f32 %v1540, %v1589
        %v1591 = vpop.f32.mrf.mxu0
        %1592 = vdwg.mxu0
        %v1593 = vpack.c.bf16 %v1452, %v1447
        %s1594 = scalar_lea.vmem [#allocation9], 16
        %v1595 = vld [vmem:[%s1594] sm:$0xf]
        %v1596 = vld [vmem:[%s1594 + $0x4] sm:$0xf]
        %v1599 = vunpack.c.l.b16 %v1595
        %v1600 = vunpack.c.l.b16 %v1596
        %v1601 = vpack.c.b16 %v1600, %v1599
        %v1604 = vsel %vm354, %v1593, 0
        %1606 = vmatprep.subr.bf16.mxu0 0
        %1607 = vmatpush1.bf16.msra.mxu0 0
        %1608 = vmatprep.subr.bf16.mxu0 0
        %1609 = vmatpush1.bf16.msra.mxu0 0
        %1610 = vmatprep.subr.bf16.mxu0 0
        %1611 = vmatpush1.bf16.msra.mxu0 0
        %1612 = vmatprep.subr.bf16.mxu0 0
        %1613 = vmatpush1.bf16.msra.mxu0 0
        %1614 = vmatprep.subr.bf16.mxu0 0
        %1615 = vmatpush1.bf16.msra.mxu0 0
        %1616 = vmatprep.subr.bf16.mxu0 0
        %1617 = vmatpush1.bf16.msra.mxu0 0
        %1618 = vmatprep.subr.bf16.mxu0 0
        %1619 = vmatpush1.bf16.msra.mxu0 0
        %1620 = vmatprep.subr.bf16.mxu0 0
        %1621 = vmatpush1.bf16.msra.mxu0 %v1601
        %1622 = vmatprep.subr.bf16.mxu0 0
        %1623 = vmatpush2.bf16.msra.mxu0 0
        %1624 = vmatprep.subr.bf16.mxu0 0
        %1625 = vmatpush2.bf16.msra.mxu0 0
        %1626 = vmatprep.subr.bf16.mxu0 0
        %1627 = vmatpush2.bf16.msra.mxu0 0
        %1628 = vmatprep.subr.bf16.mxu0 0
        %1629 = vmatpush2.bf16.msra.mxu0 0
        %1630 = vmatprep.subr.bf16.mxu0 0
        %1631 = vmatpush2.bf16.msra.mxu0 0
        %1632 = vmatprep.subr.bf16.mxu0 0
        %1633 = vmatpush2.bf16.msra.mxu0 0
        %1634 = vmatprep.subr.bf16.mxu0 0
        %1635 = vmatpush2.bf16.msra.mxu0 0
        %1636 = vmatprep.subr.bf16.mxu0 0
        %1637 = vmatpush2.bf16.msra.mxu0 0
        %1638 = vmatprep.mubr.bf16.mxu0 0
        %1639 = vmatmul.mubr.bf16.gmra.mxu0 %v1604
        %v1640 = vpop.f32.mrf.mxu0
        %v1641 = vadd.f32 0.0, %v1640
        %v1642 = vpop.f32.mrf.mxu0
        %v1643 = vpop.f32.mrf.mxu0
        %v1644 = vadd.f32 0.0, %v1643
        %v1645 = vpop.f32.mrf.mxu0
        %1646 = vdwg.mxu0
        %v1647 = vadd.f32 %v1587, %v1641
        %v1648 = vadd.f32 %v1590, %v1644
        %v1650 = vlaneseq
        %v1651 = vshrl.u32 %v1650, 7
        %v1652 = vsub.s32 0, %v1651
        %v1653 = vrot.slane %v1485, %v1652
        %v1655 = vadd.f32 %v1647, %v1653
        %v1656 = vadd.f32 %v1648, %v1653
        %v1657 = vtanh.pop %v1655
        %v1658 = vtanh.pop %v1656
        %v1661 = vrot.slane %v1657, 7
        %v1662 = vrot.slane %v1658, 7
        %v1663 = vsel %vm669, %v1661, %v1662
        %v1666 = vsel %vm669, 0.0, %v1661
        %vm1667 = vcmp.ge.s32.totalorder %v1475, 1
        %vm1668 = vcmp.ge.s32.totalorder %v1476, 1
        %v1669 = vsel %vm1667, %v1666, 0.0
        %v1670 = vsel %vm1668, %v1663, 0.0
        %v1671 = vrot.slane %v1657, 1
        %v1672 = vrot.slane %v1658, 1
        %v1673 = vsel %vm690, %v1671, %v1672
        %v1676 = vsel %vm690, %v1672, 0.0
        %vm1677 = vcmp.lt.s32.totalorder %v1475, 7
        %vm1678 = vcmp.lt.s32.totalorder %v1476, 7
        %v1679 = vsel %vm1677, %v1673, 0.0
        %v1680 = vsel %vm1678, %v1676, 0.0
        %s1681 = scalar_lea.vmem [#allocation8], 2
        %v1682 = vld [vmem:[%s1681] sm:$0x1]
        %v1683 = vpack.c.bf16 %v1670, %v1669
        %s1684 = scalar_lea.vmem [#allocation6], 48
        %v1685 = vld [vmem:[%s1684] sm:$0xf]
        %v1686 = vld [vmem:[%s1684 + $0x4] sm:$0xf]
        %v1687 = vpack.c.bf16 %v1658, %v1657
        %s1688 = scalar_lea.vmem [#allocation6], 56
        %v1689 = vld [vmem:[%s1688] sm:$0xf]
        %v1690 = vld [vmem:[%s1688 + $0x4] sm:$0xf]
        %v1693 = vunpack.c.l.b16 %v1689
        %v1694 = vunpack.c.l.b16 %v1690
        %v1695 = vpack.c.b16 %v1694, %v1693
        %v1698 = vsel %vm354, %v1687, 0
        %1700 = vmatprep.subr.bf16.mxu0 0
        %1701 = vmatpush1.bf16.msra.mxu0 0
        %1702 = vmatprep.subr.bf16.mxu0 0
        %1703 = vmatpush1.bf16.msra.mxu0 0
        %1704 = vmatprep.subr.bf16.mxu0 0
        %1705 = vmatpush1.bf16.msra.mxu0 0
        %1706 = vmatprep.subr.bf16.mxu0 0
        %1707 = vmatpush1.bf16.msra.mxu0 0
        %1708 = vmatprep.subr.bf16.mxu0 0
        %1709 = vmatpush1.bf16.msra.mxu0 0
        %1710 = vmatprep.subr.bf16.mxu0 0
        %1711 = vmatpush1.bf16.msra.mxu0 0
        %1712 = vmatprep.subr.bf16.mxu0 0
        %1713 = vmatpush1.bf16.msra.mxu0 0
        %1714 = vmatprep.subr.bf16.mxu0 0
        %1715 = vmatpush1.bf16.msra.mxu0 %v1695
        %1716 = vmatprep.subr.bf16.mxu0 0
        %1717 = vmatpush2.bf16.msra.mxu0 0
        %1718 = vmatprep.subr.bf16.mxu0 0
        %1719 = vmatpush2.bf16.msra.mxu0 0
        %1720 = vmatprep.subr.bf16.mxu0 0
        %1721 = vmatpush2.bf16.msra.mxu0 0
        %1722 = vmatprep.subr.bf16.mxu0 0
        %1723 = vmatpush2.bf16.msra.mxu0 0
        %1724 = vmatprep.subr.bf16.mxu0 0
        %1725 = vmatpush2.bf16.msra.mxu0 0
        %1726 = vmatprep.subr.bf16.mxu0 0
        %1727 = vmatpush2.bf16.msra.mxu0 0
        %1728 = vmatprep.subr.bf16.mxu0 0
        %1729 = vmatpush2.bf16.msra.mxu0 0
        %1730 = vmatprep.subr.bf16.mxu0 0
        %1731 = vmatpush2.bf16.msra.mxu0 0
        %1732 = vmatprep.mubr.bf16.mxu0 0
        %1733 = vmatmul.mubr.bf16.gmra.mxu0 %v1698
        %v1734 = vpop.f32.mrf.mxu0
        %v1735 = vadd.f32 0.0, %v1734
        %v1736 = vpop.f32.mrf.mxu0
        %v1737 = vpop.f32.mrf.mxu0
        %v1738 = vadd.f32 0.0, %v1737
        %v1739 = vpop.f32.mrf.mxu0
        %1740 = vdwg.mxu0
        %v1743 = vunpack.c.l.b16 %v1685
        %v1744 = vunpack.c.l.b16 %v1686
        %v1745 = vpack.c.b16 %v1744, %v1743
        %v1748 = vsel %vm354, %v1683, 0
        %1750 = vmatprep.subr.bf16.mxu0 0
        %1751 = vmatpush1.bf16.msra.mxu0 0
        %1752 = vmatprep.subr.bf16.mxu0 0
        %1753 = vmatpush1.bf16.msra.mxu0 0
        %1754 = vmatprep.subr.bf16.mxu0 0
        %1755 = vmatpush1.bf16.msra.mxu0 0
        %1756 = vmatprep.subr.bf16.mxu0 0
        %1757 = vmatpush1.bf16.msra.mxu0 0
        %1758 = vmatprep.subr.bf16.mxu0 0
        %1759 = vmatpush1.bf16.msra.mxu0 0
        %1760 = vmatprep.subr.bf16.mxu0 0
        %1761 = vmatpush1.bf16.msra.mxu0 0
        %1762 = vmatprep.subr.bf16.mxu0 0
        %1763 = vmatpush1.bf16.msra.mxu0 0
        %1764 = vmatprep.subr.bf16.mxu0 0
        %1765 = vmatpush1.bf16.msra.mxu0 %v1745
        %1766 = vmatprep.subr.bf16.mxu0 0
        %1767 = vmatpush2.bf16.msra.mxu0 0
        %1768 = vmatprep.subr.bf16.mxu0 0
        %1769 = vmatpush2.bf16.msra.mxu0 0
        %1770 = vmatprep.subr.bf16.mxu0 0
        %1771 = vmatpush2.bf16.msra.mxu0 0
        %1772 = vmatprep.subr.bf16.mxu0 0
        %1773 = vmatpush2.bf16.msra.mxu0 0
        %1774 = vmatprep.subr.bf16.mxu0 0
        %1775 = vmatpush2.bf16.msra.mxu0 0
        %1776 = vmatprep.subr.bf16.mxu0 0
        %1777 = vmatpush2.bf16.msra.mxu0 0
        %1778 = vmatprep.subr.bf16.mxu0 0
        %1779 = vmatpush2.bf16.msra.mxu0 0
        %1780 = vmatprep.subr.bf16.mxu0 0
        %1781 = vmatpush2.bf16.msra.mxu0 0
        %1782 = vmatprep.mubr.bf16.mxu0 0
        %1783 = vmatmul.mubr.bf16.gmra.mxu0 %v1748
        %v1784 = vpop.f32.mrf.mxu0
        %v1785 = vadd.f32 %v1735, %v1784
        %v1786 = vpop.f32.mrf.mxu0
        %v1787 = vpop.f32.mrf.mxu0
        %v1788 = vadd.f32 %v1738, %v1787
        %v1789 = vpop.f32.mrf.mxu0
        %1790 = vdwg.mxu0
        %v1791 = vpack.c.bf16 %v1680, %v1679
        %s1792 = scalar_lea.vmem [#allocation6], 64
        %v1793 = vld [vmem:[%s1792] sm:$0xf]
        %v1794 = vld [vmem:[%s1792 + $0x4] sm:$0xf]
        %v1797 = vunpack.c.l.b16 %v1793
        %v1798 = vunpack.c.l.b16 %v1794
        %v1799 = vpack.c.b16 %v1798, %v1797
        %v1802 = vsel %vm354, %v1791, 0
        %1804 = vmatprep.subr.bf16.mxu0 0
        %1805 = vmatpush1.bf16.msra.mxu0 0
        %1806 = vmatprep.subr.bf16.mxu0 0
        %1807 = vmatpush1.bf16.msra.mxu0 0
        %1808 = vmatprep.subr.bf16.mxu0 0
        %1809 = vmatpush1.bf16.msra.mxu0 0
        %1810 = vmatprep.subr.bf16.mxu0 0
        %1811 = vmatpush1.bf16.msra.mxu0 0
        %1812 = vmatprep.subr.bf16.mxu0 0
        %1813 = vmatpush1.bf16.msra.mxu0 0
        %1814 = vmatprep.subr.bf16.mxu0 0
        %1815 = vmatpush1.bf16.msra.mxu0 0
        %1816 = vmatprep.subr.bf16.mxu0 0
        %1817 = vmatpush1.bf16.msra.mxu0 0
        %1818 = vmatprep.subr.bf16.mxu0 0
        %1819 = vmatpush1.bf16.msra.mxu0 %v1799
        %1820 = vmatprep.subr.bf16.mxu0 0
        %1821 = vmatpush2.bf16.msra.mxu0 0
        %1822 = vmatprep.subr.bf16.mxu0 0
        %1823 = vmatpush2.bf16.msra.mxu0 0
        %1824 = vmatprep.subr.bf16.mxu0 0
        %1825 = vmatpush2.bf16.msra.mxu0 0
        %1826 = vmatprep.subr.bf16.mxu0 0
        %1827 = vmatpush2.bf16.msra.mxu0 0
        %1828 = vmatprep.subr.bf16.mxu0 0
        %1829 = vmatpush2.bf16.msra.mxu0 0
        %1830 = vmatprep.subr.bf16.mxu0 0
        %1831 = vmatpush2.bf16.msra.mxu0 0
        %1832 = vmatprep.subr.bf16.mxu0 0
        %1833 = vmatpush2.bf16.msra.mxu0 0
        %1834 = vmatprep.subr.bf16.mxu0 0
        %1835 = vmatpush2.bf16.msra.mxu0 0
        %1836 = vmatprep.mubr.bf16.mxu0 0
        %1837 = vmatmul.mubr.bf16.gmra.mxu0 %v1802
        %v1838 = vpop.f32.mrf.mxu0
        %v1839 = vadd.f32 0.0, %v1838
        %v1840 = vpop.f32.mrf.mxu0
        %v1841 = vpop.f32.mrf.mxu0
        %v1842 = vadd.f32 0.0, %v1841
        %v1843 = vpop.f32.mrf.mxu0
        %1844 = vdwg.mxu0
        %v1845 = vadd.f32 %v1785, %v1839
        %v1846 = vadd.f32 %v1788, %v1842
        %v1848 = vlaneseq
        %v1849 = vshrl.u32 %v1848, 7
        %v1850 = vsub.s32 0, %v1849
        %v1851 = vrot.slane %v1682, %v1850
        %v1853 = vadd.f32 %v1845, %v1851
        %v1854 = vadd.f32 %v1846, %v1851
        %v1855 = vtanh.pop %v1853
        %v1856 = vtanh.pop %v1854
        %v1857 = vadd.f32 %v1855, %v1483
        %v1858 = vadd.f32 %v1856, %v1484
        %1859 = vrot.lane.b32.xlu0 %v1661, 112
        %v1860 = vpop.permute.xlu0 %1859
        %1861 = vrot.lane.b32.xlu0 %v1663, 112
        %v1862 = vpop.permute.xlu0 %1861
        %v1865 = vsel %vm669, 0.0, %v1860
        %v1866 = vsel %vm1667, %v1865, 0.0
        %v1867 = vsel %vm1668, %v1862, 0.0
        %s1868 = scalar_lea.vmem [#allocation8], 4
        %v1869 = vld [vmem:[%s1868] sm:$0x1]
        %v1870 = vpack.c.bf16 %v1867, %v1866
        %s1871 = scalar_lea.vmem [#allocation6], 96
        %v1872 = vld [vmem:[%s1871] sm:$0xf]
        %v1873 = vld [vmem:[%s1871 + $0x4] sm:$0xf]
        %s1874 = scalar_lea.vmem [#allocation6], 104
        %v1875 = vld [vmem:[%s1874] sm:$0xf]
        %v1876 = vld [vmem:[%s1874 + $0x4] sm:$0xf]
        %1878 = vrot.lane.b32.xlu0 %v1687, 112
        %v1879 = vpop.permute.xlu0 %1878
        %v1882 = vunpack.c.l.b16 %v1875
        %v1883 = vunpack.c.l.b16 %v1876
        %v1884 = vpack.c.b16 %v1883, %v1882
        %v1887 = vsel %vm354, %v1879, 0
        %1889 = vmatprep.subr.bf16.mxu0 0
        %1890 = vmatpush1.bf16.msra.mxu0 0
        %1891 = vmatprep.subr.bf16.mxu0 0
        %1892 = vmatpush1.bf16.msra.mxu0 0
        %1893 = vmatprep.subr.bf16.mxu0 0
        %1894 = vmatpush1.bf16.msra.mxu0 0
        %1895 = vmatprep.subr.bf16.mxu0 0
        %1896 = vmatpush1.bf16.msra.mxu0 0
        %1897 = vmatprep.subr.bf16.mxu0 0
        %1898 = vmatpush1.bf16.msra.mxu0 0
        %1899 = vmatprep.subr.bf16.mxu0 0
        %1900 = vmatpush1.bf16.msra.mxu0 0
        %1901 = vmatprep.subr.bf16.mxu0 0
        %1902 = vmatpush1.bf16.msra.mxu0 0
        %1903 = vmatprep.subr.bf16.mxu0 0
        %1904 = vmatpush1.bf16.msra.mxu0 %v1884
        %1905 = vmatprep.subr.bf16.mxu0 0
        %1906 = vmatpush2.bf16.msra.mxu0 0
        %1907 = vmatprep.subr.bf16.mxu0 0
        %1908 = vmatpush2.bf16.msra.mxu0 0
        %1909 = vmatprep.subr.bf16.mxu0 0
        %1910 = vmatpush2.bf16.msra.mxu0 0
        %1911 = vmatprep.subr.bf16.mxu0 0
        %1912 = vmatpush2.bf16.msra.mxu0 0
        %1913 = vmatprep.subr.bf16.mxu0 0
        %1914 = vmatpush2.bf16.msra.mxu0 0
        %1915 = vmatprep.subr.bf16.mxu0 0
        %1916 = vmatpush2.bf16.msra.mxu0 0
        %1917 = vmatprep.subr.bf16.mxu0 0
        %1918 = vmatpush2.bf16.msra.mxu0 0
        %1919 = vmatprep.subr.bf16.mxu0 0
        %1920 = vmatpush2.bf16.msra.mxu0 0
        %1921 = vmatprep.mubr.bf16.mxu0 0
        %1922 = vmatmul.mubr.bf16.gmra.mxu0 %v1887
        %v1923 = vpop.f32.mrf.mxu0
        %v1924 = vadd.f32 0.0, %v1923
        %v1925 = vpop.f32.mrf.mxu0
        %v1926 = vpop.f32.mrf.mxu0
        %v1927 = vadd.f32 0.0, %v1926
        %v1928 = vpop.f32.mrf.mxu0
        %1929 = vdwg.mxu0
        %v1932 = vunpack.c.l.b16 %v1872
        %v1933 = vunpack.c.l.b16 %v1873
        %v1934 = vpack.c.b16 %v1933, %v1932
        %v1937 = vsel %vm354, %v1870, 0
        %1939 = vmatprep.subr.bf16.mxu0 0
        %1940 = vmatpush1.bf16.msra.mxu0 0
        %1941 = vmatprep.subr.bf16.mxu0 0
        %1942 = vmatpush1.bf16.msra.mxu0 0
        %1943 = vmatprep.subr.bf16.mxu0 0
        %1944 = vmatpush1.bf16.msra.mxu0 0
        %1945 = vmatprep.subr.bf16.mxu0 0
        %1946 = vmatpush1.bf16.msra.mxu0 0
        %1947 = vmatprep.subr.bf16.mxu0 0
        %1948 = vmatpush1.bf16.msra.mxu0 0
        %1949 = vmatprep.subr.bf16.mxu0 0
        %1950 = vmatpush1.bf16.msra.mxu0 0
        %1951 = vmatprep.subr.bf16.mxu0 0
        %1952 = vmatpush1.bf16.msra.mxu0 0
        %1953 = vmatprep.subr.bf16.mxu0 0
        %1954 = vmatpush1.bf16.msra.mxu0 %v1934
        %1955 = vmatprep.subr.bf16.mxu0 0
        %1956 = vmatpush2.bf16.msra.mxu0 0
        %1957 = vmatprep.subr.bf16.mxu0 0
        %1958 = vmatpush2.bf16.msra.mxu0 0
        %1959 = vmatprep.subr.bf16.mxu0 0
        %1960 = vmatpush2.bf16.msra.mxu0 0
        %1961 = vmatprep.subr.bf16.mxu0 0
        %1962 = vmatpush2.bf16.msra.mxu0 0
        %1963 = vmatprep.subr.bf16.mxu0 0
        %1964 = vmatpush2.bf16.msra.mxu0 0
        %1965 = vmatprep.subr.bf16.mxu0 0
        %1966 = vmatpush2.bf16.msra.mxu0 0
        %1967 = vmatprep.subr.bf16.mxu0 0
        %1968 = vmatpush2.bf16.msra.mxu0 0
        %1969 = vmatprep.subr.bf16.mxu0 0
        %1970 = vmatpush2.bf16.msra.mxu0 0
        %1971 = vmatprep.mubr.bf16.mxu0 0
        %1972 = vmatmul.mubr.bf16.gmra.mxu0 %v1937
        %v1973 = vpop.f32.mrf.mxu0
        %v1974 = vadd.f32 %v1924, %v1973
        %v1975 = vpop.f32.mrf.mxu0
        %v1976 = vpop.f32.mrf.mxu0
        %v1977 = vadd.f32 %v1927, %v1976
        %v1978 = vpop.f32.mrf.mxu0
        %1979 = vdwg.mxu0
        %s1980 = scalar_lea.vmem [#allocation6], 112
        %v1981 = vld [vmem:[%s1980] sm:$0xf]
        %v1982 = vld [vmem:[%s1980 + $0x4] sm:$0xf]
        %1984 = vrot.lane.b32.xlu0 %v1791, 112
        %v1985 = vpop.permute.xlu0 %1984
        %v1988 = vunpack.c.l.b16 %v1981
        %v1989 = vunpack.c.l.b16 %v1982
        %v1990 = vpack.c.b16 %v1989, %v1988
        %v1993 = vsel %vm354, %v1985, 0
        %1995 = vmatprep.subr.bf16.mxu0 0
        %1996 = vmatpush1.bf16.msra.mxu0 0
        %1997 = vmatprep.subr.bf16.mxu0 0
        %1998 = vmatpush1.bf16.msra.mxu0 0
        %1999 = vmatprep.subr.bf16.mxu0 0
        %2000 = vmatpush1.bf16.msra.mxu0 0
        %2001 = vmatprep.subr.bf16.mxu0 0
        %2002 = vmatpush1.bf16.msra.mxu0 0
        %2003 = vmatprep.subr.bf16.mxu0 0
        %2004 = vmatpush1.bf16.msra.mxu0 0
        %2005 = vmatprep.subr.bf16.mxu0 0
        %2006 = vmatpush1.bf16.msra.mxu0 0
        %2007 = vmatprep.subr.bf16.mxu0 0
        %2008 = vmatpush1.bf16.msra.mxu0 0
        %2009 = vmatprep.subr.bf16.mxu0 0
        %2010 = vmatpush1.bf16.msra.mxu0 %v1990
        %2011 = vmatprep.subr.bf16.mxu0 0
        %2012 = vmatpush2.bf16.msra.mxu0 0
        %2013 = vmatprep.subr.bf16.mxu0 0
        %2014 = vmatpush2.bf16.msra.mxu0 0
        %2015 = vmatprep.subr.bf16.mxu0 0
        %2016 = vmatpush2.bf16.msra.mxu0 0
        %2017 = vmatprep.subr.bf16.mxu0 0
        %2018 = vmatpush2.bf16.msra.mxu0 0
        %2019 = vmatprep.subr.bf16.mxu0 0
        %2020 = vmatpush2.bf16.msra.mxu0 0
        %2021 = vmatprep.subr.bf16.mxu0 0
        %2022 = vmatpush2.bf16.msra.mxu0 0
        %2023 = vmatprep.subr.bf16.mxu0 0
        %2024 = vmatpush2.bf16.msra.mxu0 0
        %2025 = vmatprep.subr.bf16.mxu0 0
        %2026 = vmatpush2.bf16.msra.mxu0 0
        %2027 = vmatprep.mubr.bf16.mxu0 0
        %2028 = vmatmul.mubr.bf16.gmra.mxu0 %v1993
        %v2029 = vpop.f32.mrf.mxu0
        %v2030 = vadd.f32 0.0, %v2029
        %v2031 = vpop.f32.mrf.mxu0
        %v2032 = vpop.f32.mrf.mxu0
        %v2033 = vadd.f32 0.0, %v2032
        %v2034 = vpop.f32.mrf.mxu0
        %2035 = vdwg.mxu0
        %v2036 = vadd.f32 %v1974, %v2030
        %v2037 = vadd.f32 %v1977, %v2033
        %v2039 = vlaneseq
        %v2040 = vshrl.u32 %v2039, 7
        %v2041 = vsub.s32 0, %v2040
        %v2042 = vrot.slane %v1869, %v2041
        %v2044 = vadd.f32 %v2036, %v2042
        %v2045 = vadd.f32 %v2037, %v2042
        %v2046 = vtanh.pop %v2044
        %v2047 = vtanh.pop %v2045
        %v2048 = vadd.f32 %v2046, %v1483
        %v2049 = vadd.f32 %v2047, %v1484
        %v2052 = vrot.slane %v1857, 7
        %v2053 = vrot.slane %v1858, 7
        %v2054 = vsel %vm669, %v2052, %v2053
        %v2057 = vsel %vm669, 0.0, %v2052
        %v2058 = vsel %vm1667, %v2057, 0.0
        %v2059 = vsel %vm1668, %v2054, 0.0
        %v2060 = vrot.slane %v1857, 1
        %v2061 = vrot.slane %v1858, 1
        %v2062 = vsel %vm690, %v2060, %v2061
        %v2065 = vsel %vm690, %v2061, 0.0
        %v2066 = vsel %vm1677, %v2062, 0.0
        %v2067 = vsel %vm1678, %v2065, 0.0
        %s2068 = scalar_lea.vmem [#allocation3], 3
        %v2069 = vld [vmem:[%s2068] sm:$0x1]
        %v2070 = vpack.c.bf16 %v2059, %v2058
        %s2071 = scalar_lea.vmem %s1, 72
        %v2072 = vld [vmem:[%s2071] sm:$0xf]
        %v2073 = vld [vmem:[%s2071 + $0x4] sm:$0xf]
        %v2074 = vpack.c.bf16 %v1858, %v1857
        %s2075 = scalar_lea.vmem %s1, 80
        %v2076 = vld [vmem:[%s2075] sm:$0xf]
        %v2077 = vld [vmem:[%s2075 + $0x4] sm:$0xf]
        %v2080 = vunpack.c.l.b16 %v2076
        %v2081 = vunpack.c.l.b16 %v2077
        %v2082 = vpack.c.b16 %v2081, %v2080
        %v2085 = vsel %vm354, %v2074, 0
        %2087 = vmatprep.subr.bf16.mxu0 0
        %2088 = vmatpush1.bf16.msra.mxu0 0
        %2089 = vmatprep.subr.bf16.mxu0 0
        %2090 = vmatpush1.bf16.msra.mxu0 0
        %2091 = vmatprep.subr.bf16.mxu0 0
        %2092 = vmatpush1.bf16.msra.mxu0 0
        %2093 = vmatprep.subr.bf16.mxu0 0
        %2094 = vmatpush1.bf16.msra.mxu0 0
        %2095 = vmatprep.subr.bf16.mxu0 0
        %2096 = vmatpush1.bf16.msra.mxu0 0
        %2097 = vmatprep.subr.bf16.mxu0 0
        %2098 = vmatpush1.bf16.msra.mxu0 0
        %2099 = vmatprep.subr.bf16.mxu0 0
        %2100 = vmatpush1.bf16.msra.mxu0 0
        %2101 = vmatprep.subr.bf16.mxu0 0
        %2102 = vmatpush1.bf16.msra.mxu0 %v2082
        %2103 = vmatprep.subr.bf16.mxu0 0
        %2104 = vmatpush2.bf16.msra.mxu0 0
        %2105 = vmatprep.subr.bf16.mxu0 0
        %2106 = vmatpush2.bf16.msra.mxu0 0
        %2107 = vmatprep.subr.bf16.mxu0 0
        %2108 = vmatpush2.bf16.msra.mxu0 0
        %2109 = vmatprep.subr.bf16.mxu0 0
        %2110 = vmatpush2.bf16.msra.mxu0 0
        %2111 = vmatprep.subr.bf16.mxu0 0
        %2112 = vmatpush2.bf16.msra.mxu0 0
        %2113 = vmatprep.subr.bf16.mxu0 0
        %2114 = vmatpush2.bf16.msra.mxu0 0
        %2115 = vmatprep.subr.bf16.mxu0 0
        %2116 = vmatpush2.bf16.msra.mxu0 0
        %2117 = vmatprep.subr.bf16.mxu0 0
        %2118 = vmatpush2.bf16.msra.mxu0 0
        %2119 = vmatprep.mubr.bf16.mxu0 0
        %2120 = vmatmul.mubr.bf16.gmra.mxu0 %v2085
        %v2121 = vpop.f32.mrf.mxu0
        %v2122 = vadd.f32 0.0, %v2121
        %v2123 = vpop.f32.mrf.mxu0
        %v2124 = vpop.f32.mrf.mxu0
        %v2125 = vadd.f32 0.0, %v2124
        %v2126 = vpop.f32.mrf.mxu0
        %2127 = vdwg.mxu0
        %v2130 = vunpack.c.l.b16 %v2072
        %v2131 = vunpack.c.l.b16 %v2073
        %v2132 = vpack.c.b16 %v2131, %v2130
        %v2135 = vsel %vm354, %v2070, 0
        %2137 = vmatprep.subr.bf16.mxu0 0
        %2138 = vmatpush1.bf16.msra.mxu0 0
        %2139 = vmatprep.subr.bf16.mxu0 0
        %2140 = vmatpush1.bf16.msra.mxu0 0
        %2141 = vmatprep.subr.bf16.mxu0 0
        %2142 = vmatpush1.bf16.msra.mxu0 0
        %2143 = vmatprep.subr.bf16.mxu0 0
        %2144 = vmatpush1.bf16.msra.mxu0 0
        %2145 = vmatprep.subr.bf16.mxu0 0
        %2146 = vmatpush1.bf16.msra.mxu0 0
        %2147 = vmatprep.subr.bf16.mxu0 0
        %2148 = vmatpush1.bf16.msra.mxu0 0
        %2149 = vmatprep.subr.bf16.mxu0 0
        %2150 = vmatpush1.bf16.msra.mxu0 0
        %2151 = vmatprep.subr.bf16.mxu0 0
        %2152 = vmatpush1.bf16.msra.mxu0 %v2132
        %2153 = vmatprep.subr.bf16.mxu0 0
        %2154 = vmatpush2.bf16.msra.mxu0 0
        %2155 = vmatprep.subr.bf16.mxu0 0
        %2156 = vmatpush2.bf16.msra.mxu0 0
        %2157 = vmatprep.subr.bf16.mxu0 0
        %2158 = vmatpush2.bf16.msra.mxu0 0
        %2159 = vmatprep.subr.bf16.mxu0 0
        %2160 = vmatpush2.bf16.msra.mxu0 0
        %2161 = vmatprep.subr.bf16.mxu0 0
        %2162 = vmatpush2.bf16.msra.mxu0 0
        %2163 = vmatprep.subr.bf16.mxu0 0
        %2164 = vmatpush2.bf16.msra.mxu0 0
        %2165 = vmatprep.subr.bf16.mxu0 0
        %2166 = vmatpush2.bf16.msra.mxu0 0
        %2167 = vmatprep.subr.bf16.mxu0 0
        %2168 = vmatpush2.bf16.msra.mxu0 0
        %2169 = vmatprep.mubr.bf16.mxu0 0
        %2170 = vmatmul.mubr.bf16.gmra.mxu0 %v2135
        %v2171 = vpop.f32.mrf.mxu0
        %v2172 = vadd.f32 %v2122, %v2171
        %v2173 = vpop.f32.mrf.mxu0
        %v2174 = vpop.f32.mrf.mxu0
        %v2175 = vadd.f32 %v2125, %v2174
        %v2176 = vpop.f32.mrf.mxu0
        %2177 = vdwg.mxu0
        %v2178 = vpack.c.bf16 %v2067, %v2066
        %s2179 = scalar_lea.vmem %s1, 88
        %v2180 = vld [vmem:[%s2179] sm:$0xf]
        %v2181 = vld [vmem:[%s2179 + $0x4] sm:$0xf]
        %v2184 = vunpack.c.l.b16 %v2180
        %v2185 = vunpack.c.l.b16 %v2181
        %v2186 = vpack.c.b16 %v2185, %v2184
        %v2189 = vsel %vm354, %v2178, 0
        %2191 = vmatprep.subr.bf16.mxu0 0
        %2192 = vmatpush1.bf16.msra.mxu0 0
        %2193 = vmatprep.subr.bf16.mxu0 0
        %2194 = vmatpush1.bf16.msra.mxu0 0
        %2195 = vmatprep.subr.bf16.mxu0 0
        %2196 = vmatpush1.bf16.msra.mxu0 0
        %2197 = vmatprep.subr.bf16.mxu0 0
        %2198 = vmatpush1.bf16.msra.mxu0 0
        %2199 = vmatprep.subr.bf16.mxu0 0
        %2200 = vmatpush1.bf16.msra.mxu0 0
        %2201 = vmatprep.subr.bf16.mxu0 0
        %2202 = vmatpush1.bf16.msra.mxu0 0
        %2203 = vmatprep.subr.bf16.mxu0 0
        %2204 = vmatpush1.bf16.msra.mxu0 0
        %2205 = vmatprep.subr.bf16.mxu0 0
        %2206 = vmatpush1.bf16.msra.mxu0 %v2186
        %2207 = vmatprep.subr.bf16.mxu0 0
        %2208 = vmatpush2.bf16.msra.mxu0 0
        %2209 = vmatprep.subr.bf16.mxu0 0
        %2210 = vmatpush2.bf16.msra.mxu0 0
        %2211 = vmatprep.subr.bf16.mxu0 0
        %2212 = vmatpush2.bf16.msra.mxu0 0
        %2213 = vmatprep.subr.bf16.mxu0 0
        %2214 = vmatpush2.bf16.msra.mxu0 0
        %2215 = vmatprep.subr.bf16.mxu0 0
        %2216 = vmatpush2.bf16.msra.mxu0 0
        %2217 = vmatprep.subr.bf16.mxu0 0
        %2218 = vmatpush2.bf16.msra.mxu0 0
        %2219 = vmatprep.subr.bf16.mxu0 0
        %2220 = vmatpush2.bf16.msra.mxu0 0
        %2221 = vmatprep.subr.bf16.mxu0 0
        %2222 = vmatpush2.bf16.msra.mxu0 0
        %2223 = vmatprep.mubr.bf16.mxu0 0
        %2224 = vmatmul.mubr.bf16.gmra.mxu0 %v2189
        %v2225 = vpop.f32.mrf.mxu0
        %v2226 = vadd.f32 0.0, %v2225
        %v2227 = vpop.f32.mrf.mxu0
        %v2228 = vpop.f32.mrf.mxu0
        %v2229 = vadd.f32 0.0, %v2228
        %v2230 = vpop.f32.mrf.mxu0
        %2231 = vdwg.mxu0
        %v2232 = vadd.f32 %v2172, %v2226
        %v2233 = vadd.f32 %v2175, %v2229
        %v2235 = vlaneseq
        %v2236 = vshrl.u32 %v2235, 7
        %v2237 = vsub.s32 0, %v2236
        %v2238 = vrot.slane %v2069, %v2237
        %v2240 = vadd.f32 %v2232, %v2238
        %v2241 = vadd.f32 %v2233, %v2238
        %v2242 = vtanh.pop %v2240
        %v2243 = vtanh.pop %v2241
        %v2246 = vrot.slane %v2242, 7
        %v2247 = vrot.slane %v2243, 7
        %v2248 = vsel %vm669, %v2246, %v2247
        %v2251 = vsel %vm669, 0.0, %v2246
        %v2252 = vsel %vm1667, %v2251, 0.0
        %v2253 = vsel %vm1668, %v2248, 0.0
        %v2254 = vrot.slane %v2242, 1
        %v2255 = vrot.slane %v2243, 1
        %v2256 = vsel %vm690, %v2254, %v2255
        %v2259 = vsel %vm690, %v2255, 0.0
        %v2260 = vsel %vm1677, %v2256, 0.0
        %v2261 = vsel %vm1678, %v2259, 0.0
        %s2262 = scalar_lea.vmem [#allocation8], 3
        %v2263 = vld [vmem:[%s2262] sm:$0x1]
        %v2264 = vpack.c.bf16 %v2253, %v2252
        %s2265 = scalar_lea.vmem [#allocation6], 72
        %v2266 = vld [vmem:[%s2265] sm:$0xf]
        %v2267 = vld [vmem:[%s2265 + $0x4] sm:$0xf]
        %v2268 = vpack.c.bf16 %v2243, %v2242
        %s2269 = scalar_lea.vmem [#allocation6], 80
        %v2270 = vld [vmem:[%s2269] sm:$0xf]
        %v2271 = vld [vmem:[%s2269 + $0x4] sm:$0xf]
        %v2274 = vunpack.c.l.b16 %v2270
        %v2275 = vunpack.c.l.b16 %v2271
        %v2276 = vpack.c.b16 %v2275, %v2274
        %v2279 = vsel %vm354, %v2268, 0
        %2281 = vmatprep.subr.bf16.mxu0 0
        %2282 = vmatpush1.bf16.msra.mxu0 0
        %2283 = vmatprep.subr.bf16.mxu0 0
        %2284 = vmatpush1.bf16.msra.mxu0 0
        %2285 = vmatprep.subr.bf16.mxu0 0
        %2286 = vmatpush1.bf16.msra.mxu0 0
        %2287 = vmatprep.subr.bf16.mxu0 0
        %2288 = vmatpush1.bf16.msra.mxu0 0
        %2289 = vmatprep.subr.bf16.mxu0 0
        %2290 = vmatpush1.bf16.msra.mxu0 0
        %2291 = vmatprep.subr.bf16.mxu0 0
        %2292 = vmatpush1.bf16.msra.mxu0 0
        %2293 = vmatprep.subr.bf16.mxu0 0
        %2294 = vmatpush1.bf16.msra.mxu0 0
        %2295 = vmatprep.subr.bf16.mxu0 0
        %2296 = vmatpush1.bf16.msra.mxu0 %v2276
        %2297 = vmatprep.subr.bf16.mxu0 0
        %2298 = vmatpush2.bf16.msra.mxu0 0
        %2299 = vmatprep.subr.bf16.mxu0 0
        %2300 = vmatpush2.bf16.msra.mxu0 0
        %2301 = vmatprep.subr.bf16.mxu0 0
        %2302 = vmatpush2.bf16.msra.mxu0 0
        %2303 = vmatprep.subr.bf16.mxu0 0
        %2304 = vmatpush2.bf16.msra.mxu0 0
        %2305 = vmatprep.subr.bf16.mxu0 0
        %2306 = vmatpush2.bf16.msra.mxu0 0
        %2307 = vmatprep.subr.bf16.mxu0 0
        %2308 = vmatpush2.bf16.msra.mxu0 0
        %2309 = vmatprep.subr.bf16.mxu0 0
        %2310 = vmatpush2.bf16.msra.mxu0 0
        %2311 = vmatprep.subr.bf16.mxu0 0
        %2312 = vmatpush2.bf16.msra.mxu0 0
        %2313 = vmatprep.mubr.bf16.mxu0 0
        %2314 = vmatmul.mubr.bf16.gmra.mxu0 %v2279
        %v2315 = vpop.f32.mrf.mxu0
        %v2316 = vadd.f32 0.0, %v2315
        %v2317 = vpop.f32.mrf.mxu0
        %v2318 = vpop.f32.mrf.mxu0
        %v2319 = vadd.f32 0.0, %v2318
        %v2320 = vpop.f32.mrf.mxu0
        %2321 = vdwg.mxu0
        %v2324 = vunpack.c.l.b16 %v2266
        %v2325 = vunpack.c.l.b16 %v2267
        %v2326 = vpack.c.b16 %v2325, %v2324
        %v2329 = vsel %vm354, %v2264, 0
        %2331 = vmatprep.subr.bf16.mxu0 0
        %2332 = vmatpush1.bf16.msra.mxu0 0
        %2333 = vmatprep.subr.bf16.mxu0 0
        %2334 = vmatpush1.bf16.msra.mxu0 0
        %2335 = vmatprep.subr.bf16.mxu0 0
        %2336 = vmatpush1.bf16.msra.mxu0 0
        %2337 = vmatprep.subr.bf16.mxu0 0
        %2338 = vmatpush1.bf16.msra.mxu0 0
        %2339 = vmatprep.subr.bf16.mxu0 0
        %2340 = vmatpush1.bf16.msra.mxu0 0
        %2341 = vmatprep.subr.bf16.mxu0 0
        %2342 = vmatpush1.bf16.msra.mxu0 0
        %2343 = vmatprep.subr.bf16.mxu0 0
        %2344 = vmatpush1.bf16.msra.mxu0 0
        %2345 = vmatprep.subr.bf16.mxu0 0
        %2346 = vmatpush1.bf16.msra.mxu0 %v2326
        %2347 = vmatprep.subr.bf16.mxu0 0
        %2348 = vmatpush2.bf16.msra.mxu0 0
        %2349 = vmatprep.subr.bf16.mxu0 0
        %2350 = vmatpush2.bf16.msra.mxu0 0
        %2351 = vmatprep.subr.bf16.mxu0 0
        %2352 = vmatpush2.bf16.msra.mxu0 0
        %2353 = vmatprep.subr.bf16.mxu0 0
        %2354 = vmatpush2.bf16.msra.mxu0 0
        %2355 = vmatprep.subr.bf16.mxu0 0
        %2356 = vmatpush2.bf16.msra.mxu0 0
        %2357 = vmatprep.subr.bf16.mxu0 0
        %2358 = vmatpush2.bf16.msra.mxu0 0
        %2359 = vmatprep.subr.bf16.mxu0 0
        %2360 = vmatpush2.bf16.msra.mxu0 0
        %2361 = vmatprep.subr.bf16.mxu0 0
        %2362 = vmatpush2.bf16.msra.mxu0 0
        %2363 = vmatprep.mubr.bf16.mxu0 0
        %2364 = vmatmul.mubr.bf16.gmra.mxu0 %v2329
        %v2365 = vpop.f32.mrf.mxu0
        %v2366 = vadd.f32 %v2316, %v2365
        %v2367 = vpop.f32.mrf.mxu0
        %v2368 = vpop.f32.mrf.mxu0
        %v2369 = vadd.f32 %v2319, %v2368
        %v2370 = vpop.f32.mrf.mxu0
        %2371 = vdwg.mxu0
        %v2372 = vpack.c.bf16 %v2261, %v2260
        %s2373 = scalar_lea.vmem [#allocation6], 88
        %v2374 = vld [vmem:[%s2373] sm:$0xf]
        %v2375 = vld [vmem:[%s2373 + $0x4] sm:$0xf]
        %v2378 = vunpack.c.l.b16 %v2374
        %v2379 = vunpack.c.l.b16 %v2375
        %v2380 = vpack.c.b16 %v2379, %v2378
        %v2383 = vsel %vm354, %v2372, 0
        %2385 = vmatprep.subr.bf16.mxu0 0
        %2386 = vmatpush1.bf16.msra.mxu0 0
        %2387 = vmatprep.subr.bf16.mxu0 0
        %2388 = vmatpush1.bf16.msra.mxu0 0
        %2389 = vmatprep.subr.bf16.mxu0 0
        %2390 = vmatpush1.bf16.msra.mxu0 0
        %2391 = vmatprep.subr.bf16.mxu0 0
        %2392 = vmatpush1.bf16.msra.mxu0 0
        %2393 = vmatprep.subr.bf16.mxu0 0
        %2394 = vmatpush1.bf16.msra.mxu0 0
        %2395 = vmatprep.subr.bf16.mxu0 0
        %2396 = vmatpush1.bf16.msra.mxu0 0
        %2397 = vmatprep.subr.bf16.mxu0 0
        %2398 = vmatpush1.bf16.msra.mxu0 0
        %2399 = vmatprep.subr.bf16.mxu0 0
        %2400 = vmatpush1.bf16.msra.mxu0 %v2380
        %2401 = vmatprep.subr.bf16.mxu0 0
        %2402 = vmatpush2.bf16.msra.mxu0 0
        %2403 = vmatprep.subr.bf16.mxu0 0
        %2404 = vmatpush2.bf16.msra.mxu0 0
        %2405 = vmatprep.subr.bf16.mxu0 0
        %2406 = vmatpush2.bf16.msra.mxu0 0
        %2407 = vmatprep.subr.bf16.mxu0 0
        %2408 = vmatpush2.bf16.msra.mxu0 0
        %2409 = vmatprep.subr.bf16.mxu0 0
        %2410 = vmatpush2.bf16.msra.mxu0 0
        %2411 = vmatprep.subr.bf16.mxu0 0
        %2412 = vmatpush2.bf16.msra.mxu0 0
        %2413 = vmatprep.subr.bf16.mxu0 0
        %2414 = vmatpush2.bf16.msra.mxu0 0
        %2415 = vmatprep.subr.bf16.mxu0 0
        %2416 = vmatpush2.bf16.msra.mxu0 0
        %2417 = vmatprep.mubr.bf16.mxu0 0
        %2418 = vmatmul.mubr.bf16.gmra.mxu0 %v2383
        %v2419 = vpop.f32.mrf.mxu0
        %v2420 = vadd.f32 0.0, %v2419
        %v2421 = vpop.f32.mrf.mxu0
        %v2422 = vpop.f32.mrf.mxu0
        %v2423 = vadd.f32 0.0, %v2422
        %v2424 = vpop.f32.mrf.mxu0
        %2425 = vdwg.mxu0
        %v2426 = vadd.f32 %v2366, %v2420
        %v2427 = vadd.f32 %v2369, %v2423
        %v2429 = vlaneseq
        %v2430 = vshrl.u32 %v2429, 7
        %v2431 = vsub.s32 0, %v2430
        %v2432 = vrot.slane %v2263, %v2431
        %v2434 = vadd.f32 %v2426, %v2432
        %v2435 = vadd.f32 %v2427, %v2432
        %v2436 = vtanh.pop %v2434
        %v2437 = vtanh.pop %v2435
        %v2438 = vadd.f32 %v2436, %v1857
        %v2439 = vadd.f32 %v2437, %v1858
        %v2442 = vrot.slane %v2048, 7
        %v2443 = vrot.slane %v2049, 7
        %v2444 = vsel %vm669, %v2442, %v2443
        %v2447 = vsel %vm669, 0.0, %v2442
        %v2448 = vsel %vm1667, %v2447, 0.0
        %v2449 = vsel %vm1668, %v2444, 0.0
        %v2450 = vrot.slane %v2048, 1
        %v2451 = vrot.slane %v2049, 1
        %v2452 = vsel %vm690, %v2450, %v2451
        %v2455 = vsel %vm690, %v2451, 0.0
        %v2456 = vsel %vm1677, %v2452, 0.0
        %v2457 = vsel %vm1678, %v2455, 0.0
        %s2458 = scalar_lea.vmem [#allocation3], 5
        %v2459 = vld [vmem:[%s2458] sm:$0x1]
        %v2460 = vpack.c.bf16 %v2449, %v2448
        %s2461 = scalar_lea.vmem %s1, 120
        %v2462 = vld [vmem:[%s2461] sm:$0xf]
        %v2463 = vld [vmem:[%s2461 + $0x4] sm:$0xf]
        %v2464 = vpack.c.bf16 %v2049, %v2048
        %s2465 = scalar_lea.vmem %s1, 128
        %v2466 = vld [vmem:[%s2465] sm:$0xf]
        %v2467 = vld [vmem:[%s2465 + $0x4] sm:$0xf]
        %v2470 = vunpack.c.l.b16 %v2466
        %v2471 = vunpack.c.l.b16 %v2467
        %v2472 = vpack.c.b16 %v2471, %v2470
        %v2475 = vsel %vm354, %v2464, 0
        %2477 = vmatprep.subr.bf16.mxu0 0
        %2478 = vmatpush1.bf16.msra.mxu0 0
        %2479 = vmatprep.subr.bf16.mxu0 0
        %2480 = vmatpush1.bf16.msra.mxu0 0
        %2481 = vmatprep.subr.bf16.mxu0 0
        %2482 = vmatpush1.bf16.msra.mxu0 0
        %2483 = vmatprep.subr.bf16.mxu0 0
        %2484 = vmatpush1.bf16.msra.mxu0 0
        %2485 = vmatprep.subr.bf16.mxu0 0
        %2486 = vmatpush1.bf16.msra.mxu0 0
        %2487 = vmatprep.subr.bf16.mxu0 0
        %2488 = vmatpush1.bf16.msra.mxu0 0
        %2489 = vmatprep.subr.bf16.mxu0 0
        %2490 = vmatpush1.bf16.msra.mxu0 0
        %2491 = vmatprep.subr.bf16.mxu0 0
        %2492 = vmatpush1.bf16.msra.mxu0 %v2472
        %2493 = vmatprep.subr.bf16.mxu0 0
        %2494 = vmatpush2.bf16.msra.mxu0 0
        %2495 = vmatprep.subr.bf16.mxu0 0
        %2496 = vmatpush2.bf16.msra.mxu0 0
        %2497 = vmatprep.subr.bf16.mxu0 0
        %2498 = vmatpush2.bf16.msra.mxu0 0
        %2499 = vmatprep.subr.bf16.mxu0 0
        %2500 = vmatpush2.bf16.msra.mxu0 0
        %2501 = vmatprep.subr.bf16.mxu0 0
        %2502 = vmatpush2.bf16.msra.mxu0 0
        %2503 = vmatprep.subr.bf16.mxu0 0
        %2504 = vmatpush2.bf16.msra.mxu0 0
        %2505 = vmatprep.subr.bf16.mxu0 0
        %2506 = vmatpush2.bf16.msra.mxu0 0
        %2507 = vmatprep.subr.bf16.mxu0 0
        %2508 = vmatpush2.bf16.msra.mxu0 0
        %2509 = vmatprep.mubr.bf16.mxu0 0
        %2510 = vmatmul.mubr.bf16.gmra.mxu0 %v2475
        %v2511 = vpop.f32.mrf.mxu0
        %v2512 = vadd.f32 0.0, %v2511
        %v2513 = vpop.f32.mrf.mxu0
        %v2514 = vpop.f32.mrf.mxu0
        %v2515 = vadd.f32 0.0, %v2514
        %v2516 = vpop.f32.mrf.mxu0
        %2517 = vdwg.mxu0
        %v2520 = vunpack.c.l.b16 %v2462
        %v2521 = vunpack.c.l.b16 %v2463
        %v2522 = vpack.c.b16 %v2521, %v2520
        %v2525 = vsel %vm354, %v2460, 0
        %2527 = vmatprep.subr.bf16.mxu0 0
        %2528 = vmatpush1.bf16.msra.mxu0 0
        %2529 = vmatprep.subr.bf16.mxu0 0
        %2530 = vmatpush1.bf16.msra.mxu0 0
        %2531 = vmatprep.subr.bf16.mxu0 0
        %2532 = vmatpush1.bf16.msra.mxu0 0
        %2533 = vmatprep.subr.bf16.mxu0 0
        %2534 = vmatpush1.bf16.msra.mxu0 0
        %2535 = vmatprep.subr.bf16.mxu0 0
        %2536 = vmatpush1.bf16.msra.mxu0 0
        %2537 = vmatprep.subr.bf16.mxu0 0
        %2538 = vmatpush1.bf16.msra.mxu0 0
        %2539 = vmatprep.subr.bf16.mxu0 0
        %2540 = vmatpush1.bf16.msra.mxu0 0
        %2541 = vmatprep.subr.bf16.mxu0 0
        %2542 = vmatpush1.bf16.msra.mxu0 %v2522
        %2543 = vmatprep.subr.bf16.mxu0 0
        %2544 = vmatpush2.bf16.msra.mxu0 0
        %2545 = vmatprep.subr.bf16.mxu0 0
        %2546 = vmatpush2.bf16.msra.mxu0 0
        %2547 = vmatprep.subr.bf16.mxu0 0
        %2548 = vmatpush2.bf16.msra.mxu0 0
        %2549 = vmatprep.subr.bf16.mxu0 0
        %2550 = vmatpush2.bf16.msra.mxu0 0
        %2551 = vmatprep.subr.bf16.mxu0 0
        %2552 = vmatpush2.bf16.msra.mxu0 0
        %2553 = vmatprep.subr.bf16.mxu0 0
        %2554 = vmatpush2.bf16.msra.mxu0 0
        %2555 = vmatprep.subr.bf16.mxu0 0
        %2556 = vmatpush2.bf16.msra.mxu0 0
        %2557 = vmatprep.subr.bf16.mxu0 0
        %2558 = vmatpush2.bf16.msra.mxu0 0
        %2559 = vmatprep.mubr.bf16.mxu0 0
        %2560 = vmatmul.mubr.bf16.gmra.mxu0 %v2525
        %v2561 = vpop.f32.mrf.mxu0
        %v2562 = vadd.f32 %v2512, %v2561
        %v2563 = vpop.f32.mrf.mxu0
        %v2564 = vpop.f32.mrf.mxu0
        %v2565 = vadd.f32 %v2515, %v2564
        %v2566 = vpop.f32.mrf.mxu0
        %2567 = vdwg.mxu0
        %v2568 = vpack.c.bf16 %v2457, %v2456
        %s2569 = scalar_lea.vmem %s1, 136
        %v2570 = vld [vmem:[%s2569] sm:$0xf]
        %v2571 = vld [vmem:[%s2569 + $0x4] sm:$0xf]
        %v2574 = vunpack.c.l.b16 %v2570
        %v2575 = vunpack.c.l.b16 %v2571
        %v2576 = vpack.c.b16 %v2575, %v2574
        %v2579 = vsel %vm354, %v2568, 0
        %2581 = vmatprep.subr.bf16.mxu0 0
        %2582 = vmatpush1.bf16.msra.mxu0 0
        %2583 = vmatprep.subr.bf16.mxu0 0
        %2584 = vmatpush1.bf16.msra.mxu0 0
        %2585 = vmatprep.subr.bf16.mxu0 0
        %2586 = vmatpush1.bf16.msra.mxu0 0
        %2587 = vmatprep.subr.bf16.mxu0 0
        %2588 = vmatpush1.bf16.msra.mxu0 0
        %2589 = vmatprep.subr.bf16.mxu0 0
        %2590 = vmatpush1.bf16.msra.mxu0 0
        %2591 = vmatprep.subr.bf16.mxu0 0
        %2592 = vmatpush1.bf16.msra.mxu0 0
        %2593 = vmatprep.subr.bf16.mxu0 0
        %2594 = vmatpush1.bf16.msra.mxu0 0
        %2595 = vmatprep.subr.bf16.mxu0 0
        %2596 = vmatpush1.bf16.msra.mxu0 %v2576
        %2597 = vmatprep.subr.bf16.mxu0 0
        %2598 = vmatpush2.bf16.msra.mxu0 0
        %2599 = vmatprep.subr.bf16.mxu0 0
        %2600 = vmatpush2.bf16.msra.mxu0 0
        %2601 = vmatprep.subr.bf16.mxu0 0
        %2602 = vmatpush2.bf16.msra.mxu0 0
        %2603 = vmatprep.subr.bf16.mxu0 0
        %2604 = vmatpush2.bf16.msra.mxu0 0
        %2605 = vmatprep.subr.bf16.mxu0 0
        %2606 = vmatpush2.bf16.msra.mxu0 0
        %2607 = vmatprep.subr.bf16.mxu0 0
        %2608 = vmatpush2.bf16.msra.mxu0 0
        %2609 = vmatprep.subr.bf16.mxu0 0
        %2610 = vmatpush2.bf16.msra.mxu0 0
        %2611 = vmatprep.subr.bf16.mxu0 0
        %2612 = vmatpush2.bf16.msra.mxu0 0
        %2613 = vmatprep.mubr.bf16.mxu0 0
        %2614 = vmatmul.mubr.bf16.gmra.mxu0 %v2579
        %v2615 = vpop.f32.mrf.mxu0
        %v2616 = vadd.f32 0.0, %v2615
        %v2617 = vpop.f32.mrf.mxu0
        %v2618 = vpop.f32.mrf.mxu0
        %v2619 = vadd.f32 0.0, %v2618
        %v2620 = vpop.f32.mrf.mxu0
        %2621 = vdwg.mxu0
        %v2622 = vadd.f32 %v2562, %v2616
        %v2623 = vadd.f32 %v2565, %v2619
        %v2625 = vlaneseq
        %v2626 = vshrl.u32 %v2625, 7
        %v2627 = vsub.s32 0, %v2626
        %v2628 = vrot.slane %v2459, %v2627
        %v2630 = vadd.f32 %v2622, %v2628
        %v2631 = vadd.f32 %v2623, %v2628
        %v2632 = vtanh.pop %v2630
        %v2633 = vtanh.pop %v2631
        %v2636 = vrot.slane %v2632, 7
        %v2637 = vrot.slane %v2633, 7
        %v2638 = vsel %vm669, %v2636, %v2637
        %v2641 = vsel %vm669, 0.0, %v2636
        %v2642 = vsel %vm1667, %v2641, 0.0
        %v2643 = vsel %vm1668, %v2638, 0.0
        %v2644 = vrot.slane %v2632, 1
        %v2645 = vrot.slane %v2633, 1
        %v2646 = vsel %vm690, %v2644, %v2645
        %v2649 = vsel %vm690, %v2645, 0.0
        %v2650 = vsel %vm1677, %v2646, 0.0
        %v2651 = vsel %vm1678, %v2649, 0.0
        %s2652 = scalar_lea.vmem [#allocation8], 5
        %v2653 = vld [vmem:[%s2652] sm:$0x1]
        %v2654 = vpack.c.bf16 %v2643, %v2642
        %s2655 = scalar_lea.vmem [#allocation6], 120
        %v2656 = vld [vmem:[%s2655] sm:$0xf]
        %v2657 = vld [vmem:[%s2655 + $0x4] sm:$0xf]
        %v2658 = vpack.c.bf16 %v2633, %v2632
        %s2659 = scalar_lea.vmem [#allocation6], 128
        %v2660 = vld [vmem:[%s2659] sm:$0xf]
        %v2661 = vld [vmem:[%s2659 + $0x4] sm:$0xf]
        %v2664 = vunpack.c.l.b16 %v2660
        %v2665 = vunpack.c.l.b16 %v2661
        %v2666 = vpack.c.b16 %v2665, %v2664
        %v2669 = vsel %vm354, %v2658, 0
        %2671 = vmatprep.subr.bf16.mxu0 0
        %2672 = vmatpush1.bf16.msra.mxu0 0
        %2673 = vmatprep.subr.bf16.mxu0 0
        %2674 = vmatpush1.bf16.msra.mxu0 0
        %2675 = vmatprep.subr.bf16.mxu0 0
        %2676 = vmatpush1.bf16.msra.mxu0 0
        %2677 = vmatprep.subr.bf16.mxu0 0
        %2678 = vmatpush1.bf16.msra.mxu0 0
        %2679 = vmatprep.subr.bf16.mxu0 0
        %2680 = vmatpush1.bf16.msra.mxu0 0
        %2681 = vmatprep.subr.bf16.mxu0 0
        %2682 = vmatpush1.bf16.msra.mxu0 0
        %2683 = vmatprep.subr.bf16.mxu0 0
        %2684 = vmatpush1.bf16.msra.mxu0 0
        %2685 = vmatprep.subr.bf16.mxu0 0
        %2686 = vmatpush1.bf16.msra.mxu0 %v2666
        %2687 = vmatprep.subr.bf16.mxu0 0
        %2688 = vmatpush2.bf16.msra.mxu0 0
        %2689 = vmatprep.subr.bf16.mxu0 0
        %2690 = vmatpush2.bf16.msra.mxu0 0
        %2691 = vmatprep.subr.bf16.mxu0 0
        %2692 = vmatpush2.bf16.msra.mxu0 0
        %2693 = vmatprep.subr.bf16.mxu0 0
        %2694 = vmatpush2.bf16.msra.mxu0 0
        %2695 = vmatprep.subr.bf16.mxu0 0
        %2696 = vmatpush2.bf16.msra.mxu0 0
        %2697 = vmatprep.subr.bf16.mxu0 0
        %2698 = vmatpush2.bf16.msra.mxu0 0
        %2699 = vmatprep.subr.bf16.mxu0 0
        %2700 = vmatpush2.bf16.msra.mxu0 0
        %2701 = vmatprep.subr.bf16.mxu0 0
        %2702 = vmatpush2.bf16.msra.mxu0 0
        %2703 = vmatprep.mubr.bf16.mxu0 0
        %2704 = vmatmul.mubr.bf16.gmra.mxu0 %v2669
        %v2705 = vpop.f32.mrf.mxu0
        %v2706 = vadd.f32 0.0, %v2705
        %v2707 = vpop.f32.mrf.mxu0
        %v2708 = vpop.f32.mrf.mxu0
        %v2709 = vadd.f32 0.0, %v2708
        %v2710 = vpop.f32.mrf.mxu0
        %2711 = vdwg.mxu0
        %v2714 = vunpack.c.l.b16 %v2656
        %v2715 = vunpack.c.l.b16 %v2657
        %v2716 = vpack.c.b16 %v2715, %v2714
        %v2719 = vsel %vm354, %v2654, 0
        %2721 = vmatprep.subr.bf16.mxu0 0
        %2722 = vmatpush1.bf16.msra.mxu0 0
        %2723 = vmatprep.subr.bf16.mxu0 0
        %2724 = vmatpush1.bf16.msra.mxu0 0
        %2725 = vmatprep.subr.bf16.mxu0 0
        %2726 = vmatpush1.bf16.msra.mxu0 0
        %2727 = vmatprep.subr.bf16.mxu0 0
        %2728 = vmatpush1.bf16.msra.mxu0 0
        %2729 = vmatprep.subr.bf16.mxu0 0
        %2730 = vmatpush1.bf16.msra.mxu0 0
        %2731 = vmatprep.subr.bf16.mxu0 0
        %2732 = vmatpush1.bf16.msra.mxu0 0
        %2733 = vmatprep.subr.bf16.mxu0 0
        %2734 = vmatpush1.bf16.msra.mxu0 0
        %2735 = vmatprep.subr.bf16.mxu0 0
        %2736 = vmatpush1.bf16.msra.mxu0 %v2716
        %2737 = vmatprep.subr.bf16.mxu0 0
        %2738 = vmatpush2.bf16.msra.mxu0 0
        %2739 = vmatprep.subr.bf16.mxu0 0
        %2740 = vmatpush2.bf16.msra.mxu0 0
        %2741 = vmatprep.subr.bf16.mxu0 0
        %2742 = vmatpush2.bf16.msra.mxu0 0
        %2743 = vmatprep.subr.bf16.mxu0 0
        %2744 = vmatpush2.bf16.msra.mxu0 0
        %2745 = vmatprep.subr.bf16.mxu0 0
        %2746 = vmatpush2.bf16.msra.mxu0 0
        %2747 = vmatprep.subr.bf16.mxu0 0
        %2748 = vmatpush2.bf16.msra.mxu0 0
        %2749 = vmatprep.subr.bf16.mxu0 0
        %2750 = vmatpush2.bf16.msra.mxu0 0
        %2751 = vmatprep.subr.bf16.mxu0 0
        %2752 = vmatpush2.bf16.msra.mxu0 0
        %2753 = vmatprep.mubr.bf16.mxu0 0
        %2754 = vmatmul.mubr.bf16.gmra.mxu0 %v2719
        %v2755 = vpop.f32.mrf.mxu0
        %v2756 = vadd.f32 %v2706, %v2755
        %v2757 = vpop.f32.mrf.mxu0
        %v2758 = vpop.f32.mrf.mxu0
        %v2759 = vadd.f32 %v2709, %v2758
        %v2760 = vpop.f32.mrf.mxu0
        %2761 = vdwg.mxu0
        %v2762 = vpack.c.bf16 %v2651, %v2650
        %s2763 = scalar_lea.vmem [#allocation6], 136
        %v2764 = vld [vmem:[%s2763] sm:$0xf]
        %v2765 = vld [vmem:[%s2763 + $0x4] sm:$0xf]
        %v2768 = vunpack.c.l.b16 %v2764
        %v2769 = vunpack.c.l.b16 %v2765
        %v2770 = vpack.c.b16 %v2769, %v2768
        %v2773 = vsel %vm354, %v2762, 0
        %2775 = vmatprep.subr.bf16.mxu0 0
        %2776 = vmatpush1.bf16.msra.mxu0 0
        %2777 = vmatprep.subr.bf16.mxu0 0
        %2778 = vmatpush1.bf16.msra.mxu0 0
        %2779 = vmatprep.subr.bf16.mxu0 0
        %2780 = vmatpush1.bf16.msra.mxu0 0
        %2781 = vmatprep.subr.bf16.mxu0 0
        %2782 = vmatpush1.bf16.msra.mxu0 0
        %2783 = vmatprep.subr.bf16.mxu0 0
        %2784 = vmatpush1.bf16.msra.mxu0 0
        %2785 = vmatprep.subr.bf16.mxu0 0
        %2786 = vmatpush1.bf16.msra.mxu0 0
        %2787 = vmatprep.subr.bf16.mxu0 0
        %2788 = vmatpush1.bf16.msra.mxu0 0
        %2789 = vmatprep.subr.bf16.mxu0 0
        %2790 = vmatpush1.bf16.msra.mxu0 %v2770
        %2791 = vmatprep.subr.bf16.mxu0 0
        %2792 = vmatpush2.bf16.msra.mxu0 0
        %2793 = vmatprep.subr.bf16.mxu0 0
        %2794 = vmatpush2.bf16.msra.mxu0 0
        %2795 = vmatprep.subr.bf16.mxu0 0
        %2796 = vmatpush2.bf16.msra.mxu0 0
        %2797 = vmatprep.subr.bf16.mxu0 0
        %2798 = vmatpush2.bf16.msra.mxu0 0
        %2799 = vmatprep.subr.bf16.mxu0 0
        %2800 = vmatpush2.bf16.msra.mxu0 0
        %2801 = vmatprep.subr.bf16.mxu0 0
        %2802 = vmatpush2.bf16.msra.mxu0 0
        %2803 = vmatprep.subr.bf16.mxu0 0
        %2804 = vmatpush2.bf16.msra.mxu0 0
        %2805 = vmatprep.subr.bf16.mxu0 0
        %2806 = vmatpush2.bf16.msra.mxu0 0
        %2807 = vmatprep.mubr.bf16.mxu0 0
        %2808 = vmatmul.mubr.bf16.gmra.mxu0 %v2773
        %v2809 = vpop.f32.mrf.mxu0
        %v2810 = vadd.f32 0.0, %v2809
        %v2811 = vpop.f32.mrf.mxu0
        %v2812 = vpop.f32.mrf.mxu0
        %v2813 = vadd.f32 0.0, %v2812
        %v2814 = vpop.f32.mrf.mxu0
        %2815 = vdwg.mxu0
        %v2816 = vadd.f32 %v2756, %v2810
        %v2817 = vadd.f32 %v2759, %v2813
        %v2819 = vlaneseq
        %v2820 = vshrl.u32 %v2819, 7
        %v2821 = vsub.s32 0, %v2820
        %v2822 = vrot.slane %v2653, %v2821
        %v2824 = vadd.f32 %v2816, %v2822
        %v2825 = vadd.f32 %v2817, %v2822
        %v2826 = vtanh.pop %v2824
        %v2827 = vtanh.pop %v2825
        %v2828 = vadd.f32 %v2826, %v2048
        %v2829 = vadd.f32 %v2827, %v2049
        %v2832 = vrot.slane %v2828, 7
        %v2833 = vrot.slane %v2829, 7
        %v2834 = vsel %vm669, %v2832, %v2833
        %v2837 = vsel %vm669, 0.0, %v2832
        %v2838 = vsel %vm1667, %v2837, 0.0
        %v2839 = vsel %vm1668, %v2834, 0.0
        %v2840 = vrot.slane %v2828, 1
        %v2841 = vrot.slane %v2829, 1
        %v2842 = vsel %vm690, %v2840, %v2841
        %v2845 = vsel %vm690, %v2841, 0.0
        %v2846 = vsel %vm1677, %v2842, 0.0
        %v2847 = vsel %vm1678, %v2845, 0.0
        %s2848 = scalar_lea.vmem [#allocation3], 6
        %v2849 = vld [vmem:[%s2848] sm:$0x1]
        %v2850 = vpack.c.bf16 %v2839, %v2838
        %s2851 = scalar_lea.vmem %s1, 144
        %v2852 = vld [vmem:[%s2851] sm:$0xf]
        %v2853 = vld [vmem:[%s2851 + $0x4] sm:$0xf]
        %v2854 = vpack.c.bf16 %v2829, %v2828
        %s2855 = scalar_lea.vmem %s1, 152
        %v2856 = vld [vmem:[%s2855] sm:$0xf]
        %v2857 = vld [vmem:[%s2855 + $0x4] sm:$0xf]
        %v2860 = vunpack.c.l.b16 %v2856
        %v2861 = vunpack.c.l.b16 %v2857
        %v2862 = vpack.c.b16 %v2861, %v2860
        %v2865 = vsel %vm354, %v2854, 0
        %2867 = vmatprep.subr.bf16.mxu0 0
        %2868 = vmatpush1.bf16.msra.mxu0 0
        %2869 = vmatprep.subr.bf16.mxu0 0
        %2870 = vmatpush1.bf16.msra.mxu0 0
        %2871 = vmatprep.subr.bf16.mxu0 0
        %2872 = vmatpush1.bf16.msra.mxu0 0
        %2873 = vmatprep.subr.bf16.mxu0 0
        %2874 = vmatpush1.bf16.msra.mxu0 0
        %2875 = vmatprep.subr.bf16.mxu0 0
        %2876 = vmatpush1.bf16.msra.mxu0 0
        %2877 = vmatprep.subr.bf16.mxu0 0
        %2878 = vmatpush1.bf16.msra.mxu0 0
        %2879 = vmatprep.subr.bf16.mxu0 0
        %2880 = vmatpush1.bf16.msra.mxu0 0
        %2881 = vmatprep.subr.bf16.mxu0 0
        %2882 = vmatpush1.bf16.msra.mxu0 %v2862
        %2883 = vmatprep.subr.bf16.mxu0 0
        %2884 = vmatpush2.bf16.msra.mxu0 0
        %2885 = vmatprep.subr.bf16.mxu0 0
        %2886 = vmatpush2.bf16.msra.mxu0 0
        %2887 = vmatprep.subr.bf16.mxu0 0
        %2888 = vmatpush2.bf16.msra.mxu0 0
        %2889 = vmatprep.subr.bf16.mxu0 0
        %2890 = vmatpush2.bf16.msra.mxu0 0
        %2891 = vmatprep.subr.bf16.mxu0 0
        %2892 = vmatpush2.bf16.msra.mxu0 0
        %2893 = vmatprep.subr.bf16.mxu0 0
        %2894 = vmatpush2.bf16.msra.mxu0 0
        %2895 = vmatprep.subr.bf16.mxu0 0
        %2896 = vmatpush2.bf16.msra.mxu0 0
        %2897 = vmatprep.subr.bf16.mxu0 0
        %2898 = vmatpush2.bf16.msra.mxu0 0
        %2899 = vmatprep.mubr.bf16.mxu0 0
        %2900 = vmatmul.mubr.bf16.gmra.mxu0 %v2865
        %v2901 = vpop.f32.mrf.mxu0
        %v2902 = vadd.f32 0.0, %v2901
        %v2903 = vpop.f32.mrf.mxu0
        %v2904 = vpop.f32.mrf.mxu0
        %v2905 = vadd.f32 0.0, %v2904
        %v2906 = vpop.f32.mrf.mxu0
        %2907 = vdwg.mxu0
        %v2910 = vunpack.c.l.b16 %v2852
        %v2911 = vunpack.c.l.b16 %v2853
        %v2912 = vpack.c.b16 %v2911, %v2910
        %v2915 = vsel %vm354, %v2850, 0
        %2917 = vmatprep.subr.bf16.mxu0 0
        %2918 = vmatpush1.bf16.msra.mxu0 0
        %2919 = vmatprep.subr.bf16.mxu0 0
        %2920 = vmatpush1.bf16.msra.mxu0 0
        %2921 = vmatprep.subr.bf16.mxu0 0
        %2922 = vmatpush1.bf16.msra.mxu0 0
        %2923 = vmatprep.subr.bf16.mxu0 0
        %2924 = vmatpush1.bf16.msra.mxu0 0
        %2925 = vmatprep.subr.bf16.mxu0 0
        %2926 = vmatpush1.bf16.msra.mxu0 0
        %2927 = vmatprep.subr.bf16.mxu0 0
        %2928 = vmatpush1.bf16.msra.mxu0 0
        %2929 = vmatprep.subr.bf16.mxu0 0
        %2930 = vmatpush1.bf16.msra.mxu0 0
        %2931 = vmatprep.subr.bf16.mxu0 0
        %2932 = vmatpush1.bf16.msra.mxu0 %v2912
        %2933 = vmatprep.subr.bf16.mxu0 0
        %2934 = vmatpush2.bf16.msra.mxu0 0
        %2935 = vmatprep.subr.bf16.mxu0 0
        %2936 = vmatpush2.bf16.msra.mxu0 0
        %2937 = vmatprep.subr.bf16.mxu0 0
        %2938 = vmatpush2.bf16.msra.mxu0 0
        %2939 = vmatprep.subr.bf16.mxu0 0
        %2940 = vmatpush2.bf16.msra.mxu0 0
        %2941 = vmatprep.subr.bf16.mxu0 0
        %2942 = vmatpush2.bf16.msra.mxu0 0
        %2943 = vmatprep.subr.bf16.mxu0 0
        %2944 = vmatpush2.bf16.msra.mxu0 0
        %2945 = vmatprep.subr.bf16.mxu0 0
        %2946 = vmatpush2.bf16.msra.mxu0 0
        %2947 = vmatprep.subr.bf16.mxu0 0
        %2948 = vmatpush2.bf16.msra.mxu0 0
        %2949 = vmatprep.mubr.bf16.mxu0 0
        %2950 = vmatmul.mubr.bf16.gmra.mxu0 %v2915
        %v2951 = vpop.f32.mrf.mxu0
        %v2952 = vadd.f32 %v2902, %v2951
        %v2953 = vpop.f32.mrf.mxu0
        %v2954 = vpop.f32.mrf.mxu0
        %v2955 = vadd.f32 %v2905, %v2954
        %v2956 = vpop.f32.mrf.mxu0
        %2957 = vdwg.mxu0
        %v2958 = vpack.c.bf16 %v2847, %v2846
        %s2959 = scalar_lea.vmem %s1, 160
        %v2960 = vld [vmem:[%s2959] sm:$0xf]
        %v2961 = vld [vmem:[%s2959 + $0x4] sm:$0xf]
        %v2964 = vunpack.c.l.b16 %v2960
        %v2965 = vunpack.c.l.b16 %v2961
        %v2966 = vpack.c.b16 %v2965, %v2964
        %v2969 = vsel %vm354, %v2958, 0
        %2971 = vmatprep.subr.bf16.mxu0 0
        %2972 = vmatpush1.bf16.msra.mxu0 0
        %2973 = vmatprep.subr.bf16.mxu0 0
        %2974 = vmatpush1.bf16.msra.mxu0 0
        %2975 = vmatprep.subr.bf16.mxu0 0
        %2976 = vmatpush1.bf16.msra.mxu0 0
        %2977 = vmatprep.subr.bf16.mxu0 0
        %2978 = vmatpush1.bf16.msra.mxu0 0
        %2979 = vmatprep.subr.bf16.mxu0 0
        %2980 = vmatpush1.bf16.msra.mxu0 0
        %2981 = vmatprep.subr.bf16.mxu0 0
        %2982 = vmatpush1.bf16.msra.mxu0 0
        %2983 = vmatprep.subr.bf16.mxu0 0
        %2984 = vmatpush1.bf16.msra.mxu0 0
        %2985 = vmatprep.subr.bf16.mxu0 0
        %2986 = vmatpush1.bf16.msra.mxu0 %v2966
        %2987 = vmatprep.subr.bf16.mxu0 0
        %2988 = vmatpush2.bf16.msra.mxu0 0
        %2989 = vmatprep.subr.bf16.mxu0 0
        %2990 = vmatpush2.bf16.msra.mxu0 0
        %2991 = vmatprep.subr.bf16.mxu0 0
        %2992 = vmatpush2.bf16.msra.mxu0 0
        %2993 = vmatprep.subr.bf16.mxu0 0
        %2994 = vmatpush2.bf16.msra.mxu0 0
        %2995 = vmatprep.subr.bf16.mxu0 0
        %2996 = vmatpush2.bf16.msra.mxu0 0
        %2997 = vmatprep.subr.bf16.mxu0 0
        %2998 = vmatpush2.bf16.msra.mxu0 0
        %2999 = vmatprep.subr.bf16.mxu0 0
        %3000 = vmatpush2.bf16.msra.mxu0 0
        %3001 = vmatprep.subr.bf16.mxu0 0
        %3002 = vmatpush2.bf16.msra.mxu0 0
        %3003 = vmatprep.mubr.bf16.mxu0 0
        %3004 = vmatmul.mubr.bf16.gmra.mxu0 %v2969
        %v3005 = vpop.f32.mrf.mxu0
        %v3006 = vadd.f32 0.0, %v3005
        %v3007 = vpop.f32.mrf.mxu0
        %v3008 = vpop.f32.mrf.mxu0
        %v3009 = vadd.f32 0.0, %v3008
        %v3010 = vpop.f32.mrf.mxu0
        %3011 = vdwg.mxu0
        %v3012 = vadd.f32 %v2952, %v3006
        %v3013 = vadd.f32 %v2955, %v3009
        %v3015 = vlaneseq
        %v3016 = vshrl.u32 %v3015, 7
        %v3017 = vsub.s32 0, %v3016
        %v3018 = vrot.slane %v2849, %v3017
        %v3020 = vadd.f32 %v3012, %v3018
        %v3021 = vadd.f32 %v3013, %v3018
        %v3022 = vtanh.pop %v3020
        %v3023 = vtanh.pop %v3021
        %v3026 = vrot.slane %v3022, 7
        %v3027 = vrot.slane %v3023, 7
        %v3028 = vsel %vm669, %v3026, %v3027
        %v3031 = vsel %vm669, 0.0, %v3026
        %v3032 = vsel %vm1667, %v3031, 0.0
        %v3033 = vsel %vm1668, %v3028, 0.0
        %v3034 = vrot.slane %v3022, 1
        %v3035 = vrot.slane %v3023, 1
        %v3036 = vsel %vm690, %v3034, %v3035
        %v3039 = vsel %vm690, %v3035, 0.0
        %v3040 = vsel %vm1677, %v3036, 0.0
        %v3041 = vsel %vm1678, %v3039, 0.0
        %s3042 = scalar_lea.vmem [#allocation8], 6
        %v3043 = vld [vmem:[%s3042] sm:$0x1]
        %v3044 = vpack.c.bf16 %v3033, %v3032
        %s3045 = scalar_lea.vmem [#allocation6], 144
        %v3046 = vld [vmem:[%s3045] sm:$0xf]
        %v3047 = vld [vmem:[%s3045 + $0x4] sm:$0xf]
        %v3048 = vpack.c.bf16 %v3023, %v3022
        %s3049 = scalar_lea.vmem [#allocation6], 152
        %v3050 = vld [vmem:[%s3049] sm:$0xf]
        %v3051 = vld [vmem:[%s3049 + $0x4] sm:$0xf]
        %v3054 = vunpack.c.l.b16 %v3050
        %v3055 = vunpack.c.l.b16 %v3051
        %v3056 = vpack.c.b16 %v3055, %v3054
        %v3059 = vsel %vm354, %v3048, 0
        %3061 = vmatprep.subr.bf16.mxu0 0
        %3062 = vmatpush1.bf16.msra.mxu0 0
        %3063 = vmatprep.subr.bf16.mxu0 0
        %3064 = vmatpush1.bf16.msra.mxu0 0
        %3065 = vmatprep.subr.bf16.mxu0 0
        %3066 = vmatpush1.bf16.msra.mxu0 0
        %3067 = vmatprep.subr.bf16.mxu0 0
        %3068 = vmatpush1.bf16.msra.mxu0 0
        %3069 = vmatprep.subr.bf16.mxu0 0
        %3070 = vmatpush1.bf16.msra.mxu0 0
        %3071 = vmatprep.subr.bf16.mxu0 0
        %3072 = vmatpush1.bf16.msra.mxu0 0
        %3073 = vmatprep.subr.bf16.mxu0 0
        %3074 = vmatpush1.bf16.msra.mxu0 0
        %3075 = vmatprep.subr.bf16.mxu0 0
        %3076 = vmatpush1.bf16.msra.mxu0 %v3056
        %3077 = vmatprep.subr.bf16.mxu0 0
        %3078 = vmatpush2.bf16.msra.mxu0 0
        %3079 = vmatprep.subr.bf16.mxu0 0
        %3080 = vmatpush2.bf16.msra.mxu0 0
        %3081 = vmatprep.subr.bf16.mxu0 0
        %3082 = vmatpush2.bf16.msra.mxu0 0
        %3083 = vmatprep.subr.bf16.mxu0 0
        %3084 = vmatpush2.bf16.msra.mxu0 0
        %3085 = vmatprep.subr.bf16.mxu0 0
        %3086 = vmatpush2.bf16.msra.mxu0 0
        %3087 = vmatprep.subr.bf16.mxu0 0
        %3088 = vmatpush2.bf16.msra.mxu0 0
        %3089 = vmatprep.subr.bf16.mxu0 0
        %3090 = vmatpush2.bf16.msra.mxu0 0
        %3091 = vmatprep.subr.bf16.mxu0 0
        %3092 = vmatpush2.bf16.msra.mxu0 0
        %3093 = vmatprep.mubr.bf16.mxu0 0
        %3094 = vmatmul.mubr.bf16.gmra.mxu0 %v3059
        %v3095 = vpop.f32.mrf.mxu0
        %v3096 = vadd.f32 0.0, %v3095
        %v3097 = vpop.f32.mrf.mxu0
        %v3098 = vpop.f32.mrf.mxu0
        %v3099 = vadd.f32 0.0, %v3098
        %v3100 = vpop.f32.mrf.mxu0
        %3101 = vdwg.mxu0
        %v3104 = vunpack.c.l.b16 %v3046
        %v3105 = vunpack.c.l.b16 %v3047
        %v3106 = vpack.c.b16 %v3105, %v3104
        %v3109 = vsel %vm354, %v3044, 0
        %3111 = vmatprep.subr.bf16.mxu0 0
        %3112 = vmatpush1.bf16.msra.mxu0 0
        %3113 = vmatprep.subr.bf16.mxu0 0
        %3114 = vmatpush1.bf16.msra.mxu0 0
        %3115 = vmatprep.subr.bf16.mxu0 0
        %3116 = vmatpush1.bf16.msra.mxu0 0
        %3117 = vmatprep.subr.bf16.mxu0 0
        %3118 = vmatpush1.bf16.msra.mxu0 0
        %3119 = vmatprep.subr.bf16.mxu0 0
        %3120 = vmatpush1.bf16.msra.mxu0 0
        %3121 = vmatprep.subr.bf16.mxu0 0
        %3122 = vmatpush1.bf16.msra.mxu0 0
        %3123 = vmatprep.subr.bf16.mxu0 0
        %3124 = vmatpush1.bf16.msra.mxu0 0
        %3125 = vmatprep.subr.bf16.mxu0 0
        %3126 = vmatpush1.bf16.msra.mxu0 %v3106
        %3127 = vmatprep.subr.bf16.mxu0 0
        %3128 = vmatpush2.bf16.msra.mxu0 0
        %3129 = vmatprep.subr.bf16.mxu0 0
        %3130 = vmatpush2.bf16.msra.mxu0 0
        %3131 = vmatprep.subr.bf16.mxu0 0
        %3132 = vmatpush2.bf16.msra.mxu0 0
        %3133 = vmatprep.subr.bf16.mxu0 0
        %3134 = vmatpush2.bf16.msra.mxu0 0
        %3135 = vmatprep.subr.bf16.mxu0 0
        %3136 = vmatpush2.bf16.msra.mxu0 0
        %3137 = vmatprep.subr.bf16.mxu0 0
        %3138 = vmatpush2.bf16.msra.mxu0 0
        %3139 = vmatprep.subr.bf16.mxu0 0
        %3140 = vmatpush2.bf16.msra.mxu0 0
        %3141 = vmatprep.subr.bf16.mxu0 0
        %3142 = vmatpush2.bf16.msra.mxu0 0
        %3143 = vmatprep.mubr.bf16.mxu0 0
        %3144 = vmatmul.mubr.bf16.gmra.mxu0 %v3109
        %v3145 = vpop.f32.mrf.mxu0
        %v3146 = vadd.f32 %v3096, %v3145
        %v3147 = vpop.f32.mrf.mxu0
        %v3148 = vpop.f32.mrf.mxu0
        %v3149 = vadd.f32 %v3099, %v3148
        %v3150 = vpop.f32.mrf.mxu0
        %3151 = vdwg.mxu0
        %v3152 = vpack.c.bf16 %v3041, %v3040
        %s3153 = scalar_lea.vmem [#allocation6], 160
        %v3154 = vld [vmem:[%s3153] sm:$0xf]
        %v3155 = vld [vmem:[%s3153 + $0x4] sm:$0xf]
        %v3158 = vunpack.c.l.b16 %v3154
        %v3159 = vunpack.c.l.b16 %v3155
        %v3160 = vpack.c.b16 %v3159, %v3158
        %v3163 = vsel %vm354, %v3152, 0
        %3165 = vmatprep.subr.bf16.mxu0 0
        %3166 = vmatpush1.bf16.msra.mxu0 0
        %3167 = vmatprep.subr.bf16.mxu0 0
        %3168 = vmatpush1.bf16.msra.mxu0 0
        %3169 = vmatprep.subr.bf16.mxu0 0
        %3170 = vmatpush1.bf16.msra.mxu0 0
        %3171 = vmatprep.subr.bf16.mxu0 0
        %3172 = vmatpush1.bf16.msra.mxu0 0
        %3173 = vmatprep.subr.bf16.mxu0 0
        %3174 = vmatpush1.bf16.msra.mxu0 0
        %3175 = vmatprep.subr.bf16.mxu0 0
        %3176 = vmatpush1.bf16.msra.mxu0 0
        %3177 = vmatprep.subr.bf16.mxu0 0
        %3178 = vmatpush1.bf16.msra.mxu0 0
        %3179 = vmatprep.subr.bf16.mxu0 0
        %3180 = vmatpush1.bf16.msra.mxu0 %v3160
        %3181 = vmatprep.subr.bf16.mxu0 0
        %3182 = vmatpush2.bf16.msra.mxu0 0
        %3183 = vmatprep.subr.bf16.mxu0 0
        %3184 = vmatpush2.bf16.msra.mxu0 0
        %3185 = vmatprep.subr.bf16.mxu0 0
        %3186 = vmatpush2.bf16.msra.mxu0 0
        %3187 = vmatprep.subr.bf16.mxu0 0
        %3188 = vmatpush2.bf16.msra.mxu0 0
        %3189 = vmatprep.subr.bf16.mxu0 0
        %3190 = vmatpush2.bf16.msra.mxu0 0
        %3191 = vmatprep.subr.bf16.mxu0 0
        %3192 = vmatpush2.bf16.msra.mxu0 0
        %3193 = vmatprep.subr.bf16.mxu0 0
        %3194 = vmatpush2.bf16.msra.mxu0 0
        %3195 = vmatprep.subr.bf16.mxu0 0
        %3196 = vmatpush2.bf16.msra.mxu0 0
        %3197 = vmatprep.mubr.bf16.mxu0 0
        %3198 = vmatmul.mubr.bf16.gmra.mxu0 %v3163
        %v3199 = vpop.f32.mrf.mxu0
        %v3200 = vadd.f32 0.0, %v3199
        %v3201 = vpop.f32.mrf.mxu0
        %v3202 = vpop.f32.mrf.mxu0
        %v3203 = vadd.f32 0.0, %v3202
        %v3204 = vpop.f32.mrf.mxu0
        %3205 = vdwg.mxu0
        %v3206 = vadd.f32 %v3146, %v3200
        %v3207 = vadd.f32 %v3149, %v3203
        %v3209 = vlaneseq
        %v3210 = vshrl.u32 %v3209, 7
        %v3211 = vsub.s32 0, %v3210
        %v3212 = vrot.slane %v3043, %v3211
        %v3214 = vadd.f32 %v3206, %v3212
        %v3215 = vadd.f32 %v3207, %v3212
        %v3216 = vtanh.pop %v3214
        %v3217 = vtanh.pop %v3215
        %v3218 = vadd.f32 %v3216, %v2828
        %v3219 = vadd.f32 %v3217, %v2829
        %v3222 = vrot.slane %v3218, 7
        %v3223 = vrot.slane %v3219, 7
        %v3224 = vsel %vm669, %v3222, %v3223
        %v3227 = vsel %vm669, 0.0, %v3222
        %v3228 = vsel %vm1667, %v3227, 0.0
        %v3229 = vsel %vm1668, %v3224, 0.0
        %v3230 = vrot.slane %v3218, 1
        %v3231 = vrot.slane %v3219, 1
        %v3232 = vsel %vm690, %v3230, %v3231
        %v3235 = vsel %vm690, %v3231, 0.0
        %v3236 = vsel %vm1677, %v3232, 0.0
        %v3237 = vsel %vm1678, %v3235, 0.0
        %s3238 = scalar_lea.vmem [#allocation3], 7
        %v3239 = vld [vmem:[%s3238] sm:$0x1]
        %v3240 = vpack.c.bf16 %v3229, %v3228
        %s3241 = scalar_lea.vmem %s1, 168
        %v3242 = vld [vmem:[%s3241] sm:$0xf]
        %v3243 = vld [vmem:[%s3241 + $0x4] sm:$0xf]
        %v3244 = vpack.c.bf16 %v3219, %v3218
        %s3245 = scalar_lea.vmem %s1, 176
        %v3246 = vld [vmem:[%s3245] sm:$0xf]
        %v3247 = vld [vmem:[%s3245 + $0x4] sm:$0xf]
        %v3250 = vunpack.c.l.b16 %v3246
        %v3251 = vunpack.c.l.b16 %v3247
        %v3252 = vpack.c.b16 %v3251, %v3250
        %v3255 = vsel %vm354, %v3244, 0
        %3257 = vmatprep.subr.bf16.mxu0 0
        %3258 = vmatpush1.bf16.msra.mxu0 0
        %3259 = vmatprep.subr.bf16.mxu0 0
        %3260 = vmatpush1.bf16.msra.mxu0 0
        %3261 = vmatprep.subr.bf16.mxu0 0
        %3262 = vmatpush1.bf16.msra.mxu0 0
        %3263 = vmatprep.subr.bf16.mxu0 0
        %3264 = vmatpush1.bf16.msra.mxu0 0
        %3265 = vmatprep.subr.bf16.mxu0 0
        %3266 = vmatpush1.bf16.msra.mxu0 0
        %3267 = vmatprep.subr.bf16.mxu0 0
        %3268 = vmatpush1.bf16.msra.mxu0 0
        %3269 = vmatprep.subr.bf16.mxu0 0
        %3270 = vmatpush1.bf16.msra.mxu0 0
        %3271 = vmatprep.subr.bf16.mxu0 0
        %3272 = vmatpush1.bf16.msra.mxu0 %v3252
        %3273 = vmatprep.subr.bf16.mxu0 0
        %3274 = vmatpush2.bf16.msra.mxu0 0
        %3275 = vmatprep.subr.bf16.mxu0 0
        %3276 = vmatpush2.bf16.msra.mxu0 0
        %3277 = vmatprep.subr.bf16.mxu0 0
        %3278 = vmatpush2.bf16.msra.mxu0 0
        %3279 = vmatprep.subr.bf16.mxu0 0
        %3280 = vmatpush2.bf16.msra.mxu0 0
        %3281 = vmatprep.subr.bf16.mxu0 0
        %3282 = vmatpush2.bf16.msra.mxu0 0
        %3283 = vmatprep.subr.bf16.mxu0 0
        %3284 = vmatpush2.bf16.msra.mxu0 0
        %3285 = vmatprep.subr.bf16.mxu0 0
        %3286 = vmatpush2.bf16.msra.mxu0 0
        %3287 = vmatprep.subr.bf16.mxu0 0
        %3288 = vmatpush2.bf16.msra.mxu0 0
        %3289 = vmatprep.mubr.bf16.mxu0 0
        %3290 = vmatmul.mubr.bf16.gmra.mxu0 %v3255
        %v3291 = vpop.f32.mrf.mxu0
        %v3292 = vadd.f32 0.0, %v3291
        %v3293 = vpop.f32.mrf.mxu0
        %v3294 = vpop.f32.mrf.mxu0
        %v3295 = vadd.f32 0.0, %v3294
        %v3296 = vpop.f32.mrf.mxu0
        %3297 = vdwg.mxu0
        %v3300 = vunpack.c.l.b16 %v3242
        %v3301 = vunpack.c.l.b16 %v3243
        %v3302 = vpack.c.b16 %v3301, %v3300
        %v3305 = vsel %vm354, %v3240, 0
        %3307 = vmatprep.subr.bf16.mxu0 0
        %3308 = vmatpush1.bf16.msra.mxu0 0
        %3309 = vmatprep.subr.bf16.mxu0 0
        %3310 = vmatpush1.bf16.msra.mxu0 0
        %3311 = vmatprep.subr.bf16.mxu0 0
        %3312 = vmatpush1.bf16.msra.mxu0 0
        %3313 = vmatprep.subr.bf16.mxu0 0
        %3314 = vmatpush1.bf16.msra.mxu0 0
        %3315 = vmatprep.subr.bf16.mxu0 0
        %3316 = vmatpush1.bf16.msra.mxu0 0
        %3317 = vmatprep.subr.bf16.mxu0 0
        %3318 = vmatpush1.bf16.msra.mxu0 0
        %3319 = vmatprep.subr.bf16.mxu0 0
        %3320 = vmatpush1.bf16.msra.mxu0 0
        %3321 = vmatprep.subr.bf16.mxu0 0
        %3322 = vmatpush1.bf16.msra.mxu0 %v3302
        %3323 = vmatprep.subr.bf16.mxu0 0
        %3324 = vmatpush2.bf16.msra.mxu0 0
        %3325 = vmatprep.subr.bf16.mxu0 0
        %3326 = vmatpush2.bf16.msra.mxu0 0
        %3327 = vmatprep.subr.bf16.mxu0 0
        %3328 = vmatpush2.bf16.msra.mxu0 0
        %3329 = vmatprep.subr.bf16.mxu0 0
        %3330 = vmatpush2.bf16.msra.mxu0 0
        %3331 = vmatprep.subr.bf16.mxu0 0
        %3332 = vmatpush2.bf16.msra.mxu0 0
        %3333 = vmatprep.subr.bf16.mxu0 0
        %3334 = vmatpush2.bf16.msra.mxu0 0
        %3335 = vmatprep.subr.bf16.mxu0 0
        %3336 = vmatpush2.bf16.msra.mxu0 0
        %3337 = vmatprep.subr.bf16.mxu0 0
        %3338 = vmatpush2.bf16.msra.mxu0 0
        %3339 = vmatprep.mubr.bf16.mxu0 0
        %3340 = vmatmul.mubr.bf16.gmra.mxu0 %v3305
        %v3341 = vpop.f32.mrf.mxu0
        %v3342 = vadd.f32 %v3292, %v3341
        %v3343 = vpop.f32.mrf.mxu0
        %v3344 = vpop.f32.mrf.mxu0
        %v3345 = vadd.f32 %v3295, %v3344
        %v3346 = vpop.f32.mrf.mxu0
        %3347 = vdwg.mxu0
        %v3348 = vpack.c.bf16 %v3237, %v3236
        %s3349 = scalar_lea.vmem %s1, 184
        %v3350 = vld [vmem:[%s3349] sm:$0xf]
        %v3351 = vld [vmem:[%s3349 + $0x4] sm:$0xf]
        %v3354 = vunpack.c.l.b16 %v3350
        %v3355 = vunpack.c.l.b16 %v3351
        %v3356 = vpack.c.b16 %v3355, %v3354
        %v3359 = vsel %vm354, %v3348, 0
        %3361 = vmatprep.subr.bf16.mxu0 0
        %3362 = vmatpush1.bf16.msra.mxu0 0
        %3363 = vmatprep.subr.bf16.mxu0 0
        %3364 = vmatpush1.bf16.msra.mxu0 0
        %3365 = vmatprep.subr.bf16.mxu0 0
        %3366 = vmatpush1.bf16.msra.mxu0 0
        %3367 = vmatprep.subr.bf16.mxu0 0
        %3368 = vmatpush1.bf16.msra.mxu0 0
        %3369 = vmatprep.subr.bf16.mxu0 0
        %3370 = vmatpush1.bf16.msra.mxu0 0
        %3371 = vmatprep.subr.bf16.mxu0 0
        %3372 = vmatpush1.bf16.msra.mxu0 0
        %3373 = vmatprep.subr.bf16.mxu0 0
        %3374 = vmatpush1.bf16.msra.mxu0 0
        %3375 = vmatprep.subr.bf16.mxu0 0
        %3376 = vmatpush1.bf16.msra.mxu0 %v3356
        %3377 = vmatprep.subr.bf16.mxu0 0
        %3378 = vmatpush2.bf16.msra.mxu0 0
        %3379 = vmatprep.subr.bf16.mxu0 0
        %3380 = vmatpush2.bf16.msra.mxu0 0
        %3381 = vmatprep.subr.bf16.mxu0 0
        %3382 = vmatpush2.bf16.msra.mxu0 0
        %3383 = vmatprep.subr.bf16.mxu0 0
        %3384 = vmatpush2.bf16.msra.mxu0 0
        %3385 = vmatprep.subr.bf16.mxu0 0
        %3386 = vmatpush2.bf16.msra.mxu0 0
        %3387 = vmatprep.subr.bf16.mxu0 0
        %3388 = vmatpush2.bf16.msra.mxu0 0
        %3389 = vmatprep.subr.bf16.mxu0 0
        %3390 = vmatpush2.bf16.msra.mxu0 0
        %3391 = vmatprep.subr.bf16.mxu0 0
        %3392 = vmatpush2.bf16.msra.mxu0 0
        %3393 = vmatprep.mubr.bf16.mxu0 0
        %3394 = vmatmul.mubr.bf16.gmra.mxu0 %v3359
        %v3395 = vpop.f32.mrf.mxu0
        %v3396 = vadd.f32 0.0, %v3395
        %v3397 = vpop.f32.mrf.mxu0
        %v3398 = vpop.f32.mrf.mxu0
        %v3399 = vadd.f32 0.0, %v3398
        %v3400 = vpop.f32.mrf.mxu0
        %3401 = vdwg.mxu0
        %v3402 = vadd.f32 %v3342, %v3396
        %v3403 = vadd.f32 %v3345, %v3399
        %v3405 = vlaneseq
        %v3406 = vshrl.u32 %v3405, 7
        %v3407 = vsub.s32 0, %v3406
        %v3408 = vrot.slane %v3239, %v3407
        %v3410 = vadd.f32 %v3402, %v3408
        %v3411 = vadd.f32 %v3403, %v3408
        %v3412 = vtanh.pop %v3410
        %v3413 = vtanh.pop %v3411
        %v3416 = vrot.slane %v3412, 7
        %v3417 = vrot.slane %v3413, 7
        %v3418 = vsel %vm669, %v3416, %v3417
        %v3421 = vsel %vm669, 0.0, %v3416
        %v3422 = vsel %vm1667, %v3421, 0.0
        %v3423 = vsel %vm1668, %v3418, 0.0
        %v3424 = vrot.slane %v3412, 1
        %v3425 = vrot.slane %v3413, 1
        %v3426 = vsel %vm690, %v3424, %v3425
        %v3429 = vsel %vm690, %v3425, 0.0
        %v3430 = vsel %vm1677, %v3426, 0.0
        %v3431 = vsel %vm1678, %v3429, 0.0
        %s3432 = scalar_lea.vmem [#allocation8], 7
        %v3433 = vld [vmem:[%s3432] sm:$0x1]
        %v3434 = vpack.c.bf16 %v3423, %v3422
        %s3435 = scalar_lea.vmem [#allocation6], 168
        %v3436 = vld [vmem:[%s3435] sm:$0xf]
        %v3437 = vld [vmem:[%s3435 + $0x4] sm:$0xf]
        %v3438 = vpack.c.bf16 %v3413, %v3412
        %s3439 = scalar_lea.vmem [#allocation6], 176
        %v3440 = vld [vmem:[%s3439] sm:$0xf]
        %v3441 = vld [vmem:[%s3439 + $0x4] sm:$0xf]
        %v3444 = vunpack.c.l.b16 %v3440
        %v3445 = vunpack.c.l.b16 %v3441
        %v3446 = vpack.c.b16 %v3445, %v3444
        %v3449 = vsel %vm354, %v3438, 0
        %3451 = vmatprep.subr.bf16.mxu0 0
        %3452 = vmatpush1.bf16.msra.mxu0 0
        %3453 = vmatprep.subr.bf16.mxu0 0
        %3454 = vmatpush1.bf16.msra.mxu0 0
        %3455 = vmatprep.subr.bf16.mxu0 0
        %3456 = vmatpush1.bf16.msra.mxu0 0
        %3457 = vmatprep.subr.bf16.mxu0 0
        %3458 = vmatpush1.bf16.msra.mxu0 0
        %3459 = vmatprep.subr.bf16.mxu0 0
        %3460 = vmatpush1.bf16.msra.mxu0 0
        %3461 = vmatprep.subr.bf16.mxu0 0
        %3462 = vmatpush1.bf16.msra.mxu0 0
        %3463 = vmatprep.subr.bf16.mxu0 0
        %3464 = vmatpush1.bf16.msra.mxu0 0
        %3465 = vmatprep.subr.bf16.mxu0 0
        %3466 = vmatpush1.bf16.msra.mxu0 %v3446
        %3467 = vmatprep.subr.bf16.mxu0 0
        %3468 = vmatpush2.bf16.msra.mxu0 0
        %3469 = vmatprep.subr.bf16.mxu0 0
        %3470 = vmatpush2.bf16.msra.mxu0 0
        %3471 = vmatprep.subr.bf16.mxu0 0
        %3472 = vmatpush2.bf16.msra.mxu0 0
        %3473 = vmatprep.subr.bf16.mxu0 0
        %3474 = vmatpush2.bf16.msra.mxu0 0
        %3475 = vmatprep.subr.bf16.mxu0 0
        %3476 = vmatpush2.bf16.msra.mxu0 0
        %3477 = vmatprep.subr.bf16.mxu0 0
        %3478 = vmatpush2.bf16.msra.mxu0 0
        %3479 = vmatprep.subr.bf16.mxu0 0
        %3480 = vmatpush2.bf16.msra.mxu0 0
        %3481 = vmatprep.subr.bf16.mxu0 0
        %3482 = vmatpush2.bf16.msra.mxu0 0
        %3483 = vmatprep.mubr.bf16.mxu0 0
        %3484 = vmatmul.mubr.bf16.gmra.mxu0 %v3449
        %v3485 = vpop.f32.mrf.mxu0
        %v3486 = vadd.f32 0.0, %v3485
        %v3487 = vpop.f32.mrf.mxu0
        %v3488 = vpop.f32.mrf.mxu0
        %v3489 = vadd.f32 0.0, %v3488
        %v3490 = vpop.f32.mrf.mxu0
        %3491 = vdwg.mxu0
        %v3494 = vunpack.c.l.b16 %v3436
        %v3495 = vunpack.c.l.b16 %v3437
        %v3496 = vpack.c.b16 %v3495, %v3494
        %v3499 = vsel %vm354, %v3434, 0
        %3501 = vmatprep.subr.bf16.mxu0 0
        %3502 = vmatpush1.bf16.msra.mxu0 0
        %3503 = vmatprep.subr.bf16.mxu0 0
        %3504 = vmatpush1.bf16.msra.mxu0 0
        %3505 = vmatprep.subr.bf16.mxu0 0
        %3506 = vmatpush1.bf16.msra.mxu0 0
        %3507 = vmatprep.subr.bf16.mxu0 0
        %3508 = vmatpush1.bf16.msra.mxu0 0
        %3509 = vmatprep.subr.bf16.mxu0 0
        %3510 = vmatpush1.bf16.msra.mxu0 0
        %3511 = vmatprep.subr.bf16.mxu0 0
        %3512 = vmatpush1.bf16.msra.mxu0 0
        %3513 = vmatprep.subr.bf16.mxu0 0
        %3514 = vmatpush1.bf16.msra.mxu0 0
        %3515 = vmatprep.subr.bf16.mxu0 0
        %3516 = vmatpush1.bf16.msra.mxu0 %v3496
        %3517 = vmatprep.subr.bf16.mxu0 0
        %3518 = vmatpush2.bf16.msra.mxu0 0
        %3519 = vmatprep.subr.bf16.mxu0 0
        %3520 = vmatpush2.bf16.msra.mxu0 0
        %3521 = vmatprep.subr.bf16.mxu0 0
        %3522 = vmatpush2.bf16.msra.mxu0 0
        %3523 = vmatprep.subr.bf16.mxu0 0
        %3524 = vmatpush2.bf16.msra.mxu0 0
        %3525 = vmatprep.subr.bf16.mxu0 0
        %3526 = vmatpush2.bf16.msra.mxu0 0
        %3527 = vmatprep.subr.bf16.mxu0 0
        %3528 = vmatpush2.bf16.msra.mxu0 0
        %3529 = vmatprep.subr.bf16.mxu0 0
        %3530 = vmatpush2.bf16.msra.mxu0 0
        %3531 = vmatprep.subr.bf16.mxu0 0
        %3532 = vmatpush2.bf16.msra.mxu0 0
        %3533 = vmatprep.mubr.bf16.mxu0 0
        %3534 = vmatmul.mubr.bf16.gmra.mxu0 %v3499
        %v3535 = vpop.f32.mrf.mxu0
        %v3536 = vadd.f32 %v3486, %v3535
        %v3537 = vpop.f32.mrf.mxu0
        %v3538 = vpop.f32.mrf.mxu0
        %v3539 = vadd.f32 %v3489, %v3538
        %v3540 = vpop.f32.mrf.mxu0
        %3541 = vdwg.mxu0
        %v3542 = vpack.c.bf16 %v3431, %v3430
        %s3543 = scalar_lea.vmem [#allocation6], 184
        %v3544 = vld [vmem:[%s3543] sm:$0xf]
        %v3545 = vld [vmem:[%s3543 + $0x4] sm:$0xf]
        %v3548 = vunpack.c.l.b16 %v3544
        %v3549 = vunpack.c.l.b16 %v3545
        %v3550 = vpack.c.b16 %v3549, %v3548
        %v3553 = vsel %vm354, %v3542, 0
        %3555 = vmatprep.subr.bf16.mxu0 0
        %3556 = vmatpush1.bf16.msra.mxu0 0
        %3557 = vmatprep.subr.bf16.mxu0 0
        %3558 = vmatpush1.bf16.msra.mxu0 0
        %3559 = vmatprep.subr.bf16.mxu0 0
        %3560 = vmatpush1.bf16.msra.mxu0 0
        %3561 = vmatprep.subr.bf16.mxu0 0
        %3562 = vmatpush1.bf16.msra.mxu0 0
        %3563 = vmatprep.subr.bf16.mxu0 0
        %3564 = vmatpush1.bf16.msra.mxu0 0
        %3565 = vmatprep.subr.bf16.mxu0 0
        %3566 = vmatpush1.bf16.msra.mxu0 0
        %3567 = vmatprep.subr.bf16.mxu0 0
        %3568 = vmatpush1.bf16.msra.mxu0 0
        %3569 = vmatprep.subr.bf16.mxu0 0
        %3570 = vmatpush1.bf16.msra.mxu0 %v3550
        %3571 = vmatprep.subr.bf16.mxu0 0
        %3572 = vmatpush2.bf16.msra.mxu0 0
        %3573 = vmatprep.subr.bf16.mxu0 0
        %3574 = vmatpush2.bf16.msra.mxu0 0
        %3575 = vmatprep.subr.bf16.mxu0 0
        %3576 = vmatpush2.bf16.msra.mxu0 0
        %3577 = vmatprep.subr.bf16.mxu0 0
        %3578 = vmatpush2.bf16.msra.mxu0 0
        %3579 = vmatprep.subr.bf16.mxu0 0
        %3580 = vmatpush2.bf16.msra.mxu0 0
        %3581 = vmatprep.subr.bf16.mxu0 0
        %3582 = vmatpush2.bf16.msra.mxu0 0
        %3583 = vmatprep.subr.bf16.mxu0 0
        %3584 = vmatpush2.bf16.msra.mxu0 0
        %3585 = vmatprep.subr.bf16.mxu0 0
        %3586 = vmatpush2.bf16.msra.mxu0 0
        %3587 = vmatprep.mubr.bf16.mxu0 0
        %3588 = vmatmul.mubr.bf16.gmra.mxu0 %v3553
        %v3589 = vpop.f32.mrf.mxu0
        %v3590 = vadd.f32 0.0, %v3589
        %v3591 = vpop.f32.mrf.mxu0
        %v3592 = vpop.f32.mrf.mxu0
        %v3593 = vadd.f32 0.0, %v3592
        %v3594 = vpop.f32.mrf.mxu0
        %3595 = vdwg.mxu0
        %v3596 = vadd.f32 %v3536, %v3590
        %v3597 = vadd.f32 %v3539, %v3593
        %v3599 = vlaneseq
        %v3600 = vshrl.u32 %v3599, 7
        %v3601 = vsub.s32 0, %v3600
        %v3602 = vrot.slane %v3433, %v3601
        %v3604 = vadd.f32 %v3596, %v3602
        %v3605 = vadd.f32 %v3597, %v3602
        %v3606 = vtanh.pop %v3604
        %v3607 = vtanh.pop %v3605
        %v3608 = vadd.f32 %v3606, %v3218
        %v3609 = vadd.f32 %v3607, %v3219
        %3610 = vst.msk [vmem:[%s333] sm:$0xff] %vm354, %v2438
        %3611 = vst.msk [vmem:[%s333 + $0x8] sm:$0xff] %vm354, %v3608
        %s3612 = scalar_lea.vmem %s333, 16 [#allocation11]
        %3613 = vst.msk [vmem:[%s3612] sm:$0xff] %vm354, %v2439
        %3614 = vst.msk [vmem:[%s3612 + $0x8] sm:$0xff] %vm354, %v3609
        %s3615 = sand.u32 %s184, 1
        %s3616 = scalar_lea.sflag [#allocation5], %s3615
        %s3617 = sand.u32 %s184, 1
        %s3618 = smul.addr %s3617, 32
        %s3619 = scalar_lea.vmem [#allocation11], %s3618
        // Predicated region
        $region65: #{tpu_custom_call.1} parent=47 // pred_check
          %p3620 = pneg %p194
        $region66: #{tpu_custom_call.1} parent=47 // pred_check_branch
          %3622 = sbr.rel (%p3620) target = $region68
        $region67: #{tpu_custom_call.1} parent=47 // pred_region
          %s3623 = smul.u32 2, %s24
          %s3625 = ssub.s32 512, 512
          %3626 = vsyncadd %s3616, %s3625
          %s3627 = smul.addr %s3623, 2
          %s3628 = smul.addr %s3627, 128
          %s3629 = scalar_lea.hbm %s7, %s3628
          %s3630 = sshll.u32 %s3619, 4
          %s3631 = int_to_ptr.vmem [resolvable:$true] %s3630
          %3636 = dma.vmem_to_hbm [thread:$0]  %s3631, 512, %s3629, %s3616, 128, 128, 8
        $region68: #{tpu_custom_call.1} parent=47 // pred_fallthru
          _
      $region48: #{tpu_custom_call.1} parent=5 // pred_fallthru
        _
      %p3637 = scmp.le.s32.totalorder 2, %s19
      // Predicated region
      $region69: #{tpu_custom_call.1} parent=5 // pred_check
        %p3638 = pneg %p3637
      $region70: #{tpu_custom_call.1} parent=5 // pred_check_branch
        %3640 = sbr.rel (%p3638) target = $region72
      $region71: #{tpu_custom_call.1} parent=5 // pred_region
        %s3641 = ssub.s32 %s19, 2
        // Predicated region
        $region73: #{tpu_custom_call.1} parent=71 // pred_check
          %p3642 = pneg %p200
        $region74: #{tpu_custom_call.1} parent=71 // pred_check_branch
          %3644 = sbr.rel (%p3642) target = $region76
        $region75: #{tpu_custom_call.1} parent=71 // pred_region
          %s3645 = sand.u32 %s185, 1
          %s3646 = scalar_lea.sflag [#allocation5], %s3645
          %s3647 = sand.u32 %s185, 1
          %s3648 = smul.addr %s3647, 32
          %s3649 = scalar_lea.vmem [#allocation11], %s3648
          %3650 = dma.done %s3646, 512
        $region76: #{tpu_custom_call.1} parent=71 // pred_fallthru
          _
      $region72: #{tpu_custom_call.1} parent=5 // pred_fallthru
        _
    $region6: #{tpu_custom_call.1} parent=1 // loop_footer
      %s23 = sadd.s32 1, %s19
    $region7: #{tpu_custom_call.1} parent=1 // loop_footer_branch
      %18 = sbr.rel target = $region3
    $region8: #{tpu_custom_call.1} parent=1 // loop_exit
      _
    %3651 = vsyncpa [#allocation4], 1
    %s3652 = scalar_lea.sflag [#allocation4], 1
    %3653 = vsyncpa %s3652, 1
    %3654 = vsyncpa [#allocation7], 1
    %3655 = vsyncpa [#allocation10], 1
    %3656 = vsyncpa [#allocation5], 1
    %s3657 = scalar_lea.sflag [#allocation5], 1
    %3658 = vsyncpa %s3657, 1

</llo_original>
